<compile_context>
chip_gen: v6e
topology: v6e:2x2x1
jax: 0.10.0
libtpu: 0.0.40
codegen_flags: <defaults>
</compile_context>

<pallas_src>
import jax
import jax.numpy as jnp
from jax.experimental import pallas as pl
from jax.experimental.pallas import tpu as pltpu

NUM_INTERACTION_CLASSES = 5   # stand-in for len(INTERACTION_CLASSES)

# Largest row tile whose double-buffered, 128-lane-padded input+output tiles (~2 KiB/row)
# stay inside a conservative 16 MiB VMEM buffer budget on every target generation.
_BLOCK_M_CAP = 8192
_VMEM_LIMIT_BYTES = 32 * 1024 * 1024   # <= physical VMEM on v5e/v6e (128 MiB) and v7x (64 MiB)


def _round_up(x, m):
    return ((x + m - 1) // m) * m


def _choose_block_m(M):
    """Largest useful row tile: VMEM-capped; a few steps at medium M for pipeline overlap."""
    if M >= 4 * _BLOCK_M_CAP:
        return _BLOCK_M_CAP
    # medium M: aim for ~4 grid steps so double-buffering (and the v7x 2-TC split) still engage
    bm = _round_up(pl.cdiv(M, 4), 512)
    return int(max(512, min(bm, _BLOCK_M_CAP)))


def _pred_head_kernel(z_ref, w_ref, b_ref, probs_ref):
    # z_ref: (TM, H) gathered rows; w_ref: (H, C); b_ref: (1, C); probs_ref: (TM, C)
    logits = jnp.dot(z_ref[...], w_ref[...],
                     preferred_element_type=jnp.float32) + b_ref[...]      # (TM, C)
    # softmax over classes (dim=1); entirely row-local, so partial boundary blocks are safe
    m = jnp.max(logits, axis=1, keepdims=True)
    e = jnp.exp(logits - m)
    denom = jnp.sum(e, axis=1, keepdims=True)
    inv = pl.reciprocal(denom, approx=False)      # exact; divide goes to the (idle) EUP slot
    probs_ref[...] = (e * inv).astype(probs_ref.dtype)


def _softmax_probs_pallas(z_g, w_t, b2, *, block_m):
    """probs = softmax(z_g @ w_t + b2, axis=1) via a row-tiled Pallas kernel."""
    M, H = z_g.shape
    C = w_t.shape[1]

    grid_spec = pltpu.PrefetchScalarGridSpec(
        num_scalar_prefetch=0,
        grid=(pl.cdiv(M, block_m),),   # partial boundary block: masked writeback, no pad copy
        in_specs=[
            pl.BlockSpec((block_m, H), lambda i: (i, 0)),   # streamed row tile
            pl.BlockSpec((H, C), lambda i: (0, 0)),          # W^T resident in VMEM
            pl.BlockSpec((1, C), lambda i: (0, 0)),          # bias resident in VMEM
        ],
        out_specs=pl.BlockSpec((block_m, C), lambda i: (i, 0)),
    )

    return pl.pallas_call(
        _pred_head_kernel,
        grid_spec=grid_spec,
        out_shape=jax.ShapeDtypeStruct((M, C), jnp.float32),
        compiler_params=pltpu.CompilerParams(
            # rows are independent -> v7x may shard the grid across its 2 TensorCores
            dimension_semantics=("parallel",),
            vmem_limit_bytes=_VMEM_LIMIT_BYTES),
    )(z_g, w_t, b2)


def gnn_prediction_head(z, w, b, nodes_to_predict, *,
                        block_m=None, min_kernel_rows=2048):
    """Eval-mode GNN_Model.prediction_head + get_predictions.

    z: [N, H] float32 node embeddings (encoder output)
    w: [C, H] float32 (torch Linear weight layout)
    b: [C]    float32
    nodes_to_predict: [M] int indices
    returns (argmax [M] int32, probs [M, C] float32)

    block_m: rows per grid step; None -> auto-sized against the VMEM budget (up to 8192).
    min_kernel_rows: below this M, a plain XLA matmul+softmax beats pallas_call fixed cost.
    """
    C = w.shape[0]
    M = int(nodes_to_predict.shape[0])

    # Gather in the wrapper: the contiguous [M, H] slab is what the kernel streams.
    z_g = jnp.take(z, nodes_to_predict.astype(jnp.int32), axis=0)   # [M, H]
    w_t = jnp.transpose(w)                                          # [H, C]
    b2 = b.reshape(1, C)                                            # [1, C]

    if M < min_kernel_rows:
        # Tiny-M path: pallas_call dispatch + pipeline fixed cost exceeds the whole computation.
        logits = z_g @ w_t + b2
        probs = jax.nn.softmax(logits, axis=1)
    else:
        bm = _choose_block_m(M) if block_m is None else int(block_m)
        probs = _softmax_probs_pallas(z_g, w_t, b2, block_m=bm)

    # torch: argmax(softmax(y_hat), dim=1); jnp.argmax uses the same first-max tie-break.
    arg = jnp.argmax(probs, axis=1).astype(jnp.int32)
    return arg, probs


def _reference(z, w, b, nodes):
    y = z[nodes] @ w.T + b
    p = jax.nn.softmax(y, axis=1)
    return jnp.argmax(p, axis=1).astype(jnp.int32), p


if __name__ == "__main__":
    key = jax.random.PRNGKey(0)
    k_z, k_w, k_b, k_idx = jax.random.split(key, 4)

    # Small but kernel-exercising shapes.  M is NOT a multiple of the auto block size so the
    # partial boundary block path is exercised too.
    N, H, C, M = 1024, 32, NUM_INTERACTION_CLASSES, 4000

    # deterministic "encoder output" embeddings and Linear parameters
    z = jax.random.normal(k_z, (N, H), dtype=jnp.float32)
    w = jax.random.normal(k_w, (C, H), dtype=jnp.float32) * (1.0 / jnp.sqrt(H))
    b = jax.random.normal(k_b, (C,), dtype=jnp.float32) * 0.01
    nodes_to_predict = jax.random.randint(k_idx, (M,), 0, N, dtype=jnp.int32)

    arg, probs = gnn_prediction_head(z, w, b, nodes_to_predict)
    jax.block_until_ready((arg, probs))

    ref_arg, ref_probs = _reference(z, w, b, nodes_to_predict)
    assert probs.shape == (M, C), "probs shape mismatch"
    assert jnp.allclose(probs, ref_probs, atol=1e-5), "probs mismatch"
    assert jnp.all(arg == ref_arg), "argmax mismatch"

    print("KERNEL_OK")
</pallas_src>

<mosaic_0001>
module attributes {stable_mosaic.version = 11 : i64} {
  func.func @_pred_head_kernel(%arg0: i32, %arg1: memref<1024x32xf32, #tpu.memory_space<vmem>>, %arg2: memref<32x5xf32, #tpu.memory_space<vmem>>, %arg3: memref<1x5xf32, #tpu.memory_space<vmem>>, %arg4: memref<1024x5xf32, #tpu.memory_space<vmem>>) attributes {dimension_semantics = [#tpu.dimension_semantics<parallel>], iteration_bounds = array<i64: 4>, scalar_prefetch = 0 : i64, scratch_operands = 0 : i64, tpu.core_type = #tpu.core_type<tc>, window_params = [{transform_indices = @transform_0, window_bounds = array<i64: 1024, 32>}, {pipeline_mode = #tpu.pipeline_mode<synchronous>, transform_indices = @transform_1, window_bounds = array<i64: 32, 5>}, {pipeline_mode = #tpu.pipeline_mode<synchronous>, transform_indices = @transform_2, window_bounds = array<i64: 1, 5>}, {transform_indices = @transform_3, window_bounds = array<i64: 1024, 5>}]} {
    %c0 = arith.constant 0 : index
    %c0_0 = arith.constant 0 : index
    %0 = vector.load %arg1[%c0, %c0_0] : memref<1024x32xf32, #tpu.memory_space<vmem>>, vector<1024x32xf32>
    %c0_1 = arith.constant 0 : index
    %c0_2 = arith.constant 0 : index
    %1 = vector.load %arg2[%c0_1, %c0_2] : memref<32x5xf32, #tpu.memory_space<vmem>>, vector<32x5xf32>
    %cst = arith.constant dense<0.000000e+00> : vector<1024x5xf32>
    %2 = tpu.matmul %0, %1, %cst {dimension_numbers = #tpu.dot_dimension_numbers<[1], [0], [0], [1], [0, 0, 1, 1], [], []>} : vector<1024x32xf32>, vector<32x5xf32>, vector<1024x5xf32> -> vector<1024x5xf32>
    %c0_3 = arith.constant 0 : index
    %c0_4 = arith.constant 0 : index
    %3 = vector.load %arg3[%c0_3, %c0_4] : memref<1x5xf32, #tpu.memory_space<vmem>>, vector<1x5xf32>
    %4 = vector.broadcast %3 : vector<1x5xf32> to vector<1024x5xf32>
    %5 = arith.addf %2, %4 : vector<1024x5xf32>
    %cst_5 = arith.constant dense<0xFF800000> : vector<1024xf32>
    %6 = vector.multi_reduction <maximumf>, %5, %cst_5 [1] : vector<1024x5xf32> to vector<1024xf32>
    %7 = vector.shape_cast %6 : vector<1024xf32> to vector<1024x1xf32>
    %8 = vector.broadcast %7 : vector<1024x1xf32> to vector<1024x5xf32>
    %9 = arith.subf %5, %8 : vector<1024x5xf32>
    %10 = math.exp %9 : vector<1024x5xf32>
    %cst_6 = arith.constant dense<0.000000e+00> : vector<1024xf32>
    %11 = vector.multi_reduction <add>, %10, %cst_6 [1] : vector<1024x5xf32> to vector<1024xf32>
    %12 = vector.shape_cast %11 : vector<1024xf32> to vector<1024x1xf32>
    %13 = tpu.reciprocal %12 : vector<1024x1xf32> -> vector<1024x1xf32>
    %14 = vector.broadcast %13 : vector<1024x1xf32> to vector<1024x5xf32>
    %15 = arith.mulf %10, %14 : vector<1024x5xf32>
    %c0_7 = arith.constant 0 : index
    %c0_8 = arith.constant 0 : index
    %16 = vector.load %arg4[%c0_7, %c0_8] : memref<1024x5xf32, #tpu.memory_space<vmem>>, vector<1024x5xf32>
    tpu.vector_store %arg4[%c0_7, %c0_8], %15 {strides = array<i32>} : memref<1024x5xf32, #tpu.memory_space<vmem>>, vector<1024x5xf32>,
    return
  }
  func.func @transform_0(%arg0: i32) -> (i32, i32) {
    %c0_i32 = arith.constant 0 : i32
    %c0_i32_0 = arith.constant 0 : i32
    return %arg0, %c0_i32 : i32, i32
  }
  func.func @transform_1(%arg0: i32) -> (i32, i32) {
    %c0_i32 = arith.constant 0 : i32
    %c0_i32_0 = arith.constant 0 : i32
    %c0_i32_1 = arith.constant 0 : i32
    return %c0_i32, %c0_i32_0 : i32, i32
  }
  func.func @transform_2(%arg0: i32) -> (i32, i32) {
    %c0_i32 = arith.constant 0 : i32
    %c0_i32_0 = arith.constant 0 : i32
    %c0_i32_1 = arith.constant 0 : i32
    return %c0_i32, %c0_i32_0 : i32, i32
  }
  func.func @transform_3(%arg0: i32) -> (i32, i32) {
    %c0_i32 = arith.constant 0 : i32
    %c0_i32_0 = arith.constant 0 : i32
    return %arg0, %c0_i32 : i32, i32
  }
}

</mosaic_0001>

<llo_original>
// kernel: tpu_custom_call.1
$region0: #{tpu_custom_call.1}
  #allocation0 [shape = 'u32[]', space=smem, size = 0x4, offset = 0x4, fixed_abs, tag = 'smem constant byte address 0x4 - core index']
  #allocation1 [shape = 'u32[144,128]{1,0:T(1,128)}', space=vmem, size = 0x12000, scoped, tag = 'internal scratch']
  %s0 = inlined_call_operand.vmem [shape: f32[4000,32], index: 0, kind: input, shape index: {}]
  %s1 = inlined_call_operand.vmem [shape: f32[32,5], index: 1, kind: input, shape index: {}]
  %s2 = inlined_call_operand.vmem [shape: f32[1,5], index: 2, kind: input, shape index: {}]
  %s3 = inlined_call_operand.vmem [shape: f32[4000,5], index: 3, kind: output, shape index: {}]
  %s4 = sld [smem:[#allocation0]]
  $region93: #{tpu_custom_call.1} parent=0
    _
  %s6 = ssub.s32 1, %s4
  %s7 = scalar_select 0, %s6, %s4
  $region1: #{tpu_custom_call.1} parent=0
    #allocation2 [shape = 'u8[1048576]{0}', space=vmem, size = 0x100000, scoped, tag = 'output window, operand 0']
    loop: start=0, step=1, limit=6
    $region2: #{tpu_custom_call.1} parent=1 // loop_pre_header
      _
    $region3: #{tpu_custom_call.1} parent=1 // loop_header
      %s9 = sphi 0, %s13
      %p10 = scmp.ge.s32.totalorder %s9, 6
      %s19 = sphi 0, %s21
      %s22 = sphi 0, %s19
      %s23 = sphi 0, %s22
      %s39 = sphi 0, %s23
      %s43 = sphi 0, %s43
      %s45 = sphi 0, %s43
      %s46 = sphi 0, %s45
      %s60 = sphi 0, %s46
      %s64 = sphi 0, %s64
      %s66 = sphi 0, %s64
      %s67 = sphi 0, %s66
      %s81 = sphi 0, %s67
      %s87 = sphi 0, %s89
      %s90 = sphi 0, %s87
      %s91 = sphi 0, %s90
      %s107 = sphi 0, %s91
    $region4: #{tpu_custom_call.1} parent=1 // loop_header_branch
      %12 = sbr.rel (%p10) target = $region8
    $region5: #{tpu_custom_call.1} parent=1 // loop_body
      %s14 = ssub.s32 %s9, 1
      %s15 = ssub.s32 %s9, 2
      %s16 = sadd.s32 %s9, 1
      %s17 = ssub.s32 %s9, %s16
      %p18 = scmp.eq.s32.totalorder %s17, 0
      %s20 = sadd.s32 %s19, 1
      %s21 = scalar_select %p18, %s19, %s20
      %p24 = pneg %p18
      %p25 = scmp.eq.s32.totalorder %s9, 3
      %p26 = por %p24, %p25
      %p27 = scmp.ne.s32.totalorder %s19, %s22
      %p28 = scmp.eq.s32.totalorder %s9, 0
      %p29 = por %p27, %p28
      %p30 = scmp.ne.s32.totalorder %s19, %s22
      %p31 = scmp.eq.s32.totalorder %s14, 3
      %p32 = por %p30, %p31
      %p33 = scmp.ne.s32.totalorder %s22, %s23
      %p34 = scmp.eq.s32.totalorder %s14, 0
      %p35 = por %p33, %p34
      %p36 = scmp.ne.s32.totalorder %s22, %s23
      %p37 = scmp.eq.s32.totalorder %s15, 3
      %p38 = por %p36, %p37
      %p40 = scmp.ne.s32.totalorder %s23, %s39
      %p41 = scmp.eq.s32.totalorder %s15, 0
      %p42 = por %p40, %p41
      %s44 = sadd.s32 %s43, 1
      %p47 = scmp.eq.s32.totalorder %s9, 3
      %p48 = scmp.ne.s32.totalorder %s43, %s45
      %p49 = scmp.eq.s32.totalorder %s9, 0
      %p50 = por %p48, %p49
      %p51 = scmp.ne.s32.totalorder %s43, %s45
      %p52 = scmp.eq.s32.totalorder %s14, 3
      %p53 = por %p51, %p52
      %p54 = scmp.ne.s32.totalorder %s45, %s46
      %p55 = scmp.eq.s32.totalorder %s14, 0
      %p56 = por %p54, %p55
      %p57 = scmp.ne.s32.totalorder %s45, %s46
      %p58 = scmp.eq.s32.totalorder %s15, 3
      %p59 = por %p57, %p58
      %p61 = scmp.ne.s32.totalorder %s46, %s60
      %p62 = scmp.eq.s32.totalorder %s15, 0
      %p63 = por %p61, %p62
      %s65 = sadd.s32 %s64, 1
      %p68 = scmp.eq.s32.totalorder %s9, 3
      %p69 = scmp.ne.s32.totalorder %s64, %s66
      %p70 = scmp.eq.s32.totalorder %s9, 0
      %p71 = por %p69, %p70
      %p72 = scmp.ne.s32.totalorder %s64, %s66
      %p73 = scmp.eq.s32.totalorder %s14, 3
      %p74 = por %p72, %p73
      %p75 = scmp.ne.s32.totalorder %s66, %s67
      %p76 = scmp.eq.s32.totalorder %s14, 0
      %p77 = por %p75, %p76
      %p78 = scmp.ne.s32.totalorder %s66, %s67
      %p79 = scmp.eq.s32.totalorder %s15, 3
      %p80 = por %p78, %p79
      %p82 = scmp.ne.s32.totalorder %s67, %s81
      %p83 = scmp.eq.s32.totalorder %s15, 0
      %p84 = por %p82, %p83
      %s85 = ssub.s32 %s9, %s16
      %p86 = scmp.eq.s32.totalorder %s85, 0
      %s88 = sadd.s32 %s87, 1
      %s89 = scalar_select %p86, %s87, %s88
      %p92 = pneg %p86
      %p93 = scmp.eq.s32.totalorder %s9, 3
      %p94 = por %p92, %p93
      %p95 = scmp.ne.s32.totalorder %s87, %s90
      %p96 = scmp.eq.s32.totalorder %s9, 0
      %p97 = por %p95, %p96
      %p98 = scmp.ne.s32.totalorder %s87, %s90
      %p99 = scmp.eq.s32.totalorder %s14, 3
      %p100 = por %p98, %p99
      %p101 = scmp.ne.s32.totalorder %s90, %s91
      %p102 = scmp.eq.s32.totalorder %s14, 0
      %p103 = por %p101, %p102
      %p104 = scmp.ne.s32.totalorder %s90, %s91
      %p105 = scmp.eq.s32.totalorder %s15, 3
      %p106 = por %p104, %p105
      %p108 = scmp.ne.s32.totalorder %s91, %s107
      %p109 = scmp.eq.s32.totalorder %s15, 0
      %p110 = por %p108, %p109
      %p111 = scmp.le.s32.totalorder 1, %s9
      %p112 = scmp.lt.s32.totalorder %s9, 5
      %p113 = pnand %p111, %p112
      %p114 = pneg %p113
      // Predicated region
      $region9: #{tpu_custom_call.1} parent=5 // pred_check
        _
      $region10: #{tpu_custom_call.1} parent=5 // pred_check_branch
        %116 = sbr.rel (%p113) target = $region12
      $region11: #{tpu_custom_call.1} parent=5 // pred_region
        %s117 = ssub.s32 %s9, 1
        // Predicated region
        $region13: #{tpu_custom_call.1} parent=11 // pred_check
          %p118 = pneg %p56
        $region14: #{tpu_custom_call.1} parent=11 // pred_check_branch
          %120 = sbr.rel (%p118) target = $region16
        $region15: #{tpu_custom_call.1} parent=11 // pred_region
          _
        $region16: #{tpu_custom_call.1} parent=11 // pred_fallthru
          _
        // Predicated region
        $region17: #{tpu_custom_call.1} parent=11 // pred_check
          %p121 = pneg %p77
        $region18: #{tpu_custom_call.1} parent=11 // pred_check_branch
          %123 = sbr.rel (%p121) target = $region20
        $region19: #{tpu_custom_call.1} parent=11 // pred_region
          _
        $region20: #{tpu_custom_call.1} parent=11 // pred_fallthru
          _
      $region12: #{tpu_custom_call.1} parent=5 // pred_fallthru
        _
      %p124 = scmp.lt.s32.totalorder %s9, 4
      // Predicated region
      $region21: #{tpu_custom_call.1} parent=5 // pred_check
        %p125 = pneg %p124
      $region22: #{tpu_custom_call.1} parent=5 // pred_check_branch
        %127 = sbr.rel (%p125) target = $region24
      $region23: #{tpu_custom_call.1} parent=5 // pred_region
        // Predicated region
        $region25: #{tpu_custom_call.1} parent=23 // pred_check
          %p128 = pneg %p29
        $region26: #{tpu_custom_call.1} parent=23 // pred_check_branch
          %130 = sbr.rel (%p128) target = $region28
        $region27: #{tpu_custom_call.1} parent=23 // pred_region
          %s131 = smul.u32 128, %s9
          %s132 = ssub.s32 500, %s131
          %p133 = scmp.lt.s32.totalorder %s132, 128
          %s134 = scalar_select %p133, %s132, 128
          %s135 = smul.u32 128, %s134
          %p136 = scmp.lt.s32.totalorder %s131, 499
          %s137 = scalar_select %p136, %s131, 499
          %s138 = smul.addr %s137, 8
          %s139 = scalar_lea.vmem %s0, %s138
          %s140 = smul.u32 128, %s9
          %s141 = ssub.s32 500, %s140
          %p142 = scmp.lt.s32.totalorder %s141, 128
          %s143 = scalar_select %p142, %s141, 128
          %s144 = smul.u32 128, %s143
        $region28: #{tpu_custom_call.1} parent=23 // pred_fallthru
          _
      $region24: #{tpu_custom_call.1} parent=5 // pred_fallthru
        _
      %p145 = scmp.le.s32.totalorder 1, %s9
      %p146 = scmp.lt.s32.totalorder %s9, 5
      %p147 = pnand %p145, %p146
      %p148 = pneg %p147
      // Predicated region
      $region29: #{tpu_custom_call.1} parent=5 // pred_check
        _
      $region30: #{tpu_custom_call.1} parent=5 // pred_check_branch
        %150 = sbr.rel (%p147) target = $region32
      $region31: #{tpu_custom_call.1} parent=5 // pred_region
        %s151 = ssub.s32 %s9, 1
        %s152 = smul.u32 128, %s14
        %s153 = ssub.s32 500, %s152
        %p154 = scmp.lt.s32.totalorder %s153, 128
        %s155 = scalar_select %p154, %s153, 128
        %s156 = smul.u32 128, %s155
        %p157 = scmp.lt.s32.totalorder %s152, 499
        %s158 = scalar_select %p157, %s152, 499
        %s159 = smul.addr %s158, 8
        %s160 = scalar_lea.vmem %s0, %s159
        %p161 = pneg %p35
        %p162 = pneg %p32
        %p163 = pneg %p56
        %p164 = pneg %p53
        %p165 = pneg %p77
        %p166 = pneg %p74
        %p167 = pneg %p103
        %p168 = pneg %p100
        %s169 = sand.u32 %s90, 1
        %s170 = sand.u32 %s90, 1
        %s171 = smul.addr %s170, 1024
        %s172 = scalar_lea.vmem [#allocation2], %s171
        %s173 = smul.u32 128, %s14
        %s174 = ssub.s32 500, %s173
        %p175 = scmp.lt.s32.totalorder %s174, 128
        %s176 = scalar_select %p175, %s174, 128
        %s177 = smul.u32 128, %s176
        %p178 = scmp.lt.s32.totalorder %s173, 499
        %s179 = scalar_select %p178, %s173, 499
        %s180 = smul.addr %s179, 8
        %s181 = scalar_lea.vmem %s0, %s180
        %s182 = smul.u32 128, %s14
        %s183 = ssub.s32 500, %s182
        %p184 = scmp.lt.s32.totalorder %s183, 128
        %s185 = scalar_select %p184, %s183, 128
        %s186 = smul.u32 128, %s185
        %s187 = smul.u32 128, %s14
        %s188 = ssub.s32 500, %s187
        %p189 = scmp.lt.s32.totalorder %s188, 128
        %s190 = scalar_select %p189, %s188, 128
        %s191 = smul.u32 128, %s190
        %v192 = vld [vmem:[%s181] sm:$0xff]
        %v193 = vld [vmem:[%s181 + $0x8] sm:$0xff]
        %v194 = vld [vmem:[%s181 + $0x10] sm:$0xff]
        %v195 = vld [vmem:[%s181 + $0x18] sm:$0xff]
        %v196 = vld [vmem:[%s181 + $0x20] sm:$0xff]
        %v197 = vld [vmem:[%s181 + $0x28] sm:$0xff]
        %v198 = vld [vmem:[%s181 + $0x30] sm:$0xff]
        %v199 = vld [vmem:[%s181 + $0x38] sm:$0xff]
        %v200 = vld [vmem:[%s181 + $0x40] sm:$0xff]
        %v201 = vld [vmem:[%s181 + $0x48] sm:$0xff]
        %v202 = vld [vmem:[%s181 + $0x50] sm:$0xff]
        %v203 = vld [vmem:[%s181 + $0x58] sm:$0xff]
        %v204 = vld [vmem:[%s181 + $0x60] sm:$0xff]
        %v205 = vld [vmem:[%s181 + $0x68] sm:$0xff]
        %v206 = vld [vmem:[%s181 + $0x70] sm:$0xff]
        %v207 = vld [vmem:[%s181 + $0x78] sm:$0xff]
        %v208 = vld [vmem:[%s181 + $0x80] sm:$0xff]
        %v209 = vld [vmem:[%s181 + $0x88] sm:$0xff]
        %v210 = vld [vmem:[%s181 + $0x90] sm:$0xff]
        %v211 = vld [vmem:[%s181 + $0x98] sm:$0xff]
        %v212 = vld [vmem:[%s181 + $0xa0] sm:$0xff]
        %v213 = vld [vmem:[%s181 + $0xa8] sm:$0xff]
        %v214 = vld [vmem:[%s181 + $0xb0] sm:$0xff]
        %v215 = vld [vmem:[%s181 + $0xb8] sm:$0xff]
        %v216 = vld [vmem:[%s181 + $0xc0] sm:$0xff]
        %v217 = vld [vmem:[%s181 + $0xc8] sm:$0xff]
        %v218 = vld [vmem:[%s181 + $0xd0] sm:$0xff]
        %v219 = vld [vmem:[%s181 + $0xd8] sm:$0xff]
        %v220 = vld [vmem:[%s181 + $0xe0] sm:$0xff]
        %v221 = vld [vmem:[%s181 + $0xe8] sm:$0xff]
        %v222 = vld [vmem:[%s181 + $0xf0] sm:$0xff]
        %v223 = vld [vmem:[%s181 + $0xf8] sm:$0xff]
        %v224 = vld [vmem:[%s181 + $0x100] sm:$0xff]
        %v225 = vld [vmem:[%s181 + $0x108] sm:$0xff]
        %v226 = vld [vmem:[%s181 + $0x110] sm:$0xff]
        %v227 = vld [vmem:[%s181 + $0x118] sm:$0xff]
        %v228 = vld [vmem:[%s181 + $0x120] sm:$0xff]
        %v229 = vld [vmem:[%s181 + $0x128] sm:$0xff]
        %v230 = vld [vmem:[%s181 + $0x130] sm:$0xff]
        %v231 = vld [vmem:[%s181 + $0x138] sm:$0xff]
        %v232 = vld [vmem:[%s181 + $0x140] sm:$0xff]
        %v233 = vld [vmem:[%s181 + $0x148] sm:$0xff]
        %v234 = vld [vmem:[%s181 + $0x150] sm:$0xff]
        %v235 = vld [vmem:[%s181 + $0x158] sm:$0xff]
        %v236 = vld [vmem:[%s181 + $0x160] sm:$0xff]
        %v237 = vld [vmem:[%s181 + $0x168] sm:$0xff]
        %v238 = vld [vmem:[%s181 + $0x170] sm:$0xff]
        %v239 = vld [vmem:[%s181 + $0x178] sm:$0xff]
        %v240 = vld [vmem:[%s181 + $0x180] sm:$0xff]
        %v241 = vld [vmem:[%s181 + $0x188] sm:$0xff]
        %v242 = vld [vmem:[%s181 + $0x190] sm:$0xff]
        %v243 = vld [vmem:[%s181 + $0x198] sm:$0xff]
        %v244 = vld [vmem:[%s181 + $0x1a0] sm:$0xff]
        %v245 = vld [vmem:[%s181 + $0x1a8] sm:$0xff]
        %v246 = vld [vmem:[%s181 + $0x1b0] sm:$0xff]
        %v247 = vld [vmem:[%s181 + $0x1b8] sm:$0xff]
        %v248 = vld [vmem:[%s181 + $0x1c0] sm:$0xff]
        %v249 = vld [vmem:[%s181 + $0x1c8] sm:$0xff]
        %v250 = vld [vmem:[%s181 + $0x1d0] sm:$0xff]
        %v251 = vld [vmem:[%s181 + $0x1d8] sm:$0xff]
        %v252 = vld [vmem:[%s181 + $0x1e0] sm:$0xff]
        %v253 = vld [vmem:[%s181 + $0x1e8] sm:$0xff]
        %v254 = vld [vmem:[%s181 + $0x1f0] sm:$0xff]
        %v255 = vld [vmem:[%s181 + $0x1f8] sm:$0xff]
        %v256 = vld [vmem:[%s181 + $0x200] sm:$0xff]
        %v257 = vld [vmem:[%s181 + $0x208] sm:$0xff]
        %v258 = vld [vmem:[%s181 + $0x210] sm:$0xff]
        %v259 = vld [vmem:[%s181 + $0x218] sm:$0xff]
        %v260 = vld [vmem:[%s181 + $0x220] sm:$0xff]
        %v261 = vld [vmem:[%s181 + $0x228] sm:$0xff]
        %v262 = vld [vmem:[%s181 + $0x230] sm:$0xff]
        %v263 = vld [vmem:[%s181 + $0x238] sm:$0xff]
        %v264 = vld [vmem:[%s181 + $0x240] sm:$0xff]
        %v265 = vld [vmem:[%s181 + $0x248] sm:$0xff]
        %v266 = vld [vmem:[%s181 + $0x250] sm:$0xff]
        %v267 = vld [vmem:[%s181 + $0x258] sm:$0xff]
        %v268 = vld [vmem:[%s181 + $0x260] sm:$0xff]
        %v269 = vld [vmem:[%s181 + $0x268] sm:$0xff]
        %v270 = vld [vmem:[%s181 + $0x270] sm:$0xff]
        %v271 = vld [vmem:[%s181 + $0x278] sm:$0xff]
        %v272 = vld [vmem:[%s181 + $0x280] sm:$0xff]
        %v273 = vld [vmem:[%s181 + $0x288] sm:$0xff]
        %v274 = vld [vmem:[%s181 + $0x290] sm:$0xff]
        %v275 = vld [vmem:[%s181 + $0x298] sm:$0xff]
        %v276 = vld [vmem:[%s181 + $0x2a0] sm:$0xff]
        %v277 = vld [vmem:[%s181 + $0x2a8] sm:$0xff]
        %v278 = vld [vmem:[%s181 + $0x2b0] sm:$0xff]
        %v279 = vld [vmem:[%s181 + $0x2b8] sm:$0xff]
        %v280 = vld [vmem:[%s181 + $0x2c0] sm:$0xff]
        %v281 = vld [vmem:[%s181 + $0x2c8] sm:$0xff]
        %v282 = vld [vmem:[%s181 + $0x2d0] sm:$0xff]
        %v283 = vld [vmem:[%s181 + $0x2d8] sm:$0xff]
        %v284 = vld [vmem:[%s181 + $0x2e0] sm:$0xff]
        %v285 = vld [vmem:[%s181 + $0x2e8] sm:$0xff]
        %v286 = vld [vmem:[%s181 + $0x2f0] sm:$0xff]
        %v287 = vld [vmem:[%s181 + $0x2f8] sm:$0xff]
        %v288 = vld [vmem:[%s181 + $0x300] sm:$0xff]
        %v289 = vld [vmem:[%s181 + $0x308] sm:$0xff]
        %v290 = vld [vmem:[%s181 + $0x310] sm:$0xff]
        %v291 = vld [vmem:[%s181 + $0x318] sm:$0xff]
        %v292 = vld [vmem:[%s181 + $0x320] sm:$0xff]
        %v293 = vld [vmem:[%s181 + $0x328] sm:$0xff]
        %v294 = vld [vmem:[%s181 + $0x330] sm:$0xff]
        %v295 = vld [vmem:[%s181 + $0x338] sm:$0xff]
        %v296 = vld [vmem:[%s181 + $0x340] sm:$0xff]
        %v297 = vld [vmem:[%s181 + $0x348] sm:$0xff]
        %v298 = vld [vmem:[%s181 + $0x350] sm:$0xff]
        %v299 = vld [vmem:[%s181 + $0x358] sm:$0xff]
        %v300 = vld [vmem:[%s181 + $0x360] sm:$0xff]
        %v301 = vld [vmem:[%s181 + $0x368] sm:$0xff]
        %v302 = vld [vmem:[%s181 + $0x370] sm:$0xff]
        %v303 = vld [vmem:[%s181 + $0x378] sm:$0xff]
        %v304 = vld [vmem:[%s181 + $0x380] sm:$0xff]
        %v305 = vld [vmem:[%s181 + $0x388] sm:$0xff]
        %v306 = vld [vmem:[%s181 + $0x390] sm:$0xff]
        %v307 = vld [vmem:[%s181 + $0x398] sm:$0xff]
        %v308 = vld [vmem:[%s181 + $0x3a0] sm:$0xff]
        %v309 = vld [vmem:[%s181 + $0x3a8] sm:$0xff]
        %v310 = vld [vmem:[%s181 + $0x3b0] sm:$0xff]
        %v311 = vld [vmem:[%s181 + $0x3b8] sm:$0xff]
        %v312 = vld [vmem:[%s181 + $0x3c0] sm:$0xff]
        %v313 = vld [vmem:[%s181 + $0x3c8] sm:$0xff]
        %v314 = vld [vmem:[%s181 + $0x3d0] sm:$0xff]
        %v315 = vld [vmem:[%s181 + $0x3d8] sm:$0xff]
        %v316 = vld [vmem:[%s181 + $0x3e0] sm:$0xff]
        %v317 = vld [vmem:[%s181 + $0x3e8] sm:$0xff]
        %v318 = vld [vmem:[%s181 + $0x3f0] sm:$0xff]
        %v319 = vld [vmem:[%s181 + $0x3f8] sm:$0xff]
        %v320 = vld [vmem:[%s1] sm:$0xff]
        %v321 = vld [vmem:[%s1 + $0x8] sm:$0xff]
        %v322 = vld [vmem:[%s1 + $0x10] sm:$0xff]
        %v323 = vld [vmem:[%s1 + $0x18] sm:$0xff]
        %v324 = vld [vmem:[%s2] sm:$0x1]
        %v326 = vlaneseq
        %v327 = vshrl.u32 %v326, 7
        %v328 = vsub.s32 0, %v327
        %v329 = vrot.slane %v324, %v328
        %vm331 = vcmask 261120
        %v333 = vsel %vm331, %v192, 0
        %v336 = vsel %vm331, %v193, 0
        %v339 = vsel %vm331, %v194, 0
        %v342 = vsel %vm331, %v195, 0
        %v345 = vsel %vm331, %v196, 0
        %v348 = vsel %vm331, %v197, 0
        %v351 = vsel %vm331, %v198, 0
        %v354 = vsel %vm331, %v199, 0
        %v357 = vsel %vm331, %v200, 0
        %v360 = vsel %vm331, %v201, 0
        %v363 = vsel %vm331, %v202, 0
        %v366 = vsel %vm331, %v203, 0
        %v369 = vsel %vm331, %v204, 0
        %v372 = vsel %vm331, %v205, 0
        %v375 = vsel %vm331, %v206, 0
        %v378 = vsel %vm331, %v207, 0
        %v381 = vsel %vm331, %v208, 0
        %v384 = vsel %vm331, %v209, 0
        %v387 = vsel %vm331, %v210, 0
        %v390 = vsel %vm331, %v211, 0
        %v393 = vsel %vm331, %v212, 0
        %v396 = vsel %vm331, %v213, 0
        %v399 = vsel %vm331, %v214, 0
        %v402 = vsel %vm331, %v215, 0
        %v405 = vsel %vm331, %v216, 0
        %v408 = vsel %vm331, %v217, 0
        %v411 = vsel %vm331, %v218, 0
        %v414 = vsel %vm331, %v219, 0
        %v417 = vsel %vm331, %v220, 0
        %v420 = vsel %vm331, %v221, 0
        %v423 = vsel %vm331, %v222, 0
        %v426 = vsel %vm331, %v223, 0
        %v429 = vsel %vm331, %v224, 0
        %v432 = vsel %vm331, %v225, 0
        %v435 = vsel %vm331, %v226, 0
        %v438 = vsel %vm331, %v227, 0
        %v441 = vsel %vm331, %v228, 0
        %v444 = vsel %vm331, %v229, 0
        %v447 = vsel %vm331, %v230, 0
        %v450 = vsel %vm331, %v231, 0
        %v453 = vsel %vm331, %v232, 0
        %v456 = vsel %vm331, %v233, 0
        %v459 = vsel %vm331, %v234, 0
        %v462 = vsel %vm331, %v235, 0
        %v465 = vsel %vm331, %v236, 0
        %v468 = vsel %vm331, %v237, 0
        %v471 = vsel %vm331, %v238, 0
        %v474 = vsel %vm331, %v239, 0
        %v477 = vsel %vm331, %v240, 0
        %v480 = vsel %vm331, %v241, 0
        %v483 = vsel %vm331, %v242, 0
        %v486 = vsel %vm331, %v243, 0
        %v489 = vsel %vm331, %v244, 0
        %v492 = vsel %vm331, %v245, 0
        %v495 = vsel %vm331, %v246, 0
        %v498 = vsel %vm331, %v247, 0
        %v501 = vsel %vm331, %v248, 0
        %v504 = vsel %vm331, %v249, 0
        %v507 = vsel %vm331, %v250, 0
        %v510 = vsel %vm331, %v251, 0
        %v513 = vsel %vm331, %v252, 0
        %v516 = vsel %vm331, %v253, 0
        %v519 = vsel %vm331, %v254, 0
        %v522 = vsel %vm331, %v255, 0
        %v525 = vsel %vm331, %v256, 0
        %v528 = vsel %vm331, %v257, 0
        %v531 = vsel %vm331, %v258, 0
        %v534 = vsel %vm331, %v259, 0
        %v537 = vsel %vm331, %v260, 0
        %v540 = vsel %vm331, %v261, 0
        %v543 = vsel %vm331, %v262, 0
        %v546 = vsel %vm331, %v263, 0
        %v549 = vsel %vm331, %v264, 0
        %v552 = vsel %vm331, %v265, 0
        %v555 = vsel %vm331, %v266, 0
        %v558 = vsel %vm331, %v267, 0
        %v561 = vsel %vm331, %v268, 0
        %v564 = vsel %vm331, %v269, 0
        %v567 = vsel %vm331, %v270, 0
        %v570 = vsel %vm331, %v271, 0
        %v573 = vsel %vm331, %v272, 0
        %v576 = vsel %vm331, %v273, 0
        %v579 = vsel %vm331, %v274, 0
        %v582 = vsel %vm331, %v275, 0
        %v585 = vsel %vm331, %v276, 0
        %v588 = vsel %vm331, %v277, 0
        %v591 = vsel %vm331, %v278, 0
        %v594 = vsel %vm331, %v279, 0
        %v597 = vsel %vm331, %v280, 0
        %v600 = vsel %vm331, %v281, 0
        %v603 = vsel %vm331, %v282, 0
        %v606 = vsel %vm331, %v283, 0
        %v609 = vsel %vm331, %v284, 0
        %v612 = vsel %vm331, %v285, 0
        %v615 = vsel %vm331, %v286, 0
        %v618 = vsel %vm331, %v287, 0
        %v621 = vsel %vm331, %v288, 0
        %v624 = vsel %vm331, %v289, 0
        %v627 = vsel %vm331, %v290, 0
        %v630 = vsel %vm331, %v291, 0
        %v633 = vsel %vm331, %v292, 0
        %v636 = vsel %vm331, %v293, 0
        %v639 = vsel %vm331, %v294, 0
        %v642 = vsel %vm331, %v295, 0
        %v645 = vsel %vm331, %v296, 0
        %v648 = vsel %vm331, %v297, 0
        %v651 = vsel %vm331, %v298, 0
        %v654 = vsel %vm331, %v299, 0
        %v657 = vsel %vm331, %v300, 0
        %v660 = vsel %vm331, %v301, 0
        %v663 = vsel %vm331, %v302, 0
        %v666 = vsel %vm331, %v303, 0
        %v669 = vsel %vm331, %v304, 0
        %v672 = vsel %vm331, %v305, 0
        %v675 = vsel %vm331, %v306, 0
        %v678 = vsel %vm331, %v307, 0
        %v681 = vsel %vm331, %v308, 0
        %v684 = vsel %vm331, %v309, 0
        %v687 = vsel %vm331, %v310, 0
        %v690 = vsel %vm331, %v311, 0
        %v693 = vsel %vm331, %v312, 0
        %v696 = vsel %vm331, %v313, 0
        %v699 = vsel %vm331, %v314, 0
        %v702 = vsel %vm331, %v315, 0
        %v705 = vsel %vm331, %v316, 0
        %v708 = vsel %vm331, %v317, 0
        %v711 = vsel %vm331, %v318, 0
        %v714 = vsel %vm331, %v319, 0
        %716 = vmatprep.subr.mxu0 0.0
        %717 = vmatpush1.msra.mxu0 0.0
        %718 = vmatprep.subr.mxu0 0.0
        %719 = vmatpush1.msra.mxu0 0.0
        %720 = vmatprep.subr.mxu0 0.0
        %721 = vmatpush1.msra.mxu0 0.0
        %722 = vmatprep.subr.mxu0 0.0
        %723 = vmatpush1.msra.mxu0 0.0
        %724 = vmatprep.subr.mxu0 0.0
        %725 = vmatpush1.msra.mxu0 0.0
        %726 = vmatprep.subr.mxu0 0.0
        %727 = vmatpush1.msra.mxu0 0.0
        %728 = vmatprep.subr.mxu0 0.0
        %729 = vmatpush1.msra.mxu0 0.0
        %730 = vmatprep.subr.mxu0 0.0
        %731 = vmatpush1.msra.mxu0 0.0
        %732 = vmatprep.subr.mxu0 0.0
        %733 = vmatpush1.msra.mxu0 0.0
        %734 = vmatprep.subr.mxu0 0.0
        %735 = vmatpush1.msra.mxu0 0.0
        %736 = vmatprep.subr.mxu0 0.0
        %737 = vmatpush1.msra.mxu0 0.0
        %738 = vmatprep.subr.mxu0 0.0
        %739 = vmatpush1.msra.mxu0 0.0
        %740 = vmatprep.subr.mxu0 0.0
        %741 = vmatpush1.msra.mxu0 %v323
        %742 = vmatprep.subr.mxu0 0.0
        %743 = vmatpush1.msra.mxu0 %v322
        %744 = vmatprep.subr.mxu0 0.0
        %745 = vmatpush1.msra.mxu0 %v321
        %746 = vmatprep.subr.mxu0 0.0
        %747 = vmatpush1.msra.mxu0 %v320
        %748 = vmatprep.subr.mxu0 0.0
        %749 = vmatpush2.msra.mxu0 0.0
        %750 = vmatprep.subr.mxu0 0.0
        %751 = vmatpush2.msra.mxu0 0.0
        %752 = vmatprep.subr.mxu0 0.0
        %753 = vmatpush2.msra.mxu0 0.0
        %754 = vmatprep.subr.mxu0 0.0
        %755 = vmatpush2.msra.mxu0 0.0
        %756 = vmatprep.subr.mxu0 0.0
        %757 = vmatpush2.msra.mxu0 0.0
        %758 = vmatprep.subr.mxu0 0.0
        %759 = vmatpush2.msra.mxu0 0.0
        %760 = vmatprep.subr.mxu0 0.0
        %761 = vmatpush2.msra.mxu0 0.0
        %762 = vmatprep.subr.mxu0 0.0
        %763 = vmatpush2.msra.mxu0 0.0
        %764 = vmatprep.subr.mxu0 0.0
        %765 = vmatpush2.msra.mxu0 0.0
        %766 = vmatprep.subr.mxu0 0.0
        %767 = vmatpush2.msra.mxu0 0.0
        %768 = vmatprep.subr.mxu0 0.0
        %769 = vmatpush2.msra.mxu0 0.0
        %770 = vmatprep.subr.mxu0 0.0
        %771 = vmatpush2.msra.mxu0 0.0
        %772 = vmatprep.subr.mxu0 0.0
        %773 = vmatpush2.msra.mxu0 0.0
        %774 = vmatprep.subr.mxu0 0.0
        %775 = vmatpush2.msra.mxu0 0.0
        %776 = vmatprep.subr.mxu0 0.0
        %777 = vmatpush2.msra.mxu0 0.0
        %778 = vmatprep.subr.mxu0 0.0
        %779 = vmatpush2.msra.mxu0 0.0
        %780 = vmatprep.mubr.f32.mxu0 0.0
        %781 = vmatmul.mubr.f32.gmra.mxu0 %v333
        %v782 = vpop.f32.mrf.mxu0
        %v783 = vadd.f32 %v329, %v782
        %v784 = vpop.f32.mrf.mxu0
        %785 = vmatprep.mubr.f32.mxu0 0.0
        %786 = vmatmul.mubr.f32.gmra.mxu0 %v336
        %v787 = vpop.f32.mrf.mxu0
        %v788 = vadd.f32 %v329, %v787
        %v789 = vpop.f32.mrf.mxu0
        %790 = vmatprep.mubr.f32.mxu0 0.0
        %791 = vmatmul.mubr.f32.gmra.mxu0 %v339
        %v792 = vpop.f32.mrf.mxu0
        %v793 = vadd.f32 %v329, %v792
        %v794 = vpop.f32.mrf.mxu0
        %795 = vmatprep.mubr.f32.mxu0 0.0
        %796 = vmatmul.mubr.f32.gmra.mxu0 %v342
        %v797 = vpop.f32.mrf.mxu0
        %v798 = vadd.f32 %v329, %v797
        %v799 = vpop.f32.mrf.mxu0
        %800 = vmatprep.mubr.f32.mxu0 0.0
        %801 = vmatmul.mubr.f32.gmra.mxu0 %v345
        %v802 = vpop.f32.mrf.mxu0
        %v803 = vadd.f32 %v329, %v802
        %v804 = vpop.f32.mrf.mxu0
        %805 = vmatprep.mubr.f32.mxu0 0.0
        %806 = vmatmul.mubr.f32.gmra.mxu0 %v348
        %v807 = vpop.f32.mrf.mxu0
        %v808 = vadd.f32 %v329, %v807
        %v809 = vpop.f32.mrf.mxu0
        %810 = vmatprep.mubr.f32.mxu0 0.0
        %811 = vmatmul.mubr.f32.gmra.mxu0 %v351
        %v812 = vpop.f32.mrf.mxu0
        %v813 = vadd.f32 %v329, %v812
        %v814 = vpop.f32.mrf.mxu0
        %815 = vmatprep.mubr.f32.mxu0 0.0
        %816 = vmatmul.mubr.f32.gmra.mxu0 %v354
        %v817 = vpop.f32.mrf.mxu0
        %v818 = vadd.f32 %v329, %v817
        %v819 = vpop.f32.mrf.mxu0
        %820 = vmatprep.mubr.f32.mxu0 0.0
        %821 = vmatmul.mubr.f32.gmra.mxu0 %v357
        %v822 = vpop.f32.mrf.mxu0
        %v823 = vadd.f32 %v329, %v822
        %v824 = vpop.f32.mrf.mxu0
        %825 = vmatprep.mubr.f32.mxu0 0.0
        %826 = vmatmul.mubr.f32.gmra.mxu0 %v360
        %v827 = vpop.f32.mrf.mxu0
        %v828 = vadd.f32 %v329, %v827
        %v829 = vpop.f32.mrf.mxu0
        %830 = vmatprep.mubr.f32.mxu0 0.0
        %831 = vmatmul.mubr.f32.gmra.mxu0 %v363
        %v832 = vpop.f32.mrf.mxu0
        %v833 = vadd.f32 %v329, %v832
        %v834 = vpop.f32.mrf.mxu0
        %835 = vmatprep.mubr.f32.mxu0 0.0
        %836 = vmatmul.mubr.f32.gmra.mxu0 %v366
        %v837 = vpop.f32.mrf.mxu0
        %v838 = vadd.f32 %v329, %v837
        %v839 = vpop.f32.mrf.mxu0
        %840 = vmatprep.mubr.f32.mxu0 0.0
        %841 = vmatmul.mubr.f32.gmra.mxu0 %v369
        %v842 = vpop.f32.mrf.mxu0
        %v843 = vadd.f32 %v329, %v842
        %v844 = vpop.f32.mrf.mxu0
        %845 = vmatprep.mubr.f32.mxu0 0.0
        %846 = vmatmul.mubr.f32.gmra.mxu0 %v372
        %v847 = vpop.f32.mrf.mxu0
        %v848 = vadd.f32 %v329, %v847
        %v849 = vpop.f32.mrf.mxu0
        %850 = vmatprep.mubr.f32.mxu0 0.0
        %851 = vmatmul.mubr.f32.gmra.mxu0 %v375
        %v852 = vpop.f32.mrf.mxu0
        %v853 = vadd.f32 %v329, %v852
        %v854 = vpop.f32.mrf.mxu0
        %855 = vmatprep.mubr.f32.mxu0 0.0
        %856 = vmatmul.mubr.f32.gmra.mxu0 %v378
        %v857 = vpop.f32.mrf.mxu0
        %v858 = vadd.f32 %v329, %v857
        %v859 = vpop.f32.mrf.mxu0
        %860 = vmatprep.mubr.f32.mxu0 0.0
        %861 = vmatmul.mubr.f32.gmra.mxu0 %v381
        %v862 = vpop.f32.mrf.mxu0
        %v863 = vadd.f32 %v329, %v862
        %v864 = vpop.f32.mrf.mxu0
        %865 = vmatprep.mubr.f32.mxu0 0.0
        %866 = vmatmul.mubr.f32.gmra.mxu0 %v384
        %v867 = vpop.f32.mrf.mxu0
        %v868 = vadd.f32 %v329, %v867
        %v869 = vpop.f32.mrf.mxu0
        %870 = vmatprep.mubr.f32.mxu0 0.0
        %871 = vmatmul.mubr.f32.gmra.mxu0 %v387
        %v872 = vpop.f32.mrf.mxu0
        %v873 = vadd.f32 %v329, %v872
        %v874 = vpop.f32.mrf.mxu0
        %875 = vmatprep.mubr.f32.mxu0 0.0
        %876 = vmatmul.mubr.f32.gmra.mxu0 %v390
        %v877 = vpop.f32.mrf.mxu0
        %v878 = vadd.f32 %v329, %v877
        %v879 = vpop.f32.mrf.mxu0
        %880 = vmatprep.mubr.f32.mxu0 0.0
        %881 = vmatmul.mubr.f32.gmra.mxu0 %v393
        %v882 = vpop.f32.mrf.mxu0
        %v883 = vadd.f32 %v329, %v882
        %v884 = vpop.f32.mrf.mxu0
        %885 = vmatprep.mubr.f32.mxu0 0.0
        %886 = vmatmul.mubr.f32.gmra.mxu0 %v396
        %v887 = vpop.f32.mrf.mxu0
        %v888 = vadd.f32 %v329, %v887
        %v889 = vpop.f32.mrf.mxu0
        %890 = vmatprep.mubr.f32.mxu0 0.0
        %891 = vmatmul.mubr.f32.gmra.mxu0 %v399
        %v892 = vpop.f32.mrf.mxu0
        %v893 = vadd.f32 %v329, %v892
        %v894 = vpop.f32.mrf.mxu0
        %895 = vmatprep.mubr.f32.mxu0 0.0
        %896 = vmatmul.mubr.f32.gmra.mxu0 %v402
        %v897 = vpop.f32.mrf.mxu0
        %v898 = vadd.f32 %v329, %v897
        %v899 = vpop.f32.mrf.mxu0
        %900 = vmatprep.mubr.f32.mxu0 0.0
        %901 = vmatmul.mubr.f32.gmra.mxu0 %v405
        %v902 = vpop.f32.mrf.mxu0
        %v903 = vadd.f32 %v329, %v902
        %v904 = vpop.f32.mrf.mxu0
        %905 = vmatprep.mubr.f32.mxu0 0.0
        %906 = vmatmul.mubr.f32.gmra.mxu0 %v408
        %v907 = vpop.f32.mrf.mxu0
        %v908 = vadd.f32 %v329, %v907
        %v909 = vpop.f32.mrf.mxu0
        %910 = vmatprep.mubr.f32.mxu0 0.0
        %911 = vmatmul.mubr.f32.gmra.mxu0 %v411
        %v912 = vpop.f32.mrf.mxu0
        %v913 = vadd.f32 %v329, %v912
        %v914 = vpop.f32.mrf.mxu0
        %915 = vmatprep.mubr.f32.mxu0 0.0
        %916 = vmatmul.mubr.f32.gmra.mxu0 %v414
        %v917 = vpop.f32.mrf.mxu0
        %v918 = vadd.f32 %v329, %v917
        %v919 = vpop.f32.mrf.mxu0
        %920 = vmatprep.mubr.f32.mxu0 0.0
        %921 = vmatmul.mubr.f32.gmra.mxu0 %v417
        %v922 = vpop.f32.mrf.mxu0
        %v923 = vadd.f32 %v329, %v922
        %v924 = vpop.f32.mrf.mxu0
        %925 = vmatprep.mubr.f32.mxu0 0.0
        %926 = vmatmul.mubr.f32.gmra.mxu0 %v420
        %v927 = vpop.f32.mrf.mxu0
        %v928 = vadd.f32 %v329, %v927
        %v929 = vpop.f32.mrf.mxu0
        %930 = vmatprep.mubr.f32.mxu0 0.0
        %931 = vmatmul.mubr.f32.gmra.mxu0 %v423
        %v932 = vpop.f32.mrf.mxu0
        %v933 = vadd.f32 %v329, %v932
        %v934 = vpop.f32.mrf.mxu0
        %935 = vmatprep.mubr.f32.mxu0 0.0
        %936 = vmatmul.mubr.f32.gmra.mxu0 %v426
        %v937 = vpop.f32.mrf.mxu0
        %v938 = vadd.f32 %v329, %v937
        %v939 = vpop.f32.mrf.mxu0
        %940 = vmatprep.mubr.f32.mxu0 0.0
        %941 = vmatmul.mubr.f32.gmra.mxu0 %v429
        %v942 = vpop.f32.mrf.mxu0
        %v943 = vadd.f32 %v329, %v942
        %v944 = vpop.f32.mrf.mxu0
        %945 = vmatprep.mubr.f32.mxu0 0.0
        %946 = vmatmul.mubr.f32.gmra.mxu0 %v432
        %v947 = vpop.f32.mrf.mxu0
        %v948 = vadd.f32 %v329, %v947
        %v949 = vpop.f32.mrf.mxu0
        %950 = vmatprep.mubr.f32.mxu0 0.0
        %951 = vmatmul.mubr.f32.gmra.mxu0 %v435
        %v952 = vpop.f32.mrf.mxu0
        %v953 = vadd.f32 %v329, %v952
        %v954 = vpop.f32.mrf.mxu0
        %955 = vmatprep.mubr.f32.mxu0 0.0
        %956 = vmatmul.mubr.f32.gmra.mxu0 %v438
        %v957 = vpop.f32.mrf.mxu0
        %v958 = vadd.f32 %v329, %v957
        %v959 = vpop.f32.mrf.mxu0
        %960 = vmatprep.mubr.f32.mxu0 0.0
        %961 = vmatmul.mubr.f32.gmra.mxu0 %v441
        %v962 = vpop.f32.mrf.mxu0
        %v963 = vadd.f32 %v329, %v962
        %v964 = vpop.f32.mrf.mxu0
        %965 = vmatprep.mubr.f32.mxu0 0.0
        %966 = vmatmul.mubr.f32.gmra.mxu0 %v444
        %v967 = vpop.f32.mrf.mxu0
        %v968 = vadd.f32 %v329, %v967
        %v969 = vpop.f32.mrf.mxu0
        %970 = vmatprep.mubr.f32.mxu0 0.0
        %971 = vmatmul.mubr.f32.gmra.mxu0 %v447
        %v972 = vpop.f32.mrf.mxu0
        %v973 = vadd.f32 %v329, %v972
        %v974 = vpop.f32.mrf.mxu0
        %975 = vmatprep.mubr.f32.mxu0 0.0
        %976 = vmatmul.mubr.f32.gmra.mxu0 %v450
        %v977 = vpop.f32.mrf.mxu0
        %v978 = vadd.f32 %v329, %v977
        %v979 = vpop.f32.mrf.mxu0
        %980 = vmatprep.mubr.f32.mxu0 0.0
        %981 = vmatmul.mubr.f32.gmra.mxu0 %v453
        %v982 = vpop.f32.mrf.mxu0
        %v983 = vadd.f32 %v329, %v982
        %v984 = vpop.f32.mrf.mxu0
        %985 = vmatprep.mubr.f32.mxu0 0.0
        %986 = vmatmul.mubr.f32.gmra.mxu0 %v456
        %v987 = vpop.f32.mrf.mxu0
        %v988 = vadd.f32 %v329, %v987
        %v989 = vpop.f32.mrf.mxu0
        %990 = vmatprep.mubr.f32.mxu0 0.0
        %991 = vmatmul.mubr.f32.gmra.mxu0 %v459
        %v992 = vpop.f32.mrf.mxu0
        %v993 = vadd.f32 %v329, %v992
        %v994 = vpop.f32.mrf.mxu0
        %995 = vmatprep.mubr.f32.mxu0 0.0
        %996 = vmatmul.mubr.f32.gmra.mxu0 %v462
        %v997 = vpop.f32.mrf.mxu0
        %v998 = vadd.f32 %v329, %v997
        %v999 = vpop.f32.mrf.mxu0
        %1000 = vmatprep.mubr.f32.mxu0 0.0
        %1001 = vmatmul.mubr.f32.gmra.mxu0 %v465
        %v1002 = vpop.f32.mrf.mxu0
        %v1003 = vadd.f32 %v329, %v1002
        %v1004 = vpop.f32.mrf.mxu0
        %1005 = vmatprep.mubr.f32.mxu0 0.0
        %1006 = vmatmul.mubr.f32.gmra.mxu0 %v468
        %v1007 = vpop.f32.mrf.mxu0
        %v1008 = vadd.f32 %v329, %v1007
        %v1009 = vpop.f32.mrf.mxu0
        %1010 = vmatprep.mubr.f32.mxu0 0.0
        %1011 = vmatmul.mubr.f32.gmra.mxu0 %v471
        %v1012 = vpop.f32.mrf.mxu0
        %v1013 = vadd.f32 %v329, %v1012
        %v1014 = vpop.f32.mrf.mxu0
        %1015 = vmatprep.mubr.f32.mxu0 0.0
        %1016 = vmatmul.mubr.f32.gmra.mxu0 %v474
        %v1017 = vpop.f32.mrf.mxu0
        %v1018 = vadd.f32 %v329, %v1017
        %v1019 = vpop.f32.mrf.mxu0
        %1020 = vmatprep.mubr.f32.mxu0 0.0
        %1021 = vmatmul.mubr.f32.gmra.mxu0 %v477
        %v1022 = vpop.f32.mrf.mxu0
        %v1023 = vadd.f32 %v329, %v1022
        %v1024 = vpop.f32.mrf.mxu0
        %1025 = vmatprep.mubr.f32.mxu0 0.0
        %1026 = vmatmul.mubr.f32.gmra.mxu0 %v480
        %v1027 = vpop.f32.mrf.mxu0
        %v1028 = vadd.f32 %v329, %v1027
        %v1029 = vpop.f32.mrf.mxu0
        %1030 = vmatprep.mubr.f32.mxu0 0.0
        %1031 = vmatmul.mubr.f32.gmra.mxu0 %v483
        %v1032 = vpop.f32.mrf.mxu0
        %v1033 = vadd.f32 %v329, %v1032
        %v1034 = vpop.f32.mrf.mxu0
        %1035 = vmatprep.mubr.f32.mxu0 0.0
        %1036 = vmatmul.mubr.f32.gmra.mxu0 %v486
        %v1037 = vpop.f32.mrf.mxu0
        %v1038 = vadd.f32 %v329, %v1037
        %v1039 = vpop.f32.mrf.mxu0
        %1040 = vmatprep.mubr.f32.mxu0 0.0
        %1041 = vmatmul.mubr.f32.gmra.mxu0 %v489
        %v1042 = vpop.f32.mrf.mxu0
        %v1043 = vadd.f32 %v329, %v1042
        %v1044 = vpop.f32.mrf.mxu0
        %1045 = vmatprep.mubr.f32.mxu0 0.0
        %1046 = vmatmul.mubr.f32.gmra.mxu0 %v492
        %v1047 = vpop.f32.mrf.mxu0
        %v1048 = vadd.f32 %v329, %v1047
        %v1049 = vpop.f32.mrf.mxu0
        %1050 = vmatprep.mubr.f32.mxu0 0.0
        %1051 = vmatmul.mubr.f32.gmra.mxu0 %v495
        %v1052 = vpop.f32.mrf.mxu0
        %v1053 = vadd.f32 %v329, %v1052
        %v1054 = vpop.f32.mrf.mxu0
        %1055 = vmatprep.mubr.f32.mxu0 0.0
        %1056 = vmatmul.mubr.f32.gmra.mxu0 %v498
        %v1057 = vpop.f32.mrf.mxu0
        %v1058 = vadd.f32 %v329, %v1057
        %v1059 = vpop.f32.mrf.mxu0
        %1060 = vmatprep.mubr.f32.mxu0 0.0
        %1061 = vmatmul.mubr.f32.gmra.mxu0 %v501
        %v1062 = vpop.f32.mrf.mxu0
        %v1063 = vadd.f32 %v329, %v1062
        %v1064 = vpop.f32.mrf.mxu0
        %1065 = vmatprep.mubr.f32.mxu0 0.0
        %1066 = vmatmul.mubr.f32.gmra.mxu0 %v504
        %v1067 = vpop.f32.mrf.mxu0
        %v1068 = vadd.f32 %v329, %v1067
        %v1069 = vpop.f32.mrf.mxu0
        %1070 = vmatprep.mubr.f32.mxu0 0.0
        %1071 = vmatmul.mubr.f32.gmra.mxu0 %v507
        %v1072 = vpop.f32.mrf.mxu0
        %v1073 = vadd.f32 %v329, %v1072
        %v1074 = vpop.f32.mrf.mxu0
        %1075 = vmatprep.mubr.f32.mxu0 0.0
        %1076 = vmatmul.mubr.f32.gmra.mxu0 %v510
        %v1077 = vpop.f32.mrf.mxu0
        %v1078 = vadd.f32 %v329, %v1077
        %v1079 = vpop.f32.mrf.mxu0
        %1080 = vmatprep.mubr.f32.mxu0 0.0
        %1081 = vmatmul.mubr.f32.gmra.mxu0 %v513
        %v1082 = vpop.f32.mrf.mxu0
        %v1083 = vadd.f32 %v329, %v1082
        %v1084 = vpop.f32.mrf.mxu0
        %1085 = vmatprep.mubr.f32.mxu0 0.0
        %1086 = vmatmul.mubr.f32.gmra.mxu0 %v516
        %v1087 = vpop.f32.mrf.mxu0
        %v1088 = vadd.f32 %v329, %v1087
        %v1089 = vpop.f32.mrf.mxu0
        %1090 = vmatprep.mubr.f32.mxu0 0.0
        %1091 = vmatmul.mubr.f32.gmra.mxu0 %v519
        %v1092 = vpop.f32.mrf.mxu0
        %v1093 = vadd.f32 %v329, %v1092
        %v1094 = vpop.f32.mrf.mxu0
        %1095 = vmatprep.mubr.f32.mxu0 0.0
        %1096 = vmatmul.mubr.f32.gmra.mxu0 %v522
        %v1097 = vpop.f32.mrf.mxu0
        %v1098 = vadd.f32 %v329, %v1097
        %v1099 = vpop.f32.mrf.mxu0
        %1100 = vmatprep.mubr.f32.mxu0 0.0
        %1101 = vmatmul.mubr.f32.gmra.mxu0 %v525
        %v1102 = vpop.f32.mrf.mxu0
        %v1103 = vadd.f32 %v329, %v1102
        %v1104 = vpop.f32.mrf.mxu0
        %1105 = vmatprep.mubr.f32.mxu0 0.0
        %1106 = vmatmul.mubr.f32.gmra.mxu0 %v528
        %v1107 = vpop.f32.mrf.mxu0
        %v1108 = vadd.f32 %v329, %v1107
        %v1109 = vpop.f32.mrf.mxu0
        %1110 = vmatprep.mubr.f32.mxu0 0.0
        %1111 = vmatmul.mubr.f32.gmra.mxu0 %v531
        %v1112 = vpop.f32.mrf.mxu0
        %v1113 = vadd.f32 %v329, %v1112
        %v1114 = vpop.f32.mrf.mxu0
        %1115 = vmatprep.mubr.f32.mxu0 0.0
        %1116 = vmatmul.mubr.f32.gmra.mxu0 %v534
        %v1117 = vpop.f32.mrf.mxu0
        %v1118 = vadd.f32 %v329, %v1117
        %v1119 = vpop.f32.mrf.mxu0
        %1120 = vmatprep.mubr.f32.mxu0 0.0
        %1121 = vmatmul.mubr.f32.gmra.mxu0 %v537
        %v1122 = vpop.f32.mrf.mxu0
        %v1123 = vadd.f32 %v329, %v1122
        %v1124 = vpop.f32.mrf.mxu0
        %1125 = vmatprep.mubr.f32.mxu0 0.0
        %1126 = vmatmul.mubr.f32.gmra.mxu0 %v540
        %v1127 = vpop.f32.mrf.mxu0
        %v1128 = vadd.f32 %v329, %v1127
        %v1129 = vpop.f32.mrf.mxu0
        %1130 = vmatprep.mubr.f32.mxu0 0.0
        %1131 = vmatmul.mubr.f32.gmra.mxu0 %v543
        %v1132 = vpop.f32.mrf.mxu0
        %v1133 = vadd.f32 %v329, %v1132
        %v1134 = vpop.f32.mrf.mxu0
        %1135 = vmatprep.mubr.f32.mxu0 0.0
        %1136 = vmatmul.mubr.f32.gmra.mxu0 %v546
        %v1137 = vpop.f32.mrf.mxu0
        %v1138 = vadd.f32 %v329, %v1137
        %v1139 = vpop.f32.mrf.mxu0
        %1140 = vmatprep.mubr.f32.mxu0 0.0
        %1141 = vmatmul.mubr.f32.gmra.mxu0 %v549
        %v1142 = vpop.f32.mrf.mxu0
        %v1143 = vadd.f32 %v329, %v1142
        %v1144 = vpop.f32.mrf.mxu0
        %1145 = vmatprep.mubr.f32.mxu0 0.0
        %1146 = vmatmul.mubr.f32.gmra.mxu0 %v552
        %v1147 = vpop.f32.mrf.mxu0
        %v1148 = vadd.f32 %v329, %v1147
        %v1149 = vpop.f32.mrf.mxu0
        %1150 = vmatprep.mubr.f32.mxu0 0.0
        %1151 = vmatmul.mubr.f32.gmra.mxu0 %v555
        %v1152 = vpop.f32.mrf.mxu0
        %v1153 = vadd.f32 %v329, %v1152
        %v1154 = vpop.f32.mrf.mxu0
        %1155 = vmatprep.mubr.f32.mxu0 0.0
        %1156 = vmatmul.mubr.f32.gmra.mxu0 %v558
        %v1157 = vpop.f32.mrf.mxu0
        %v1158 = vadd.f32 %v329, %v1157
        %v1159 = vpop.f32.mrf.mxu0
        %1160 = vmatprep.mubr.f32.mxu0 0.0
        %1161 = vmatmul.mubr.f32.gmra.mxu0 %v561
        %v1162 = vpop.f32.mrf.mxu0
        %v1163 = vadd.f32 %v329, %v1162
        %v1164 = vpop.f32.mrf.mxu0
        %1165 = vmatprep.mubr.f32.mxu0 0.0
        %1166 = vmatmul.mubr.f32.gmra.mxu0 %v564
        %v1167 = vpop.f32.mrf.mxu0
        %v1168 = vadd.f32 %v329, %v1167
        %v1169 = vpop.f32.mrf.mxu0
        %1170 = vmatprep.mubr.f32.mxu0 0.0
        %1171 = vmatmul.mubr.f32.gmra.mxu0 %v567
        %v1172 = vpop.f32.mrf.mxu0
        %v1173 = vadd.f32 %v329, %v1172
        %v1174 = vpop.f32.mrf.mxu0
        %1175 = vmatprep.mubr.f32.mxu0 0.0
        %1176 = vmatmul.mubr.f32.gmra.mxu0 %v570
        %v1177 = vpop.f32.mrf.mxu0
        %v1178 = vadd.f32 %v329, %v1177
        %v1179 = vpop.f32.mrf.mxu0
        %1180 = vmatprep.mubr.f32.mxu0 0.0
        %1181 = vmatmul.mubr.f32.gmra.mxu0 %v573
        %v1182 = vpop.f32.mrf.mxu0
        %v1183 = vadd.f32 %v329, %v1182
        %v1184 = vpop.f32.mrf.mxu0
        %1185 = vmatprep.mubr.f32.mxu0 0.0
        %1186 = vmatmul.mubr.f32.gmra.mxu0 %v576
        %v1187 = vpop.f32.mrf.mxu0
        %v1188 = vadd.f32 %v329, %v1187
        %v1189 = vpop.f32.mrf.mxu0
        %1190 = vmatprep.mubr.f32.mxu0 0.0
        %1191 = vmatmul.mubr.f32.gmra.mxu0 %v579
        %v1192 = vpop.f32.mrf.mxu0
        %v1193 = vadd.f32 %v329, %v1192
        %v1194 = vpop.f32.mrf.mxu0
        %1195 = vmatprep.mubr.f32.mxu0 0.0
        %1196 = vmatmul.mubr.f32.gmra.mxu0 %v582
        %v1197 = vpop.f32.mrf.mxu0
        %v1198 = vadd.f32 %v329, %v1197
        %v1199 = vpop.f32.mrf.mxu0
        %1200 = vmatprep.mubr.f32.mxu0 0.0
        %1201 = vmatmul.mubr.f32.gmra.mxu0 %v585
        %v1202 = vpop.f32.mrf.mxu0
        %v1203 = vadd.f32 %v329, %v1202
        %v1204 = vpop.f32.mrf.mxu0
        %1205 = vmatprep.mubr.f32.mxu0 0.0
        %1206 = vmatmul.mubr.f32.gmra.mxu0 %v588
        %v1207 = vpop.f32.mrf.mxu0
        %v1208 = vadd.f32 %v329, %v1207
        %v1209 = vpop.f32.mrf.mxu0
        %1210 = vmatprep.mubr.f32.mxu0 0.0
        %1211 = vmatmul.mubr.f32.gmra.mxu0 %v591
        %v1212 = vpop.f32.mrf.mxu0
        %v1213 = vadd.f32 %v329, %v1212
        %v1214 = vpop.f32.mrf.mxu0
        %1215 = vmatprep.mubr.f32.mxu0 0.0
        %1216 = vmatmul.mubr.f32.gmra.mxu0 %v594
        %v1217 = vpop.f32.mrf.mxu0
        %v1218 = vadd.f32 %v329, %v1217
        %v1219 = vpop.f32.mrf.mxu0
        %1220 = vmatprep.mubr.f32.mxu0 0.0
        %1221 = vmatmul.mubr.f32.gmra.mxu0 %v597
        %v1222 = vpop.f32.mrf.mxu0
        %v1223 = vadd.f32 %v329, %v1222
        %v1224 = vpop.f32.mrf.mxu0
        %1225 = vmatprep.mubr.f32.mxu0 0.0
        %1226 = vmatmul.mubr.f32.gmra.mxu0 %v600
        %v1227 = vpop.f32.mrf.mxu0
        %v1228 = vadd.f32 %v329, %v1227
        %v1229 = vpop.f32.mrf.mxu0
        %1230 = vmatprep.mubr.f32.mxu0 0.0
        %1231 = vmatmul.mubr.f32.gmra.mxu0 %v603
        %v1232 = vpop.f32.mrf.mxu0
        %v1233 = vadd.f32 %v329, %v1232
        %v1234 = vpop.f32.mrf.mxu0
        %1235 = vmatprep.mubr.f32.mxu0 0.0
        %1236 = vmatmul.mubr.f32.gmra.mxu0 %v606
        %v1237 = vpop.f32.mrf.mxu0
        %v1238 = vadd.f32 %v329, %v1237
        %v1239 = vpop.f32.mrf.mxu0
        %1240 = vmatprep.mubr.f32.mxu0 0.0
        %1241 = vmatmul.mubr.f32.gmra.mxu0 %v609
        %v1242 = vpop.f32.mrf.mxu0
        %v1243 = vadd.f32 %v329, %v1242
        %v1244 = vpop.f32.mrf.mxu0
        %1245 = vmatprep.mubr.f32.mxu0 0.0
        %1246 = vmatmul.mubr.f32.gmra.mxu0 %v612
        %v1247 = vpop.f32.mrf.mxu0
        %v1248 = vadd.f32 %v329, %v1247
        %v1249 = vpop.f32.mrf.mxu0
        %1250 = vmatprep.mubr.f32.mxu0 0.0
        %1251 = vmatmul.mubr.f32.gmra.mxu0 %v615
        %v1252 = vpop.f32.mrf.mxu0
        %v1253 = vadd.f32 %v329, %v1252
        %v1254 = vpop.f32.mrf.mxu0
        %1255 = vmatprep.mubr.f32.mxu0 0.0
        %1256 = vmatmul.mubr.f32.gmra.mxu0 %v618
        %v1257 = vpop.f32.mrf.mxu0
        %v1258 = vadd.f32 %v329, %v1257
        %v1259 = vpop.f32.mrf.mxu0
        %1260 = vmatprep.mubr.f32.mxu0 0.0
        %1261 = vmatmul.mubr.f32.gmra.mxu0 %v621
        %v1262 = vpop.f32.mrf.mxu0
        %v1263 = vadd.f32 %v329, %v1262
        %v1264 = vpop.f32.mrf.mxu0
        %1265 = vmatprep.mubr.f32.mxu0 0.0
        %1266 = vmatmul.mubr.f32.gmra.mxu0 %v624
        %v1267 = vpop.f32.mrf.mxu0
        %v1268 = vadd.f32 %v329, %v1267
        %v1269 = vpop.f32.mrf.mxu0
        %1270 = vmatprep.mubr.f32.mxu0 0.0
        %1271 = vmatmul.mubr.f32.gmra.mxu0 %v627
        %v1272 = vpop.f32.mrf.mxu0
        %v1273 = vadd.f32 %v329, %v1272
        %v1274 = vpop.f32.mrf.mxu0
        %1275 = vmatprep.mubr.f32.mxu0 0.0
        %1276 = vmatmul.mubr.f32.gmra.mxu0 %v630
        %v1277 = vpop.f32.mrf.mxu0
        %v1278 = vadd.f32 %v329, %v1277
        %v1279 = vpop.f32.mrf.mxu0
        %1280 = vmatprep.mubr.f32.mxu0 0.0
        %1281 = vmatmul.mubr.f32.gmra.mxu0 %v633
        %v1282 = vpop.f32.mrf.mxu0
        %v1283 = vadd.f32 %v329, %v1282
        %v1284 = vpop.f32.mrf.mxu0
        %1285 = vmatprep.mubr.f32.mxu0 0.0
        %1286 = vmatmul.mubr.f32.gmra.mxu0 %v636
        %v1287 = vpop.f32.mrf.mxu0
        %v1288 = vadd.f32 %v329, %v1287
        %v1289 = vpop.f32.mrf.mxu0
        %1290 = vmatprep.mubr.f32.mxu0 0.0
        %1291 = vmatmul.mubr.f32.gmra.mxu0 %v639
        %v1292 = vpop.f32.mrf.mxu0
        %v1293 = vadd.f32 %v329, %v1292
        %v1294 = vpop.f32.mrf.mxu0
        %1295 = vmatprep.mubr.f32.mxu0 0.0
        %1296 = vmatmul.mubr.f32.gmra.mxu0 %v642
        %v1297 = vpop.f32.mrf.mxu0
        %v1298 = vadd.f32 %v329, %v1297
        %v1299 = vpop.f32.mrf.mxu0
        %1300 = vmatprep.mubr.f32.mxu0 0.0
        %1301 = vmatmul.mubr.f32.gmra.mxu0 %v645
        %v1302 = vpop.f32.mrf.mxu0
        %v1303 = vadd.f32 %v329, %v1302
        %v1304 = vpop.f32.mrf.mxu0
        %1305 = vmatprep.mubr.f32.mxu0 0.0
        %1306 = vmatmul.mubr.f32.gmra.mxu0 %v648
        %v1307 = vpop.f32.mrf.mxu0
        %v1308 = vadd.f32 %v329, %v1307
        %v1309 = vpop.f32.mrf.mxu0
        %1310 = vmatprep.mubr.f32.mxu0 0.0
        %1311 = vmatmul.mubr.f32.gmra.mxu0 %v651
        %v1312 = vpop.f32.mrf.mxu0
        %v1313 = vadd.f32 %v329, %v1312
        %v1314 = vpop.f32.mrf.mxu0
        %1315 = vmatprep.mubr.f32.mxu0 0.0
        %1316 = vmatmul.mubr.f32.gmra.mxu0 %v654
        %v1317 = vpop.f32.mrf.mxu0
        %v1318 = vadd.f32 %v329, %v1317
        %v1319 = vpop.f32.mrf.mxu0
        %1320 = vmatprep.mubr.f32.mxu0 0.0
        %1321 = vmatmul.mubr.f32.gmra.mxu0 %v657
        %v1322 = vpop.f32.mrf.mxu0
        %v1323 = vadd.f32 %v329, %v1322
        %v1324 = vpop.f32.mrf.mxu0
        %1325 = vmatprep.mubr.f32.mxu0 0.0
        %1326 = vmatmul.mubr.f32.gmra.mxu0 %v660
        %v1327 = vpop.f32.mrf.mxu0
        %v1328 = vadd.f32 %v329, %v1327
        %v1329 = vpop.f32.mrf.mxu0
        %1330 = vmatprep.mubr.f32.mxu0 0.0
        %1331 = vmatmul.mubr.f32.gmra.mxu0 %v663
        %v1332 = vpop.f32.mrf.mxu0
        %v1333 = vadd.f32 %v329, %v1332
        %v1334 = vpop.f32.mrf.mxu0
        %1335 = vmatprep.mubr.f32.mxu0 0.0
        %1336 = vmatmul.mubr.f32.gmra.mxu0 %v666
        %v1337 = vpop.f32.mrf.mxu0
        %v1338 = vadd.f32 %v329, %v1337
        %v1339 = vpop.f32.mrf.mxu0
        %1340 = vmatprep.mubr.f32.mxu0 0.0
        %1341 = vmatmul.mubr.f32.gmra.mxu0 %v669
        %v1342 = vpop.f32.mrf.mxu0
        %v1343 = vadd.f32 %v329, %v1342
        %v1344 = vpop.f32.mrf.mxu0
        %1345 = vmatprep.mubr.f32.mxu0 0.0
        %1346 = vmatmul.mubr.f32.gmra.mxu0 %v672
        %v1347 = vpop.f32.mrf.mxu0
        %v1348 = vadd.f32 %v329, %v1347
        %v1349 = vpop.f32.mrf.mxu0
        %1350 = vmatprep.mubr.f32.mxu0 0.0
        %1351 = vmatmul.mubr.f32.gmra.mxu0 %v675
        %v1352 = vpop.f32.mrf.mxu0
        %v1353 = vadd.f32 %v329, %v1352
        %v1354 = vpop.f32.mrf.mxu0
        %1355 = vmatprep.mubr.f32.mxu0 0.0
        %1356 = vmatmul.mubr.f32.gmra.mxu0 %v678
        %v1357 = vpop.f32.mrf.mxu0
        %v1358 = vadd.f32 %v329, %v1357
        %v1359 = vpop.f32.mrf.mxu0
        %1360 = vmatprep.mubr.f32.mxu0 0.0
        %1361 = vmatmul.mubr.f32.gmra.mxu0 %v681
        %v1362 = vpop.f32.mrf.mxu0
        %v1363 = vadd.f32 %v329, %v1362
        %v1364 = vpop.f32.mrf.mxu0
        %1365 = vmatprep.mubr.f32.mxu0 0.0
        %1366 = vmatmul.mubr.f32.gmra.mxu0 %v684
        %v1367 = vpop.f32.mrf.mxu0
        %v1368 = vadd.f32 %v329, %v1367
        %v1369 = vpop.f32.mrf.mxu0
        %1370 = vmatprep.mubr.f32.mxu0 0.0
        %1371 = vmatmul.mubr.f32.gmra.mxu0 %v687
        %v1372 = vpop.f32.mrf.mxu0
        %v1373 = vadd.f32 %v329, %v1372
        %v1374 = vpop.f32.mrf.mxu0
        %1375 = vmatprep.mubr.f32.mxu0 0.0
        %1376 = vmatmul.mubr.f32.gmra.mxu0 %v690
        %v1377 = vpop.f32.mrf.mxu0
        %v1378 = vadd.f32 %v329, %v1377
        %v1379 = vpop.f32.mrf.mxu0
        %1380 = vmatprep.mubr.f32.mxu0 0.0
        %1381 = vmatmul.mubr.f32.gmra.mxu0 %v693
        %v1382 = vpop.f32.mrf.mxu0
        %v1383 = vadd.f32 %v329, %v1382
        %v1384 = vpop.f32.mrf.mxu0
        %1385 = vmatprep.mubr.f32.mxu0 0.0
        %1386 = vmatmul.mubr.f32.gmra.mxu0 %v696
        %v1387 = vpop.f32.mrf.mxu0
        %v1388 = vadd.f32 %v329, %v1387
        %v1389 = vpop.f32.mrf.mxu0
        %1390 = vmatprep.mubr.f32.mxu0 0.0
        %1391 = vmatmul.mubr.f32.gmra.mxu0 %v699
        %v1392 = vpop.f32.mrf.mxu0
        %v1393 = vadd.f32 %v329, %v1392
        %v1394 = vpop.f32.mrf.mxu0
        %1395 = vmatprep.mubr.f32.mxu0 0.0
        %1396 = vmatmul.mubr.f32.gmra.mxu0 %v702
        %v1397 = vpop.f32.mrf.mxu0
        %v1398 = vadd.f32 %v329, %v1397
        %v1399 = vpop.f32.mrf.mxu0
        %1400 = vmatprep.mubr.f32.mxu0 0.0
        %1401 = vmatmul.mubr.f32.gmra.mxu0 %v705
        %v1402 = vpop.f32.mrf.mxu0
        %v1403 = vadd.f32 %v329, %v1402
        %v1404 = vpop.f32.mrf.mxu0
        %1405 = vmatprep.mubr.f32.mxu0 0.0
        %1406 = vmatmul.mubr.f32.gmra.mxu0 %v708
        %v1407 = vpop.f32.mrf.mxu0
        %v1408 = vadd.f32 %v329, %v1407
        %v1409 = vpop.f32.mrf.mxu0
        %1410 = vmatprep.mubr.f32.mxu0 0.0
        %1411 = vmatmul.mubr.f32.gmra.mxu0 %v711
        %v1412 = vpop.f32.mrf.mxu0
        %v1413 = vadd.f32 %v329, %v1412
        %v1414 = vpop.f32.mrf.mxu0
        %1415 = vmatprep.mubr.f32.mxu0 0.0
        %1416 = vmatmul.mubr.f32.gmra.mxu0 %v714
        %v1417 = vpop.f32.mrf.mxu0
        %v1418 = vadd.f32 %v329, %v1417
        %v1419 = vpop.f32.mrf.mxu0
        %1420 = vdwg.mxu0
        %vm1421 = vcmask 39936
        %v1422 = vsel %vm1421, %v783, -inf
        %1423 = vmax.xlane.f32.xlu0 %v1422
        %v1424 = vpop.xlane.xlu0 %1423
        %v1425 = vsel %vm1421, %v788, -inf
        %1426 = vmax.xlane.f32.xlu0 %v1425
        %v1427 = vpop.xlane.xlu0 %1426
        %v1428 = vsel %vm1421, %v793, -inf
        %1429 = vmax.xlane.f32.xlu0 %v1428
        %v1430 = vpop.xlane.xlu0 %1429
        %v1431 = vsel %vm1421, %v798, -inf
        %1432 = vmax.xlane.f32.xlu0 %v1431
        %v1433 = vpop.xlane.xlu0 %1432
        %v1434 = vsel %vm1421, %v803, -inf
        %1435 = vmax.xlane.f32.xlu0 %v1434
        %v1436 = vpop.xlane.xlu0 %1435
        %v1437 = vsel %vm1421, %v808, -inf
        %1438 = vmax.xlane.f32.xlu0 %v1437
        %v1439 = vpop.xlane.xlu0 %1438
        %v1440 = vsel %vm1421, %v813, -inf
        %1441 = vmax.xlane.f32.xlu0 %v1440
        %v1442 = vpop.xlane.xlu0 %1441
        %v1443 = vsel %vm1421, %v818, -inf
        %1444 = vmax.xlane.f32.xlu0 %v1443
        %v1445 = vpop.xlane.xlu0 %1444
        %v1446 = vsel %vm1421, %v823, -inf
        %1447 = vmax.xlane.f32.xlu0 %v1446
        %v1448 = vpop.xlane.xlu0 %1447
        %v1449 = vsel %vm1421, %v828, -inf
        %1450 = vmax.xlane.f32.xlu0 %v1449
        %v1451 = vpop.xlane.xlu0 %1450
        %v1452 = vsel %vm1421, %v833, -inf
        %1453 = vmax.xlane.f32.xlu0 %v1452
        %v1454 = vpop.xlane.xlu0 %1453
        %v1455 = vsel %vm1421, %v838, -inf
        %1456 = vmax.xlane.f32.xlu0 %v1455
        %v1457 = vpop.xlane.xlu0 %1456
        %v1458 = vsel %vm1421, %v843, -inf
        %1459 = vmax.xlane.f32.xlu0 %v1458
        %v1460 = vpop.xlane.xlu0 %1459
        %v1461 = vsel %vm1421, %v848, -inf
        %1462 = vmax.xlane.f32.xlu0 %v1461
        %v1463 = vpop.xlane.xlu0 %1462
        %v1464 = vsel %vm1421, %v853, -inf
        %1465 = vmax.xlane.f32.xlu0 %v1464
        %v1466 = vpop.xlane.xlu0 %1465
        %v1467 = vsel %vm1421, %v858, -inf
        %1468 = vmax.xlane.f32.xlu0 %v1467
        %v1469 = vpop.xlane.xlu0 %1468
        %v1470 = vsel %vm1421, %v863, -inf
        %1471 = vmax.xlane.f32.xlu0 %v1470
        %v1472 = vpop.xlane.xlu0 %1471
        %v1473 = vsel %vm1421, %v868, -inf
        %1474 = vmax.xlane.f32.xlu0 %v1473
        %v1475 = vpop.xlane.xlu0 %1474
        %v1476 = vsel %vm1421, %v873, -inf
        %1477 = vmax.xlane.f32.xlu0 %v1476
        %v1478 = vpop.xlane.xlu0 %1477
        %v1479 = vsel %vm1421, %v878, -inf
        %1480 = vmax.xlane.f32.xlu0 %v1479
        %v1481 = vpop.xlane.xlu0 %1480
        %v1482 = vsel %vm1421, %v883, -inf
        %1483 = vmax.xlane.f32.xlu0 %v1482
        %v1484 = vpop.xlane.xlu0 %1483
        %v1485 = vsel %vm1421, %v888, -inf
        %1486 = vmax.xlane.f32.xlu0 %v1485
        %v1487 = vpop.xlane.xlu0 %1486
        %v1488 = vsel %vm1421, %v893, -inf
        %1489 = vmax.xlane.f32.xlu0 %v1488
        %v1490 = vpop.xlane.xlu0 %1489
        %v1491 = vsel %vm1421, %v898, -inf
        %1492 = vmax.xlane.f32.xlu0 %v1491
        %v1493 = vpop.xlane.xlu0 %1492
        %v1494 = vsel %vm1421, %v903, -inf
        %1495 = vmax.xlane.f32.xlu0 %v1494
        %v1496 = vpop.xlane.xlu0 %1495
        %v1497 = vsel %vm1421, %v908, -inf
        %1498 = vmax.xlane.f32.xlu0 %v1497
        %v1499 = vpop.xlane.xlu0 %1498
        %v1500 = vsel %vm1421, %v913, -inf
        %1501 = vmax.xlane.f32.xlu0 %v1500
        %v1502 = vpop.xlane.xlu0 %1501
        %v1503 = vsel %vm1421, %v918, -inf
        %1504 = vmax.xlane.f32.xlu0 %v1503
        %v1505 = vpop.xlane.xlu0 %1504
        %v1506 = vsel %vm1421, %v923, -inf
        %1507 = vmax.xlane.f32.xlu0 %v1506
        %v1508 = vpop.xlane.xlu0 %1507
        %v1509 = vsel %vm1421, %v928, -inf
        %1510 = vmax.xlane.f32.xlu0 %v1509
        %v1511 = vpop.xlane.xlu0 %1510
        %v1512 = vsel %vm1421, %v933, -inf
        %1513 = vmax.xlane.f32.xlu0 %v1512
        %v1514 = vpop.xlane.xlu0 %1513
        %v1515 = vsel %vm1421, %v938, -inf
        %1516 = vmax.xlane.f32.xlu0 %v1515
        %v1517 = vpop.xlane.xlu0 %1516
        %v1518 = vsel %vm1421, %v943, -inf
        %1519 = vmax.xlane.f32.xlu0 %v1518
        %v1520 = vpop.xlane.xlu0 %1519
        %v1521 = vsel %vm1421, %v948, -inf
        %1522 = vmax.xlane.f32.xlu0 %v1521
        %v1523 = vpop.xlane.xlu0 %1522
        %v1524 = vsel %vm1421, %v953, -inf
        %1525 = vmax.xlane.f32.xlu0 %v1524
        %v1526 = vpop.xlane.xlu0 %1525
        %v1527 = vsel %vm1421, %v958, -inf
        %1528 = vmax.xlane.f32.xlu0 %v1527
        %v1529 = vpop.xlane.xlu0 %1528
        %v1530 = vsel %vm1421, %v963, -inf
        %1531 = vmax.xlane.f32.xlu0 %v1530
        %v1532 = vpop.xlane.xlu0 %1531
        %v1533 = vsel %vm1421, %v968, -inf
        %1534 = vmax.xlane.f32.xlu0 %v1533
        %v1535 = vpop.xlane.xlu0 %1534
        %v1536 = vsel %vm1421, %v973, -inf
        %1537 = vmax.xlane.f32.xlu0 %v1536
        %v1538 = vpop.xlane.xlu0 %1537
        %v1539 = vsel %vm1421, %v978, -inf
        %1540 = vmax.xlane.f32.xlu0 %v1539
        %v1541 = vpop.xlane.xlu0 %1540
        %v1542 = vsel %vm1421, %v983, -inf
        %1543 = vmax.xlane.f32.xlu0 %v1542
        %v1544 = vpop.xlane.xlu0 %1543
        %v1545 = vsel %vm1421, %v988, -inf
        %1546 = vmax.xlane.f32.xlu0 %v1545
        %v1547 = vpop.xlane.xlu0 %1546
        %v1548 = vsel %vm1421, %v993, -inf
        %1549 = vmax.xlane.f32.xlu0 %v1548
        %v1550 = vpop.xlane.xlu0 %1549
        %v1551 = vsel %vm1421, %v998, -inf
        %1552 = vmax.xlane.f32.xlu0 %v1551
        %v1553 = vpop.xlane.xlu0 %1552
        %v1554 = vsel %vm1421, %v1003, -inf
        %1555 = vmax.xlane.f32.xlu0 %v1554
        %v1556 = vpop.xlane.xlu0 %1555
        %v1557 = vsel %vm1421, %v1008, -inf
        %1558 = vmax.xlane.f32.xlu0 %v1557
        %v1559 = vpop.xlane.xlu0 %1558
        %v1560 = vsel %vm1421, %v1013, -inf
        %1561 = vmax.xlane.f32.xlu0 %v1560
        %v1562 = vpop.xlane.xlu0 %1561
        %v1563 = vsel %vm1421, %v1018, -inf
        %1564 = vmax.xlane.f32.xlu0 %v1563
        %v1565 = vpop.xlane.xlu0 %1564
        %v1566 = vsel %vm1421, %v1023, -inf
        %1567 = vmax.xlane.f32.xlu0 %v1566
        %v1568 = vpop.xlane.xlu0 %1567
        %v1569 = vsel %vm1421, %v1028, -inf
        %1570 = vmax.xlane.f32.xlu0 %v1569
        %v1571 = vpop.xlane.xlu0 %1570
        %v1572 = vsel %vm1421, %v1033, -inf
        %1573 = vmax.xlane.f32.xlu0 %v1572
        %v1574 = vpop.xlane.xlu0 %1573
        %v1575 = vsel %vm1421, %v1038, -inf
        %1576 = vmax.xlane.f32.xlu0 %v1575
        %v1577 = vpop.xlane.xlu0 %1576
        %v1578 = vsel %vm1421, %v1043, -inf
        %1579 = vmax.xlane.f32.xlu0 %v1578
        %v1580 = vpop.xlane.xlu0 %1579
        %v1581 = vsel %vm1421, %v1048, -inf
        %1582 = vmax.xlane.f32.xlu0 %v1581
        %v1583 = vpop.xlane.xlu0 %1582
        %v1584 = vsel %vm1421, %v1053, -inf
        %1585 = vmax.xlane.f32.xlu0 %v1584
        %v1586 = vpop.xlane.xlu0 %1585
        %v1587 = vsel %vm1421, %v1058, -inf
        %1588 = vmax.xlane.f32.xlu0 %v1587
        %v1589 = vpop.xlane.xlu0 %1588
        %v1590 = vsel %vm1421, %v1063, -inf
        %1591 = vmax.xlane.f32.xlu0 %v1590
        %v1592 = vpop.xlane.xlu0 %1591
        %v1593 = vsel %vm1421, %v1068, -inf
        %1594 = vmax.xlane.f32.xlu0 %v1593
        %v1595 = vpop.xlane.xlu0 %1594
        %v1596 = vsel %vm1421, %v1073, -inf
        %1597 = vmax.xlane.f32.xlu0 %v1596
        %v1598 = vpop.xlane.xlu0 %1597
        %v1599 = vsel %vm1421, %v1078, -inf
        %1600 = vmax.xlane.f32.xlu0 %v1599
        %v1601 = vpop.xlane.xlu0 %1600
        %v1602 = vsel %vm1421, %v1083, -inf
        %1603 = vmax.xlane.f32.xlu0 %v1602
        %v1604 = vpop.xlane.xlu0 %1603
        %v1605 = vsel %vm1421, %v1088, -inf
        %1606 = vmax.xlane.f32.xlu0 %v1605
        %v1607 = vpop.xlane.xlu0 %1606
        %v1608 = vsel %vm1421, %v1093, -inf
        %1609 = vmax.xlane.f32.xlu0 %v1608
        %v1610 = vpop.xlane.xlu0 %1609
        %v1611 = vsel %vm1421, %v1098, -inf
        %1612 = vmax.xlane.f32.xlu0 %v1611
        %v1613 = vpop.xlane.xlu0 %1612
        %v1614 = vsel %vm1421, %v1103, -inf
        %1615 = vmax.xlane.f32.xlu0 %v1614
        %v1616 = vpop.xlane.xlu0 %1615
        %v1617 = vsel %vm1421, %v1108, -inf
        %1618 = vmax.xlane.f32.xlu0 %v1617
        %v1619 = vpop.xlane.xlu0 %1618
        %v1620 = vsel %vm1421, %v1113, -inf
        %1621 = vmax.xlane.f32.xlu0 %v1620
        %v1622 = vpop.xlane.xlu0 %1621
        %v1623 = vsel %vm1421, %v1118, -inf
        %1624 = vmax.xlane.f32.xlu0 %v1623
        %v1625 = vpop.xlane.xlu0 %1624
        %v1626 = vsel %vm1421, %v1123, -inf
        %1627 = vmax.xlane.f32.xlu0 %v1626
        %v1628 = vpop.xlane.xlu0 %1627
        %v1629 = vsel %vm1421, %v1128, -inf
        %1630 = vmax.xlane.f32.xlu0 %v1629
        %v1631 = vpop.xlane.xlu0 %1630
        %v1632 = vsel %vm1421, %v1133, -inf
        %1633 = vmax.xlane.f32.xlu0 %v1632
        %v1634 = vpop.xlane.xlu0 %1633
        %v1635 = vsel %vm1421, %v1138, -inf
        %1636 = vmax.xlane.f32.xlu0 %v1635
        %v1637 = vpop.xlane.xlu0 %1636
        %v1638 = vsel %vm1421, %v1143, -inf
        %1639 = vmax.xlane.f32.xlu0 %v1638
        %v1640 = vpop.xlane.xlu0 %1639
        %v1641 = vsel %vm1421, %v1148, -inf
        %1642 = vmax.xlane.f32.xlu0 %v1641
        %v1643 = vpop.xlane.xlu0 %1642
        %v1644 = vsel %vm1421, %v1153, -inf
        %1645 = vmax.xlane.f32.xlu0 %v1644
        %v1646 = vpop.xlane.xlu0 %1645
        %v1647 = vsel %vm1421, %v1158, -inf
        %1648 = vmax.xlane.f32.xlu0 %v1647
        %v1649 = vpop.xlane.xlu0 %1648
        %v1650 = vsel %vm1421, %v1163, -inf
        %1651 = vmax.xlane.f32.xlu0 %v1650
        %v1652 = vpop.xlane.xlu0 %1651
        %v1653 = vsel %vm1421, %v1168, -inf
        %1654 = vmax.xlane.f32.xlu0 %v1653
        %v1655 = vpop.xlane.xlu0 %1654
        %v1656 = vsel %vm1421, %v1173, -inf
        %1657 = vmax.xlane.f32.xlu0 %v1656
        %v1658 = vpop.xlane.xlu0 %1657
        %v1659 = vsel %vm1421, %v1178, -inf
        %1660 = vmax.xlane.f32.xlu0 %v1659
        %v1661 = vpop.xlane.xlu0 %1660
        %v1662 = vsel %vm1421, %v1183, -inf
        %1663 = vmax.xlane.f32.xlu0 %v1662
        %v1664 = vpop.xlane.xlu0 %1663
        %v1665 = vsel %vm1421, %v1188, -inf
        %1666 = vmax.xlane.f32.xlu0 %v1665
        %v1667 = vpop.xlane.xlu0 %1666
        %v1668 = vsel %vm1421, %v1193, -inf
        %1669 = vmax.xlane.f32.xlu0 %v1668
        %v1670 = vpop.xlane.xlu0 %1669
        %v1671 = vsel %vm1421, %v1198, -inf
        %1672 = vmax.xlane.f32.xlu0 %v1671
        %v1673 = vpop.xlane.xlu0 %1672
        %v1674 = vsel %vm1421, %v1203, -inf
        %1675 = vmax.xlane.f32.xlu0 %v1674
        %v1676 = vpop.xlane.xlu0 %1675
        %v1677 = vsel %vm1421, %v1208, -inf
        %1678 = vmax.xlane.f32.xlu0 %v1677
        %v1679 = vpop.xlane.xlu0 %1678
        %v1680 = vsel %vm1421, %v1213, -inf
        %1681 = vmax.xlane.f32.xlu0 %v1680
        %v1682 = vpop.xlane.xlu0 %1681
        %v1683 = vsel %vm1421, %v1218, -inf
        %1684 = vmax.xlane.f32.xlu0 %v1683
        %v1685 = vpop.xlane.xlu0 %1684
        %v1686 = vsel %vm1421, %v1223, -inf
        %1687 = vmax.xlane.f32.xlu0 %v1686
        %v1688 = vpop.xlane.xlu0 %1687
        %v1689 = vsel %vm1421, %v1228, -inf
        %1690 = vmax.xlane.f32.xlu0 %v1689
        %v1691 = vpop.xlane.xlu0 %1690
        %v1692 = vsel %vm1421, %v1233, -inf
        %1693 = vmax.xlane.f32.xlu0 %v1692
        %v1694 = vpop.xlane.xlu0 %1693
        %v1695 = vsel %vm1421, %v1238, -inf
        %1696 = vmax.xlane.f32.xlu0 %v1695
        %v1697 = vpop.xlane.xlu0 %1696
        %v1698 = vsel %vm1421, %v1243, -inf
        %1699 = vmax.xlane.f32.xlu0 %v1698
        %v1700 = vpop.xlane.xlu0 %1699
        %v1701 = vsel %vm1421, %v1248, -inf
        %1702 = vmax.xlane.f32.xlu0 %v1701
        %v1703 = vpop.xlane.xlu0 %1702
        %v1704 = vsel %vm1421, %v1253, -inf
        %1705 = vmax.xlane.f32.xlu0 %v1704
        %v1706 = vpop.xlane.xlu0 %1705
        %v1707 = vsel %vm1421, %v1258, -inf
        %1708 = vmax.xlane.f32.xlu0 %v1707
        %v1709 = vpop.xlane.xlu0 %1708
        %v1710 = vsel %vm1421, %v1263, -inf
        %1711 = vmax.xlane.f32.xlu0 %v1710
        %v1712 = vpop.xlane.xlu0 %1711
        %v1713 = vsel %vm1421, %v1268, -inf
        %1714 = vmax.xlane.f32.xlu0 %v1713
        %v1715 = vpop.xlane.xlu0 %1714
        %v1716 = vsel %vm1421, %v1273, -inf
        %1717 = vmax.xlane.f32.xlu0 %v1716
        %v1718 = vpop.xlane.xlu0 %1717
        %v1719 = vsel %vm1421, %v1278, -inf
        %1720 = vmax.xlane.f32.xlu0 %v1719
        %v1721 = vpop.xlane.xlu0 %1720
        %v1722 = vsel %vm1421, %v1283, -inf
        %1723 = vmax.xlane.f32.xlu0 %v1722
        %v1724 = vpop.xlane.xlu0 %1723
        %v1725 = vsel %vm1421, %v1288, -inf
        %1726 = vmax.xlane.f32.xlu0 %v1725
        %v1727 = vpop.xlane.xlu0 %1726
        %v1728 = vsel %vm1421, %v1293, -inf
        %1729 = vmax.xlane.f32.xlu0 %v1728
        %v1730 = vpop.xlane.xlu0 %1729
        %v1731 = vsel %vm1421, %v1298, -inf
        %1732 = vmax.xlane.f32.xlu0 %v1731
        %v1733 = vpop.xlane.xlu0 %1732
        %v1734 = vsel %vm1421, %v1303, -inf
        %1735 = vmax.xlane.f32.xlu0 %v1734
        %v1736 = vpop.xlane.xlu0 %1735
        %v1737 = vsel %vm1421, %v1308, -inf
        %1738 = vmax.xlane.f32.xlu0 %v1737
        %v1739 = vpop.xlane.xlu0 %1738
        %v1740 = vsel %vm1421, %v1313, -inf
        %1741 = vmax.xlane.f32.xlu0 %v1740
        %v1742 = vpop.xlane.xlu0 %1741
        %v1743 = vsel %vm1421, %v1318, -inf
        %1744 = vmax.xlane.f32.xlu0 %v1743
        %v1745 = vpop.xlane.xlu0 %1744
        %v1746 = vsel %vm1421, %v1323, -inf
        %1747 = vmax.xlane.f32.xlu0 %v1746
        %v1748 = vpop.xlane.xlu0 %1747
        %v1749 = vsel %vm1421, %v1328, -inf
        %1750 = vmax.xlane.f32.xlu0 %v1749
        %v1751 = vpop.xlane.xlu0 %1750
        %v1752 = vsel %vm1421, %v1333, -inf
        %1753 = vmax.xlane.f32.xlu0 %v1752
        %v1754 = vpop.xlane.xlu0 %1753
        %v1755 = vsel %vm1421, %v1338, -inf
        %1756 = vmax.xlane.f32.xlu0 %v1755
        %v1757 = vpop.xlane.xlu0 %1756
        %v1758 = vsel %vm1421, %v1343, -inf
        %1759 = vmax.xlane.f32.xlu0 %v1758
        %v1760 = vpop.xlane.xlu0 %1759
        %v1761 = vsel %vm1421, %v1348, -inf
        %1762 = vmax.xlane.f32.xlu0 %v1761
        %v1763 = vpop.xlane.xlu0 %1762
        %v1764 = vsel %vm1421, %v1353, -inf
        %1765 = vmax.xlane.f32.xlu0 %v1764
        %v1766 = vpop.xlane.xlu0 %1765
        %v1767 = vsel %vm1421, %v1358, -inf
        %1768 = vmax.xlane.f32.xlu0 %v1767
        %v1769 = vpop.xlane.xlu0 %1768
        %v1770 = vsel %vm1421, %v1363, -inf
        %1771 = vmax.xlane.f32.xlu0 %v1770
        %v1772 = vpop.xlane.xlu0 %1771
        %v1773 = vsel %vm1421, %v1368, -inf
        %1774 = vmax.xlane.f32.xlu0 %v1773
        %v1775 = vpop.xlane.xlu0 %1774
        %v1776 = vsel %vm1421, %v1373, -inf
        %1777 = vmax.xlane.f32.xlu0 %v1776
        %v1778 = vpop.xlane.xlu0 %1777
        %v1779 = vsel %vm1421, %v1378, -inf
        %1780 = vmax.xlane.f32.xlu0 %v1779
        %v1781 = vpop.xlane.xlu0 %1780
        %v1782 = vsel %vm1421, %v1383, -inf
        %1783 = vmax.xlane.f32.xlu0 %v1782
        %v1784 = vpop.xlane.xlu0 %1783
        %v1785 = vsel %vm1421, %v1388, -inf
        %1786 = vmax.xlane.f32.xlu0 %v1785
        %v1787 = vpop.xlane.xlu0 %1786
        %v1788 = vsel %vm1421, %v1393, -inf
        %1789 = vmax.xlane.f32.xlu0 %v1788
        %v1790 = vpop.xlane.xlu0 %1789
        %v1791 = vsel %vm1421, %v1398, -inf
        %1792 = vmax.xlane.f32.xlu0 %v1791
        %v1793 = vpop.xlane.xlu0 %1792
        %v1794 = vsel %vm1421, %v1403, -inf
        %1795 = vmax.xlane.f32.xlu0 %v1794
        %v1796 = vpop.xlane.xlu0 %1795
        %v1797 = vsel %vm1421, %v1408, -inf
        %1798 = vmax.xlane.f32.xlu0 %v1797
        %v1799 = vpop.xlane.xlu0 %1798
        %v1800 = vsel %vm1421, %v1413, -inf
        %1801 = vmax.xlane.f32.xlu0 %v1800
        %v1802 = vpop.xlane.xlu0 %1801
        %v1803 = vsel %vm1421, %v1418, -inf
        %1804 = vmax.xlane.f32.xlu0 %v1803
        %v1805 = vpop.xlane.xlu0 %1804
        %v1806 = vsub.f32 %v783, %v1424
        %v1807 = vsub.f32 %v788, %v1427
        %v1808 = vsub.f32 %v793, %v1430
        %v1809 = vsub.f32 %v798, %v1433
        %v1810 = vsub.f32 %v803, %v1436
        %v1811 = vsub.f32 %v808, %v1439
        %v1812 = vsub.f32 %v813, %v1442
        %v1813 = vsub.f32 %v818, %v1445
        %v1814 = vsub.f32 %v823, %v1448
        %v1815 = vsub.f32 %v828, %v1451
        %v1816 = vsub.f32 %v833, %v1454
        %v1817 = vsub.f32 %v838, %v1457
        %v1818 = vsub.f32 %v843, %v1460
        %v1819 = vsub.f32 %v848, %v1463
        %v1820 = vsub.f32 %v853, %v1466
        %v1821 = vsub.f32 %v858, %v1469
        %v1822 = vsub.f32 %v863, %v1472
        %v1823 = vsub.f32 %v868, %v1475
        %v1824 = vsub.f32 %v873, %v1478
        %v1825 = vsub.f32 %v878, %v1481
        %v1826 = vsub.f32 %v883, %v1484
        %v1827 = vsub.f32 %v888, %v1487
        %v1828 = vsub.f32 %v893, %v1490
        %v1829 = vsub.f32 %v898, %v1493
        %v1830 = vsub.f32 %v903, %v1496
        %v1831 = vsub.f32 %v908, %v1499
        %v1832 = vsub.f32 %v913, %v1502
        %v1833 = vsub.f32 %v918, %v1505
        %v1834 = vsub.f32 %v923, %v1508
        %v1835 = vsub.f32 %v928, %v1511
        %v1836 = vsub.f32 %v933, %v1514
        %v1837 = vsub.f32 %v938, %v1517
        %v1838 = vsub.f32 %v943, %v1520
        %v1839 = vsub.f32 %v948, %v1523
        %v1840 = vsub.f32 %v953, %v1526
        %v1841 = vsub.f32 %v958, %v1529
        %v1842 = vsub.f32 %v963, %v1532
        %v1843 = vsub.f32 %v968, %v1535
        %v1844 = vsub.f32 %v973, %v1538
        %v1845 = vsub.f32 %v978, %v1541
        %v1846 = vsub.f32 %v983, %v1544
        %v1847 = vsub.f32 %v988, %v1547
        %v1848 = vsub.f32 %v993, %v1550
        %v1849 = vsub.f32 %v998, %v1553
        %v1850 = vsub.f32 %v1003, %v1556
        %v1851 = vsub.f32 %v1008, %v1559
        %v1852 = vsub.f32 %v1013, %v1562
        %v1853 = vsub.f32 %v1018, %v1565
        %v1854 = vsub.f32 %v1023, %v1568
        %v1855 = vsub.f32 %v1028, %v1571
        %v1856 = vsub.f32 %v1033, %v1574
        %v1857 = vsub.f32 %v1038, %v1577
        %v1858 = vsub.f32 %v1043, %v1580
        %v1859 = vsub.f32 %v1048, %v1583
        %v1860 = vsub.f32 %v1053, %v1586
        %v1861 = vsub.f32 %v1058, %v1589
        %v1862 = vsub.f32 %v1063, %v1592
        %v1863 = vsub.f32 %v1068, %v1595
        %v1864 = vsub.f32 %v1073, %v1598
        %v1865 = vsub.f32 %v1078, %v1601
        %v1866 = vsub.f32 %v1083, %v1604
        %v1867 = vsub.f32 %v1088, %v1607
        %v1868 = vsub.f32 %v1093, %v1610
        %v1869 = vsub.f32 %v1098, %v1613
        %v1870 = vsub.f32 %v1103, %v1616
        %v1871 = vsub.f32 %v1108, %v1619
        %v1872 = vsub.f32 %v1113, %v1622
        %v1873 = vsub.f32 %v1118, %v1625
        %v1874 = vsub.f32 %v1123, %v1628
        %v1875 = vsub.f32 %v1128, %v1631
        %v1876 = vsub.f32 %v1133, %v1634
        %v1877 = vsub.f32 %v1138, %v1637
        %v1878 = vsub.f32 %v1143, %v1640
        %v1879 = vsub.f32 %v1148, %v1643
        %v1880 = vsub.f32 %v1153, %v1646
        %v1881 = vsub.f32 %v1158, %v1649
        %v1882 = vsub.f32 %v1163, %v1652
        %v1883 = vsub.f32 %v1168, %v1655
        %v1884 = vsub.f32 %v1173, %v1658
        %v1885 = vsub.f32 %v1178, %v1661
        %v1886 = vsub.f32 %v1183, %v1664
        %v1887 = vsub.f32 %v1188, %v1667
        %v1888 = vsub.f32 %v1193, %v1670
        %v1889 = vsub.f32 %v1198, %v1673
        %v1890 = vsub.f32 %v1203, %v1676
        %v1891 = vsub.f32 %v1208, %v1679
        %v1892 = vsub.f32 %v1213, %v1682
        %v1893 = vsub.f32 %v1218, %v1685
        %v1894 = vsub.f32 %v1223, %v1688
        %v1895 = vsub.f32 %v1228, %v1691
        %v1896 = vsub.f32 %v1233, %v1694
        %v1897 = vsub.f32 %v1238, %v1697
        %v1898 = vsub.f32 %v1243, %v1700
        %v1899 = vsub.f32 %v1248, %v1703
        %v1900 = vsub.f32 %v1253, %v1706
        %v1901 = vsub.f32 %v1258, %v1709
        %v1902 = vsub.f32 %v1263, %v1712
        %v1903 = vsub.f32 %v1268, %v1715
        %v1904 = vsub.f32 %v1273, %v1718
        %v1905 = vsub.f32 %v1278, %v1721
        %v1906 = vsub.f32 %v1283, %v1724
        %v1907 = vsub.f32 %v1288, %v1727
        %v1908 = vsub.f32 %v1293, %v1730
        %v1909 = vsub.f32 %v1298, %v1733
        %v1910 = vsub.f32 %v1303, %v1736
        %v1911 = vsub.f32 %v1308, %v1739
        %v1912 = vsub.f32 %v1313, %v1742
        %v1913 = vsub.f32 %v1318, %v1745
        %v1914 = vsub.f32 %v1323, %v1748
        %v1915 = vsub.f32 %v1328, %v1751
        %v1916 = vsub.f32 %v1333, %v1754
        %v1917 = vsub.f32 %v1338, %v1757
        %v1918 = vsub.f32 %v1343, %v1760
        %v1919 = vsub.f32 %v1348, %v1763
        %v1920 = vsub.f32 %v1353, %v1766
        %v1921 = vsub.f32 %v1358, %v1769
        %v1922 = vsub.f32 %v1363, %v1772
        %v1923 = vsub.f32 %v1368, %v1775
        %v1924 = vsub.f32 %v1373, %v1778
        %v1925 = vsub.f32 %v1378, %v1781
        %v1926 = vsub.f32 %v1383, %v1784
        %v1927 = vsub.f32 %v1388, %v1787
        %v1928 = vsub.f32 %v1393, %v1790
        %v1929 = vsub.f32 %v1398, %v1793
        %v1930 = vsub.f32 %v1403, %v1796
        %v1931 = vsub.f32 %v1408, %v1799
        %v1932 = vsub.f32 %v1413, %v1802
        %v1933 = vsub.f32 %v1418, %v1805
        %v1934 = vmul.f32 %v1806, 1.442695
        %v1935 = vpow.pop %v1934
        %v1936 = vmul.f32 %v1807, 1.442695
        %v1937 = vpow.pop %v1936
        %v1938 = vmul.f32 %v1808, 1.442695
        %v1939 = vpow.pop %v1938
        %v1940 = vmul.f32 %v1809, 1.442695
        %v1941 = vpow.pop %v1940
        %v1942 = vmul.f32 %v1810, 1.442695
        %v1943 = vpow.pop %v1942
        %v1944 = vmul.f32 %v1811, 1.442695
        %v1945 = vpow.pop %v1944
        %v1946 = vmul.f32 %v1812, 1.442695
        %v1947 = vpow.pop %v1946
        %v1948 = vmul.f32 %v1813, 1.442695
        %v1949 = vpow.pop %v1948
        %v1950 = vmul.f32 %v1814, 1.442695
        %v1951 = vpow.pop %v1950
        %v1952 = vmul.f32 %v1815, 1.442695
        %v1953 = vpow.pop %v1952
        %v1954 = vmul.f32 %v1816, 1.442695
        %v1955 = vpow.pop %v1954
        %v1956 = vmul.f32 %v1817, 1.442695
        %v1957 = vpow.pop %v1956
        %v1958 = vmul.f32 %v1818, 1.442695
        %v1959 = vpow.pop %v1958
        %v1960 = vmul.f32 %v1819, 1.442695
        %v1961 = vpow.pop %v1960
        %v1962 = vmul.f32 %v1820, 1.442695
        %v1963 = vpow.pop %v1962
        %v1964 = vmul.f32 %v1821, 1.442695
        %v1965 = vpow.pop %v1964
        %v1966 = vmul.f32 %v1822, 1.442695
        %v1967 = vpow.pop %v1966
        %v1968 = vmul.f32 %v1823, 1.442695
        %v1969 = vpow.pop %v1968
        %v1970 = vmul.f32 %v1824, 1.442695
        %v1971 = vpow.pop %v1970
        %v1972 = vmul.f32 %v1825, 1.442695
        %v1973 = vpow.pop %v1972
        %v1974 = vmul.f32 %v1826, 1.442695
        %v1975 = vpow.pop %v1974
        %v1976 = vmul.f32 %v1827, 1.442695
        %v1977 = vpow.pop %v1976
        %v1978 = vmul.f32 %v1828, 1.442695
        %v1979 = vpow.pop %v1978
        %v1980 = vmul.f32 %v1829, 1.442695
        %v1981 = vpow.pop %v1980
        %v1982 = vmul.f32 %v1830, 1.442695
        %v1983 = vpow.pop %v1982
        %v1984 = vmul.f32 %v1831, 1.442695
        %v1985 = vpow.pop %v1984
        %v1986 = vmul.f32 %v1832, 1.442695
        %v1987 = vpow.pop %v1986
        %v1988 = vmul.f32 %v1833, 1.442695
        %v1989 = vpow.pop %v1988
        %v1990 = vmul.f32 %v1834, 1.442695
        %v1991 = vpow.pop %v1990
        %v1992 = vmul.f32 %v1835, 1.442695
        %v1993 = vpow.pop %v1992
        %v1994 = vmul.f32 %v1836, 1.442695
        %v1995 = vpow.pop %v1994
        %v1996 = vmul.f32 %v1837, 1.442695
        %v1997 = vpow.pop %v1996
        %v1998 = vmul.f32 %v1838, 1.442695
        %v1999 = vpow.pop %v1998
        %v2000 = vmul.f32 %v1839, 1.442695
        %v2001 = vpow.pop %v2000
        %v2002 = vmul.f32 %v1840, 1.442695
        %v2003 = vpow.pop %v2002
        %v2004 = vmul.f32 %v1841, 1.442695
        %v2005 = vpow.pop %v2004
        %v2006 = vmul.f32 %v1842, 1.442695
        %v2007 = vpow.pop %v2006
        %v2008 = vmul.f32 %v1843, 1.442695
        %v2009 = vpow.pop %v2008
        %v2010 = vmul.f32 %v1844, 1.442695
        %v2011 = vpow.pop %v2010
        %v2012 = vmul.f32 %v1845, 1.442695
        %v2013 = vpow.pop %v2012
        %v2014 = vmul.f32 %v1846, 1.442695
        %v2015 = vpow.pop %v2014
        %v2016 = vmul.f32 %v1847, 1.442695
        %v2017 = vpow.pop %v2016
        %v2018 = vmul.f32 %v1848, 1.442695
        %v2019 = vpow.pop %v2018
        %v2020 = vmul.f32 %v1849, 1.442695
        %v2021 = vpow.pop %v2020
        %v2022 = vmul.f32 %v1850, 1.442695
        %v2023 = vpow.pop %v2022
        %v2024 = vmul.f32 %v1851, 1.442695
        %v2025 = vpow.pop %v2024
        %v2026 = vmul.f32 %v1852, 1.442695
        %v2027 = vpow.pop %v2026
        %v2028 = vmul.f32 %v1853, 1.442695
        %v2029 = vpow.pop %v2028
        %v2030 = vmul.f32 %v1854, 1.442695
        %v2031 = vpow.pop %v2030
        %v2032 = vmul.f32 %v1855, 1.442695
        %v2033 = vpow.pop %v2032
        %v2034 = vmul.f32 %v1856, 1.442695
        %v2035 = vpow.pop %v2034
        %v2036 = vmul.f32 %v1857, 1.442695
        %v2037 = vpow.pop %v2036
        %v2038 = vmul.f32 %v1858, 1.442695
        %v2039 = vpow.pop %v2038
        %v2040 = vmul.f32 %v1859, 1.442695
        %v2041 = vpow.pop %v2040
        %v2042 = vmul.f32 %v1860, 1.442695
        %v2043 = vpow.pop %v2042
        %v2044 = vmul.f32 %v1861, 1.442695
        %v2045 = vpow.pop %v2044
        %v2046 = vmul.f32 %v1862, 1.442695
        %v2047 = vpow.pop %v2046
        %v2048 = vmul.f32 %v1863, 1.442695
        %v2049 = vpow.pop %v2048
        %v2050 = vmul.f32 %v1864, 1.442695
        %v2051 = vpow.pop %v2050
        %v2052 = vmul.f32 %v1865, 1.442695
        %v2053 = vpow.pop %v2052
        %v2054 = vmul.f32 %v1866, 1.442695
        %v2055 = vpow.pop %v2054
        %v2056 = vmul.f32 %v1867, 1.442695
        %v2057 = vpow.pop %v2056
        %v2058 = vmul.f32 %v1868, 1.442695
        %v2059 = vpow.pop %v2058
        %v2060 = vmul.f32 %v1869, 1.442695
        %v2061 = vpow.pop %v2060
        %v2062 = vmul.f32 %v1870, 1.442695
        %v2063 = vpow.pop %v2062
        %v2064 = vmul.f32 %v1871, 1.442695
        %v2065 = vpow.pop %v2064
        %v2066 = vmul.f32 %v1872, 1.442695
        %v2067 = vpow.pop %v2066
        %v2068 = vmul.f32 %v1873, 1.442695
        %v2069 = vpow.pop %v2068
        %v2070 = vmul.f32 %v1874, 1.442695
        %v2071 = vpow.pop %v2070
        %v2072 = vmul.f32 %v1875, 1.442695
        %v2073 = vpow.pop %v2072
        %v2074 = vmul.f32 %v1876, 1.442695
        %v2075 = vpow.pop %v2074
        %v2076 = vmul.f32 %v1877, 1.442695
        %v2077 = vpow.pop %v2076
        %v2078 = vmul.f32 %v1878, 1.442695
        %v2079 = vpow.pop %v2078
        %v2080 = vmul.f32 %v1879, 1.442695
        %v2081 = vpow.pop %v2080
        %v2082 = vmul.f32 %v1880, 1.442695
        %v2083 = vpow.pop %v2082
        %v2084 = vmul.f32 %v1881, 1.442695
        %v2085 = vpow.pop %v2084
        %v2086 = vmul.f32 %v1882, 1.442695
        %v2087 = vpow.pop %v2086
        %v2088 = vmul.f32 %v1883, 1.442695
        %v2089 = vpow.pop %v2088
        %v2090 = vmul.f32 %v1884, 1.442695
        %v2091 = vpow.pop %v2090
        %v2092 = vmul.f32 %v1885, 1.442695
        %v2093 = vpow.pop %v2092
        %v2094 = vmul.f32 %v1886, 1.442695
        %v2095 = vpow.pop %v2094
        %v2096 = vmul.f32 %v1887, 1.442695
        %v2097 = vpow.pop %v2096
        %v2098 = vmul.f32 %v1888, 1.442695
        %v2099 = vpow.pop %v2098
        %v2100 = vmul.f32 %v1889, 1.442695
        %v2101 = vpow.pop %v2100
        %v2102 = vmul.f32 %v1890, 1.442695
        %v2103 = vpow.pop %v2102
        %v2104 = vmul.f32 %v1891, 1.442695
        %v2105 = vpow.pop %v2104
        %v2106 = vmul.f32 %v1892, 1.442695
        %v2107 = vpow.pop %v2106
        %v2108 = vmul.f32 %v1893, 1.442695
        %v2109 = vpow.pop %v2108
        %v2110 = vmul.f32 %v1894, 1.442695
        %v2111 = vpow.pop %v2110
        %v2112 = vmul.f32 %v1895, 1.442695
        %v2113 = vpow.pop %v2112
        %v2114 = vmul.f32 %v1896, 1.442695
        %v2115 = vpow.pop %v2114
        %v2116 = vmul.f32 %v1897, 1.442695
        %v2117 = vpow.pop %v2116
        %v2118 = vmul.f32 %v1898, 1.442695
        %v2119 = vpow.pop %v2118
        %v2120 = vmul.f32 %v1899, 1.442695
        %v2121 = vpow.pop %v2120
        %v2122 = vmul.f32 %v1900, 1.442695
        %v2123 = vpow.pop %v2122
        %v2124 = vmul.f32 %v1901, 1.442695
        %v2125 = vpow.pop %v2124
        %v2126 = vmul.f32 %v1902, 1.442695
        %v2127 = vpow.pop %v2126
        %v2128 = vmul.f32 %v1903, 1.442695
        %v2129 = vpow.pop %v2128
        %v2130 = vmul.f32 %v1904, 1.442695
        %v2131 = vpow.pop %v2130
        %v2132 = vmul.f32 %v1905, 1.442695
        %v2133 = vpow.pop %v2132
        %v2134 = vmul.f32 %v1906, 1.442695
        %v2135 = vpow.pop %v2134
        %v2136 = vmul.f32 %v1907, 1.442695
        %v2137 = vpow.pop %v2136
        %v2138 = vmul.f32 %v1908, 1.442695
        %v2139 = vpow.pop %v2138
        %v2140 = vmul.f32 %v1909, 1.442695
        %v2141 = vpow.pop %v2140
        %v2142 = vmul.f32 %v1910, 1.442695
        %v2143 = vpow.pop %v2142
        %v2144 = vmul.f32 %v1911, 1.442695
        %v2145 = vpow.pop %v2144
        %v2146 = vmul.f32 %v1912, 1.442695
        %v2147 = vpow.pop %v2146
        %v2148 = vmul.f32 %v1913, 1.442695
        %v2149 = vpow.pop %v2148
        %v2150 = vmul.f32 %v1914, 1.442695
        %v2151 = vpow.pop %v2150
        %v2152 = vmul.f32 %v1915, 1.442695
        %v2153 = vpow.pop %v2152
        %v2154 = vmul.f32 %v1916, 1.442695
        %v2155 = vpow.pop %v2154
        %v2156 = vmul.f32 %v1917, 1.442695
        %v2157 = vpow.pop %v2156
        %v2158 = vmul.f32 %v1918, 1.442695
        %v2159 = vpow.pop %v2158
        %v2160 = vmul.f32 %v1919, 1.442695
        %v2161 = vpow.pop %v2160
        %v2162 = vmul.f32 %v1920, 1.442695
        %v2163 = vpow.pop %v2162
        %v2164 = vmul.f32 %v1921, 1.442695
        %v2165 = vpow.pop %v2164
        %v2166 = vmul.f32 %v1922, 1.442695
        %v2167 = vpow.pop %v2166
        %v2168 = vmul.f32 %v1923, 1.442695
        %v2169 = vpow.pop %v2168
        %v2170 = vmul.f32 %v1924, 1.442695
        %v2171 = vpow.pop %v2170
        %v2172 = vmul.f32 %v1925, 1.442695
        %v2173 = vpow.pop %v2172
        %v2174 = vmul.f32 %v1926, 1.442695
        %v2175 = vpow.pop %v2174
        %v2176 = vmul.f32 %v1927, 1.442695
        %v2177 = vpow.pop %v2176
        %v2178 = vmul.f32 %v1928, 1.442695
        %v2179 = vpow.pop %v2178
        %v2180 = vmul.f32 %v1929, 1.442695
        %v2181 = vpow.pop %v2180
        %v2182 = vmul.f32 %v1930, 1.442695
        %v2183 = vpow.pop %v2182
        %v2184 = vmul.f32 %v1931, 1.442695
        %v2185 = vpow.pop %v2184
        %v2186 = vmul.f32 %v1932, 1.442695
        %v2187 = vpow.pop %v2186
        %v2188 = vmul.f32 %v1933, 1.442695
        %v2189 = vpow.pop %v2188
        %v2190 = vsel %vm1421, %v1935, 0.0
        %2191 = vadd.xlane.f32.xlu0 %v2190
        %v2192 = vpop.xlane.xlu0 %2191
        %v2193 = vsel %vm1421, %v1937, 0.0
        %2194 = vadd.xlane.f32.xlu0 %v2193
        %v2195 = vpop.xlane.xlu0 %2194
        %v2196 = vsel %vm1421, %v1939, 0.0
        %2197 = vadd.xlane.f32.xlu0 %v2196
        %v2198 = vpop.xlane.xlu0 %2197
        %v2199 = vsel %vm1421, %v1941, 0.0
        %2200 = vadd.xlane.f32.xlu0 %v2199
        %v2201 = vpop.xlane.xlu0 %2200
        %v2202 = vsel %vm1421, %v1943, 0.0
        %2203 = vadd.xlane.f32.xlu0 %v2202
        %v2204 = vpop.xlane.xlu0 %2203
        %v2205 = vsel %vm1421, %v1945, 0.0
        %2206 = vadd.xlane.f32.xlu0 %v2205
        %v2207 = vpop.xlane.xlu0 %2206
        %v2208 = vsel %vm1421, %v1947, 0.0
        %2209 = vadd.xlane.f32.xlu0 %v2208
        %v2210 = vpop.xlane.xlu0 %2209
        %v2211 = vsel %vm1421, %v1949, 0.0
        %2212 = vadd.xlane.f32.xlu0 %v2211
        %v2213 = vpop.xlane.xlu0 %2212
        %v2214 = vsel %vm1421, %v1951, 0.0
        %2215 = vadd.xlane.f32.xlu0 %v2214
        %v2216 = vpop.xlane.xlu0 %2215
        %v2217 = vsel %vm1421, %v1953, 0.0
        %2218 = vadd.xlane.f32.xlu0 %v2217
        %v2219 = vpop.xlane.xlu0 %2218
        %v2220 = vsel %vm1421, %v1955, 0.0
        %2221 = vadd.xlane.f32.xlu0 %v2220
        %v2222 = vpop.xlane.xlu0 %2221
        %v2223 = vsel %vm1421, %v1957, 0.0
        %2224 = vadd.xlane.f32.xlu0 %v2223
        %v2225 = vpop.xlane.xlu0 %2224
        %v2226 = vsel %vm1421, %v1959, 0.0
        %2227 = vadd.xlane.f32.xlu0 %v2226
        %v2228 = vpop.xlane.xlu0 %2227
        %v2229 = vsel %vm1421, %v1961, 0.0
        %2230 = vadd.xlane.f32.xlu0 %v2229
        %v2231 = vpop.xlane.xlu0 %2230
        %v2232 = vsel %vm1421, %v1963, 0.0
        %2233 = vadd.xlane.f32.xlu0 %v2232
        %v2234 = vpop.xlane.xlu0 %2233
        %v2235 = vsel %vm1421, %v1965, 0.0
        %2236 = vadd.xlane.f32.xlu0 %v2235
        %v2237 = vpop.xlane.xlu0 %2236
        %v2238 = vsel %vm1421, %v1967, 0.0
        %2239 = vadd.xlane.f32.xlu0 %v2238
        %v2240 = vpop.xlane.xlu0 %2239
        %v2241 = vsel %vm1421, %v1969, 0.0
        %2242 = vadd.xlane.f32.xlu0 %v2241
        %v2243 = vpop.xlane.xlu0 %2242
        %v2244 = vsel %vm1421, %v1971, 0.0
        %2245 = vadd.xlane.f32.xlu0 %v2244
        %v2246 = vpop.xlane.xlu0 %2245
        %v2247 = vsel %vm1421, %v1973, 0.0
        %2248 = vadd.xlane.f32.xlu0 %v2247
        %v2249 = vpop.xlane.xlu0 %2248
        %v2250 = vsel %vm1421, %v1975, 0.0
        %2251 = vadd.xlane.f32.xlu0 %v2250
        %v2252 = vpop.xlane.xlu0 %2251
        %v2253 = vsel %vm1421, %v1977, 0.0
        %2254 = vadd.xlane.f32.xlu0 %v2253
        %v2255 = vpop.xlane.xlu0 %2254
        %v2256 = vsel %vm1421, %v1979, 0.0
        %2257 = vadd.xlane.f32.xlu0 %v2256
        %v2258 = vpop.xlane.xlu0 %2257
        %v2259 = vsel %vm1421, %v1981, 0.0
        %2260 = vadd.xlane.f32.xlu0 %v2259
        %v2261 = vpop.xlane.xlu0 %2260
        %v2262 = vsel %vm1421, %v1983, 0.0
        %2263 = vadd.xlane.f32.xlu0 %v2262
        %v2264 = vpop.xlane.xlu0 %2263
        %v2265 = vsel %vm1421, %v1985, 0.0
        %2266 = vadd.xlane.f32.xlu0 %v2265
        %v2267 = vpop.xlane.xlu0 %2266
        %v2268 = vsel %vm1421, %v1987, 0.0
        %2269 = vadd.xlane.f32.xlu0 %v2268
        %v2270 = vpop.xlane.xlu0 %2269
        %v2271 = vsel %vm1421, %v1989, 0.0
        %2272 = vadd.xlane.f32.xlu0 %v2271
        %v2273 = vpop.xlane.xlu0 %2272
        %v2274 = vsel %vm1421, %v1991, 0.0
        %2275 = vadd.xlane.f32.xlu0 %v2274
        %v2276 = vpop.xlane.xlu0 %2275
        %v2277 = vsel %vm1421, %v1993, 0.0
        %2278 = vadd.xlane.f32.xlu0 %v2277
        %v2279 = vpop.xlane.xlu0 %2278
        %v2280 = vsel %vm1421, %v1995, 0.0
        %2281 = vadd.xlane.f32.xlu0 %v2280
        %v2282 = vpop.xlane.xlu0 %2281
        %v2283 = vsel %vm1421, %v1997, 0.0
        %2284 = vadd.xlane.f32.xlu0 %v2283
        %v2285 = vpop.xlane.xlu0 %2284
        %v2286 = vsel %vm1421, %v1999, 0.0
        %2287 = vadd.xlane.f32.xlu0 %v2286
        %v2288 = vpop.xlane.xlu0 %2287
        %v2289 = vsel %vm1421, %v2001, 0.0
        %2290 = vadd.xlane.f32.xlu0 %v2289
        %v2291 = vpop.xlane.xlu0 %2290
        %v2292 = vsel %vm1421, %v2003, 0.0
        %2293 = vadd.xlane.f32.xlu0 %v2292
        %v2294 = vpop.xlane.xlu0 %2293
        %v2295 = vsel %vm1421, %v2005, 0.0
        %2296 = vadd.xlane.f32.xlu0 %v2295
        %v2297 = vpop.xlane.xlu0 %2296
        %v2298 = vsel %vm1421, %v2007, 0.0
        %2299 = vadd.xlane.f32.xlu0 %v2298
        %v2300 = vpop.xlane.xlu0 %2299
        %v2301 = vsel %vm1421, %v2009, 0.0
        %2302 = vadd.xlane.f32.xlu0 %v2301
        %v2303 = vpop.xlane.xlu0 %2302
        %v2304 = vsel %vm1421, %v2011, 0.0
        %2305 = vadd.xlane.f32.xlu0 %v2304
        %v2306 = vpop.xlane.xlu0 %2305
        %v2307 = vsel %vm1421, %v2013, 0.0
        %2308 = vadd.xlane.f32.xlu0 %v2307
        %v2309 = vpop.xlane.xlu0 %2308
        %v2310 = vsel %vm1421, %v2015, 0.0
        %2311 = vadd.xlane.f32.xlu0 %v2310
        %v2312 = vpop.xlane.xlu0 %2311
        %v2313 = vsel %vm1421, %v2017, 0.0
        %2314 = vadd.xlane.f32.xlu0 %v2313
        %v2315 = vpop.xlane.xlu0 %2314
        %v2316 = vsel %vm1421, %v2019, 0.0
        %2317 = vadd.xlane.f32.xlu0 %v2316
        %v2318 = vpop.xlane.xlu0 %2317
        %v2319 = vsel %vm1421, %v2021, 0.0
        %2320 = vadd.xlane.f32.xlu0 %v2319
        %v2321 = vpop.xlane.xlu0 %2320
        %v2322 = vsel %vm1421, %v2023, 0.0
        %2323 = vadd.xlane.f32.xlu0 %v2322
        %v2324 = vpop.xlane.xlu0 %2323
        %v2325 = vsel %vm1421, %v2025, 0.0
        %2326 = vadd.xlane.f32.xlu0 %v2325
        %v2327 = vpop.xlane.xlu0 %2326
        %v2328 = vsel %vm1421, %v2027, 0.0
        %2329 = vadd.xlane.f32.xlu0 %v2328
        %v2330 = vpop.xlane.xlu0 %2329
        %v2331 = vsel %vm1421, %v2029, 0.0
        %2332 = vadd.xlane.f32.xlu0 %v2331
        %v2333 = vpop.xlane.xlu0 %2332
        %v2334 = vsel %vm1421, %v2031, 0.0
        %2335 = vadd.xlane.f32.xlu0 %v2334
        %v2336 = vpop.xlane.xlu0 %2335
        %v2337 = vsel %vm1421, %v2033, 0.0
        %2338 = vadd.xlane.f32.xlu0 %v2337
        %v2339 = vpop.xlane.xlu0 %2338
        %v2340 = vsel %vm1421, %v2035, 0.0
        %2341 = vadd.xlane.f32.xlu0 %v2340
        %v2342 = vpop.xlane.xlu0 %2341
        %v2343 = vsel %vm1421, %v2037, 0.0
        %2344 = vadd.xlane.f32.xlu0 %v2343
        %v2345 = vpop.xlane.xlu0 %2344
        %v2346 = vsel %vm1421, %v2039, 0.0
        %2347 = vadd.xlane.f32.xlu0 %v2346
        %v2348 = vpop.xlane.xlu0 %2347
        %v2349 = vsel %vm1421, %v2041, 0.0
        %2350 = vadd.xlane.f32.xlu0 %v2349
        %v2351 = vpop.xlane.xlu0 %2350
        %v2352 = vsel %vm1421, %v2043, 0.0
        %2353 = vadd.xlane.f32.xlu0 %v2352
        %v2354 = vpop.xlane.xlu0 %2353
        %v2355 = vsel %vm1421, %v2045, 0.0
        %2356 = vadd.xlane.f32.xlu0 %v2355
        %v2357 = vpop.xlane.xlu0 %2356
        %v2358 = vsel %vm1421, %v2047, 0.0
        %2359 = vadd.xlane.f32.xlu0 %v2358
        %v2360 = vpop.xlane.xlu0 %2359
        %v2361 = vsel %vm1421, %v2049, 0.0
        %2362 = vadd.xlane.f32.xlu0 %v2361
        %v2363 = vpop.xlane.xlu0 %2362
        %v2364 = vsel %vm1421, %v2051, 0.0
        %2365 = vadd.xlane.f32.xlu0 %v2364
        %v2366 = vpop.xlane.xlu0 %2365
        %v2367 = vsel %vm1421, %v2053, 0.0
        %2368 = vadd.xlane.f32.xlu0 %v2367
        %v2369 = vpop.xlane.xlu0 %2368
        %v2370 = vsel %vm1421, %v2055, 0.0
        %2371 = vadd.xlane.f32.xlu0 %v2370
        %v2372 = vpop.xlane.xlu0 %2371
        %v2373 = vsel %vm1421, %v2057, 0.0
        %2374 = vadd.xlane.f32.xlu0 %v2373
        %v2375 = vpop.xlane.xlu0 %2374
        %v2376 = vsel %vm1421, %v2059, 0.0
        %2377 = vadd.xlane.f32.xlu0 %v2376
        %v2378 = vpop.xlane.xlu0 %2377
        %v2379 = vsel %vm1421, %v2061, 0.0
        %2380 = vadd.xlane.f32.xlu0 %v2379
        %v2381 = vpop.xlane.xlu0 %2380
        %v2382 = vsel %vm1421, %v2063, 0.0
        %2383 = vadd.xlane.f32.xlu0 %v2382
        %v2384 = vpop.xlane.xlu0 %2383
        %v2385 = vsel %vm1421, %v2065, 0.0
        %2386 = vadd.xlane.f32.xlu0 %v2385
        %v2387 = vpop.xlane.xlu0 %2386
        %v2388 = vsel %vm1421, %v2067, 0.0
        %2389 = vadd.xlane.f32.xlu0 %v2388
        %v2390 = vpop.xlane.xlu0 %2389
        %v2391 = vsel %vm1421, %v2069, 0.0
        %2392 = vadd.xlane.f32.xlu0 %v2391
        %v2393 = vpop.xlane.xlu0 %2392
        %v2394 = vsel %vm1421, %v2071, 0.0
        %2395 = vadd.xlane.f32.xlu0 %v2394
        %v2396 = vpop.xlane.xlu0 %2395
        %v2397 = vsel %vm1421, %v2073, 0.0
        %2398 = vadd.xlane.f32.xlu0 %v2397
        %v2399 = vpop.xlane.xlu0 %2398
        %v2400 = vsel %vm1421, %v2075, 0.0
        %2401 = vadd.xlane.f32.xlu0 %v2400
        %v2402 = vpop.xlane.xlu0 %2401
        %v2403 = vsel %vm1421, %v2077, 0.0
        %2404 = vadd.xlane.f32.xlu0 %v2403
        %v2405 = vpop.xlane.xlu0 %2404
        %v2406 = vsel %vm1421, %v2079, 0.0
        %2407 = vadd.xlane.f32.xlu0 %v2406
        %v2408 = vpop.xlane.xlu0 %2407
        %v2409 = vsel %vm1421, %v2081, 0.0
        %2410 = vadd.xlane.f32.xlu0 %v2409
        %v2411 = vpop.xlane.xlu0 %2410
        %v2412 = vsel %vm1421, %v2083, 0.0
        %2413 = vadd.xlane.f32.xlu0 %v2412
        %v2414 = vpop.xlane.xlu0 %2413
        %v2415 = vsel %vm1421, %v2085, 0.0
        %2416 = vadd.xlane.f32.xlu0 %v2415
        %v2417 = vpop.xlane.xlu0 %2416
        %v2418 = vsel %vm1421, %v2087, 0.0
        %2419 = vadd.xlane.f32.xlu0 %v2418
        %v2420 = vpop.xlane.xlu0 %2419
        %v2421 = vsel %vm1421, %v2089, 0.0
        %2422 = vadd.xlane.f32.xlu0 %v2421
        %v2423 = vpop.xlane.xlu0 %2422
        %v2424 = vsel %vm1421, %v2091, 0.0
        %2425 = vadd.xlane.f32.xlu0 %v2424
        %v2426 = vpop.xlane.xlu0 %2425
        %v2427 = vsel %vm1421, %v2093, 0.0
        %2428 = vadd.xlane.f32.xlu0 %v2427
        %v2429 = vpop.xlane.xlu0 %2428
        %v2430 = vsel %vm1421, %v2095, 0.0
        %2431 = vadd.xlane.f32.xlu0 %v2430
        %v2432 = vpop.xlane.xlu0 %2431
        %v2433 = vsel %vm1421, %v2097, 0.0
        %2434 = vadd.xlane.f32.xlu0 %v2433
        %v2435 = vpop.xlane.xlu0 %2434
        %v2436 = vsel %vm1421, %v2099, 0.0
        %2437 = vadd.xlane.f32.xlu0 %v2436
        %v2438 = vpop.xlane.xlu0 %2437
        %v2439 = vsel %vm1421, %v2101, 0.0
        %2440 = vadd.xlane.f32.xlu0 %v2439
        %v2441 = vpop.xlane.xlu0 %2440
        %v2442 = vsel %vm1421, %v2103, 0.0
        %2443 = vadd.xlane.f32.xlu0 %v2442
        %v2444 = vpop.xlane.xlu0 %2443
        %v2445 = vsel %vm1421, %v2105, 0.0
        %2446 = vadd.xlane.f32.xlu0 %v2445
        %v2447 = vpop.xlane.xlu0 %2446
        %v2448 = vsel %vm1421, %v2107, 0.0
        %2449 = vadd.xlane.f32.xlu0 %v2448
        %v2450 = vpop.xlane.xlu0 %2449
        %v2451 = vsel %vm1421, %v2109, 0.0
        %2452 = vadd.xlane.f32.xlu0 %v2451
        %v2453 = vpop.xlane.xlu0 %2452
        %v2454 = vsel %vm1421, %v2111, 0.0
        %2455 = vadd.xlane.f32.xlu0 %v2454
        %v2456 = vpop.xlane.xlu0 %2455
        %v2457 = vsel %vm1421, %v2113, 0.0
        %2458 = vadd.xlane.f32.xlu0 %v2457
        %v2459 = vpop.xlane.xlu0 %2458
        %v2460 = vsel %vm1421, %v2115, 0.0
        %2461 = vadd.xlane.f32.xlu0 %v2460
        %v2462 = vpop.xlane.xlu0 %2461
        %v2463 = vsel %vm1421, %v2117, 0.0
        %2464 = vadd.xlane.f32.xlu0 %v2463
        %v2465 = vpop.xlane.xlu0 %2464
        %v2466 = vsel %vm1421, %v2119, 0.0
        %2467 = vadd.xlane.f32.xlu0 %v2466
        %v2468 = vpop.xlane.xlu0 %2467
        %v2469 = vsel %vm1421, %v2121, 0.0
        %2470 = vadd.xlane.f32.xlu0 %v2469
        %v2471 = vpop.xlane.xlu0 %2470
        %v2472 = vsel %vm1421, %v2123, 0.0
        %2473 = vadd.xlane.f32.xlu0 %v2472
        %v2474 = vpop.xlane.xlu0 %2473
        %v2475 = vsel %vm1421, %v2125, 0.0
        %2476 = vadd.xlane.f32.xlu0 %v2475
        %v2477 = vpop.xlane.xlu0 %2476
        %v2478 = vsel %vm1421, %v2127, 0.0
        %2479 = vadd.xlane.f32.xlu0 %v2478
        %v2480 = vpop.xlane.xlu0 %2479
        %v2481 = vsel %vm1421, %v2129, 0.0
        %2482 = vadd.xlane.f32.xlu0 %v2481
        %v2483 = vpop.xlane.xlu0 %2482
        %v2484 = vsel %vm1421, %v2131, 0.0
        %2485 = vadd.xlane.f32.xlu0 %v2484
        %v2486 = vpop.xlane.xlu0 %2485
        %v2487 = vsel %vm1421, %v2133, 0.0
        %2488 = vadd.xlane.f32.xlu0 %v2487
        %v2489 = vpop.xlane.xlu0 %2488
        %v2490 = vsel %vm1421, %v2135, 0.0
        %2491 = vadd.xlane.f32.xlu0 %v2490
        %v2492 = vpop.xlane.xlu0 %2491
        %v2493 = vsel %vm1421, %v2137, 0.0
        %2494 = vadd.xlane.f32.xlu0 %v2493
        %v2495 = vpop.xlane.xlu0 %2494
        %v2496 = vsel %vm1421, %v2139, 0.0
        %2497 = vadd.xlane.f32.xlu0 %v2496
        %v2498 = vpop.xlane.xlu0 %2497
        %v2499 = vsel %vm1421, %v2141, 0.0
        %2500 = vadd.xlane.f32.xlu0 %v2499
        %v2501 = vpop.xlane.xlu0 %2500
        %v2502 = vsel %vm1421, %v2143, 0.0
        %2503 = vadd.xlane.f32.xlu0 %v2502
        %v2504 = vpop.xlane.xlu0 %2503
        %v2505 = vsel %vm1421, %v2145, 0.0
        %2506 = vadd.xlane.f32.xlu0 %v2505
        %v2507 = vpop.xlane.xlu0 %2506
        %v2508 = vsel %vm1421, %v2147, 0.0
        %2509 = vadd.xlane.f32.xlu0 %v2508
        %v2510 = vpop.xlane.xlu0 %2509
        %v2511 = vsel %vm1421, %v2149, 0.0
        %2512 = vadd.xlane.f32.xlu0 %v2511
        %v2513 = vpop.xlane.xlu0 %2512
        %v2514 = vsel %vm1421, %v2151, 0.0
        %2515 = vadd.xlane.f32.xlu0 %v2514
        %v2516 = vpop.xlane.xlu0 %2515
        %v2517 = vsel %vm1421, %v2153, 0.0
        %2518 = vadd.xlane.f32.xlu0 %v2517
        %v2519 = vpop.xlane.xlu0 %2518
        %v2520 = vsel %vm1421, %v2155, 0.0
        %2521 = vadd.xlane.f32.xlu0 %v2520
        %v2522 = vpop.xlane.xlu0 %2521
        %v2523 = vsel %vm1421, %v2157, 0.0
        %2524 = vadd.xlane.f32.xlu0 %v2523
        %v2525 = vpop.xlane.xlu0 %2524
        %v2526 = vsel %vm1421, %v2159, 0.0
        %2527 = vadd.xlane.f32.xlu0 %v2526
        %v2528 = vpop.xlane.xlu0 %2527
        %v2529 = vsel %vm1421, %v2161, 0.0
        %2530 = vadd.xlane.f32.xlu0 %v2529
        %v2531 = vpop.xlane.xlu0 %2530
        %v2532 = vsel %vm1421, %v2163, 0.0
        %2533 = vadd.xlane.f32.xlu0 %v2532
        %v2534 = vpop.xlane.xlu0 %2533
        %v2535 = vsel %vm1421, %v2165, 0.0
        %2536 = vadd.xlane.f32.xlu0 %v2535
        %v2537 = vpop.xlane.xlu0 %2536
        %v2538 = vsel %vm1421, %v2167, 0.0
        %2539 = vadd.xlane.f32.xlu0 %v2538
        %v2540 = vpop.xlane.xlu0 %2539
        %v2541 = vsel %vm1421, %v2169, 0.0
        %2542 = vadd.xlane.f32.xlu0 %v2541
        %v2543 = vpop.xlane.xlu0 %2542
        %v2544 = vsel %vm1421, %v2171, 0.0
        %2545 = vadd.xlane.f32.xlu0 %v2544
        %v2546 = vpop.xlane.xlu0 %2545
        %v2547 = vsel %vm1421, %v2173, 0.0
        %2548 = vadd.xlane.f32.xlu0 %v2547
        %v2549 = vpop.xlane.xlu0 %2548
        %v2550 = vsel %vm1421, %v2175, 0.0
        %2551 = vadd.xlane.f32.xlu0 %v2550
        %v2552 = vpop.xlane.xlu0 %2551
        %v2553 = vsel %vm1421, %v2177, 0.0
        %2554 = vadd.xlane.f32.xlu0 %v2553
        %v2555 = vpop.xlane.xlu0 %2554
        %v2556 = vsel %vm1421, %v2179, 0.0
        %2557 = vadd.xlane.f32.xlu0 %v2556
        %v2558 = vpop.xlane.xlu0 %2557
        %v2559 = vsel %vm1421, %v2181, 0.0
        %2560 = vadd.xlane.f32.xlu0 %v2559
        %v2561 = vpop.xlane.xlu0 %2560
        %v2562 = vsel %vm1421, %v2183, 0.0
        %2563 = vadd.xlane.f32.xlu0 %v2562
        %v2564 = vpop.xlane.xlu0 %2563
        %v2565 = vsel %vm1421, %v2185, 0.0
        %2566 = vadd.xlane.f32.xlu0 %v2565
        %v2567 = vpop.xlane.xlu0 %2566
        %v2568 = vsel %vm1421, %v2187, 0.0
        %2569 = vadd.xlane.f32.xlu0 %v2568
        %v2570 = vpop.xlane.xlu0 %2569
        %v2571 = vsel %vm1421, %v2189, 0.0
        %2572 = vadd.xlane.f32.xlu0 %v2571
        %v2573 = vpop.xlane.xlu0 %2572
        %v2574 = vrcp.pop %v2192
        %v2575 = vrcp.pop %v2195
        %v2576 = vrcp.pop %v2198
        %v2577 = vrcp.pop %v2201
        %v2578 = vrcp.pop %v2204
        %v2579 = vrcp.pop %v2207
        %v2580 = vrcp.pop %v2210
        %v2581 = vrcp.pop %v2213
        %v2582 = vrcp.pop %v2216
        %v2583 = vrcp.pop %v2219
        %v2584 = vrcp.pop %v2222
        %v2585 = vrcp.pop %v2225
        %v2586 = vrcp.pop %v2228
        %v2587 = vrcp.pop %v2231
        %v2588 = vrcp.pop %v2234
        %v2589 = vrcp.pop %v2237
        %v2590 = vrcp.pop %v2240
        %v2591 = vrcp.pop %v2243
        %v2592 = vrcp.pop %v2246
        %v2593 = vrcp.pop %v2249
        %v2594 = vrcp.pop %v2252
        %v2595 = vrcp.pop %v2255
        %v2596 = vrcp.pop %v2258
        %v2597 = vrcp.pop %v2261
        %v2598 = vrcp.pop %v2264
        %v2599 = vrcp.pop %v2267
        %v2600 = vrcp.pop %v2270
        %v2601 = vrcp.pop %v2273
        %v2602 = vrcp.pop %v2276
        %v2603 = vrcp.pop %v2279
        %v2604 = vrcp.pop %v2282
        %v2605 = vrcp.pop %v2285
        %v2606 = vrcp.pop %v2288
        %v2607 = vrcp.pop %v2291
        %v2608 = vrcp.pop %v2294
        %v2609 = vrcp.pop %v2297
        %v2610 = vrcp.pop %v2300
        %v2611 = vrcp.pop %v2303
        %v2612 = vrcp.pop %v2306
        %v2613 = vrcp.pop %v2309
        %v2614 = vrcp.pop %v2312
        %v2615 = vrcp.pop %v2315
        %v2616 = vrcp.pop %v2318
        %v2617 = vrcp.pop %v2321
        %v2618 = vrcp.pop %v2324
        %v2619 = vrcp.pop %v2327
        %v2620 = vrcp.pop %v2330
        %v2621 = vrcp.pop %v2333
        %v2622 = vrcp.pop %v2336
        %v2623 = vrcp.pop %v2339
        %v2624 = vrcp.pop %v2342
        %v2625 = vrcp.pop %v2345
        %v2626 = vrcp.pop %v2348
        %v2627 = vrcp.pop %v2351
        %v2628 = vrcp.pop %v2354
        %v2629 = vrcp.pop %v2357
        %v2630 = vrcp.pop %v2360
        %v2631 = vrcp.pop %v2363
        %v2632 = vrcp.pop %v2366
        %v2633 = vrcp.pop %v2369
        %v2634 = vrcp.pop %v2372
        %v2635 = vrcp.pop %v2375
        %v2636 = vrcp.pop %v2378
        %v2637 = vrcp.pop %v2381
        %v2638 = vrcp.pop %v2384
        %v2639 = vrcp.pop %v2387
        %v2640 = vrcp.pop %v2390
        %v2641 = vrcp.pop %v2393
        %v2642 = vrcp.pop %v2396
        %v2643 = vrcp.pop %v2399
        %v2644 = vrcp.pop %v2402
        %v2645 = vrcp.pop %v2405
        %v2646 = vrcp.pop %v2408
        %v2647 = vrcp.pop %v2411
        %v2648 = vrcp.pop %v2414
        %v2649 = vrcp.pop %v2417
        %v2650 = vrcp.pop %v2420
        %v2651 = vrcp.pop %v2423
        %v2652 = vrcp.pop %v2426
        %v2653 = vrcp.pop %v2429
        %v2654 = vrcp.pop %v2432
        %v2655 = vrcp.pop %v2435
        %v2656 = vrcp.pop %v2438
        %v2657 = vrcp.pop %v2441
        %v2658 = vrcp.pop %v2444
        %v2659 = vrcp.pop %v2447
        %v2660 = vrcp.pop %v2450
        %v2661 = vrcp.pop %v2453
        %v2662 = vrcp.pop %v2456
        %v2663 = vrcp.pop %v2459
        %v2664 = vrcp.pop %v2462
        %v2665 = vrcp.pop %v2465
        %v2666 = vrcp.pop %v2468
        %v2667 = vrcp.pop %v2471
        %v2668 = vrcp.pop %v2474
        %v2669 = vrcp.pop %v2477
        %v2670 = vrcp.pop %v2480
        %v2671 = vrcp.pop %v2483
        %v2672 = vrcp.pop %v2486
        %v2673 = vrcp.pop %v2489
        %v2674 = vrcp.pop %v2492
        %v2675 = vrcp.pop %v2495
        %v2676 = vrcp.pop %v2498
        %v2677 = vrcp.pop %v2501
        %v2678 = vrcp.pop %v2504
        %v2679 = vrcp.pop %v2507
        %v2680 = vrcp.pop %v2510
        %v2681 = vrcp.pop %v2513
        %v2682 = vrcp.pop %v2516
        %v2683 = vrcp.pop %v2519
        %v2684 = vrcp.pop %v2522
        %v2685 = vrcp.pop %v2525
        %v2686 = vrcp.pop %v2528
        %v2687 = vrcp.pop %v2531
        %v2688 = vrcp.pop %v2534
        %v2689 = vrcp.pop %v2537
        %v2690 = vrcp.pop %v2540
        %v2691 = vrcp.pop %v2543
        %v2692 = vrcp.pop %v2546
        %v2693 = vrcp.pop %v2549
        %v2694 = vrcp.pop %v2552
        %v2695 = vrcp.pop %v2555
        %v2696 = vrcp.pop %v2558
        %v2697 = vrcp.pop %v2561
        %v2698 = vrcp.pop %v2564
        %v2699 = vrcp.pop %v2567
        %v2700 = vrcp.pop %v2570
        %v2701 = vrcp.pop %v2573
        %v2702 = vmul.f32 %v1935, %v2574
        %v2703 = vmul.f32 %v1937, %v2575
        %v2704 = vmul.f32 %v1939, %v2576
        %v2705 = vmul.f32 %v1941, %v2577
        %v2706 = vmul.f32 %v1943, %v2578
        %v2707 = vmul.f32 %v1945, %v2579
        %v2708 = vmul.f32 %v1947, %v2580
        %v2709 = vmul.f32 %v1949, %v2581
        %v2710 = vmul.f32 %v1951, %v2582
        %v2711 = vmul.f32 %v1953, %v2583
        %v2712 = vmul.f32 %v1955, %v2584
        %v2713 = vmul.f32 %v1957, %v2585
        %v2714 = vmul.f32 %v1959, %v2586
        %v2715 = vmul.f32 %v1961, %v2587
        %v2716 = vmul.f32 %v1963, %v2588
        %v2717 = vmul.f32 %v1965, %v2589
        %v2718 = vmul.f32 %v1967, %v2590
        %v2719 = vmul.f32 %v1969, %v2591
        %v2720 = vmul.f32 %v1971, %v2592
        %v2721 = vmul.f32 %v1973, %v2593
        %v2722 = vmul.f32 %v1975, %v2594
        %v2723 = vmul.f32 %v1977, %v2595
        %v2724 = vmul.f32 %v1979, %v2596
        %v2725 = vmul.f32 %v1981, %v2597
        %v2726 = vmul.f32 %v1983, %v2598
        %v2727 = vmul.f32 %v1985, %v2599
        %v2728 = vmul.f32 %v1987, %v2600
        %v2729 = vmul.f32 %v1989, %v2601
        %v2730 = vmul.f32 %v1991, %v2602
        %v2731 = vmul.f32 %v1993, %v2603
        %v2732 = vmul.f32 %v1995, %v2604
        %v2733 = vmul.f32 %v1997, %v2605
        %v2734 = vmul.f32 %v1999, %v2606
        %v2735 = vmul.f32 %v2001, %v2607
        %v2736 = vmul.f32 %v2003, %v2608
        %v2737 = vmul.f32 %v2005, %v2609
        %v2738 = vmul.f32 %v2007, %v2610
        %v2739 = vmul.f32 %v2009, %v2611
        %v2740 = vmul.f32 %v2011, %v2612
        %v2741 = vmul.f32 %v2013, %v2613
        %v2742 = vmul.f32 %v2015, %v2614
        %v2743 = vmul.f32 %v2017, %v2615
        %v2744 = vmul.f32 %v2019, %v2616
        %v2745 = vmul.f32 %v2021, %v2617
        %v2746 = vmul.f32 %v2023, %v2618
        %v2747 = vmul.f32 %v2025, %v2619
        %v2748 = vmul.f32 %v2027, %v2620
        %v2749 = vmul.f32 %v2029, %v2621
        %v2750 = vmul.f32 %v2031, %v2622
        %v2751 = vmul.f32 %v2033, %v2623
        %v2752 = vmul.f32 %v2035, %v2624
        %v2753 = vmul.f32 %v2037, %v2625
        %v2754 = vmul.f32 %v2039, %v2626
        %v2755 = vmul.f32 %v2041, %v2627
        %v2756 = vmul.f32 %v2043, %v2628
        %v2757 = vmul.f32 %v2045, %v2629
        %v2758 = vmul.f32 %v2047, %v2630
        %v2759 = vmul.f32 %v2049, %v2631
        %v2760 = vmul.f32 %v2051, %v2632
        %v2761 = vmul.f32 %v2053, %v2633
        %v2762 = vmul.f32 %v2055, %v2634
        %v2763 = vmul.f32 %v2057, %v2635
        %v2764 = vmul.f32 %v2059, %v2636
        %v2765 = vmul.f32 %v2061, %v2637
        %v2766 = vmul.f32 %v2063, %v2638
        %v2767 = vmul.f32 %v2065, %v2639
        %v2768 = vmul.f32 %v2067, %v2640
        %v2769 = vmul.f32 %v2069, %v2641
        %v2770 = vmul.f32 %v2071, %v2642
        %v2771 = vmul.f32 %v2073, %v2643
        %v2772 = vmul.f32 %v2075, %v2644
        %v2773 = vmul.f32 %v2077, %v2645
        %v2774 = vmul.f32 %v2079, %v2646
        %v2775 = vmul.f32 %v2081, %v2647
        %v2776 = vmul.f32 %v2083, %v2648
        %v2777 = vmul.f32 %v2085, %v2649
        %v2778 = vmul.f32 %v2087, %v2650
        %v2779 = vmul.f32 %v2089, %v2651
        %v2780 = vmul.f32 %v2091, %v2652
        %v2781 = vmul.f32 %v2093, %v2653
        %v2782 = vmul.f32 %v2095, %v2654
        %v2783 = vmul.f32 %v2097, %v2655
        %v2784 = vmul.f32 %v2099, %v2656
        %v2785 = vmul.f32 %v2101, %v2657
        %v2786 = vmul.f32 %v2103, %v2658
        %v2787 = vmul.f32 %v2105, %v2659
        %v2788 = vmul.f32 %v2107, %v2660
        %v2789 = vmul.f32 %v2109, %v2661
        %v2790 = vmul.f32 %v2111, %v2662
        %v2791 = vmul.f32 %v2113, %v2663
        %v2792 = vmul.f32 %v2115, %v2664
        %v2793 = vmul.f32 %v2117, %v2665
        %v2794 = vmul.f32 %v2119, %v2666
        %v2795 = vmul.f32 %v2121, %v2667
        %v2796 = vmul.f32 %v2123, %v2668
        %v2797 = vmul.f32 %v2125, %v2669
        %v2798 = vmul.f32 %v2127, %v2670
        %v2799 = vmul.f32 %v2129, %v2671
        %v2800 = vmul.f32 %v2131, %v2672
        %v2801 = vmul.f32 %v2133, %v2673
        %v2802 = vmul.f32 %v2135, %v2674
        %v2803 = vmul.f32 %v2137, %v2675
        %v2804 = vmul.f32 %v2139, %v2676
        %v2805 = vmul.f32 %v2141, %v2677
        %v2806 = vmul.f32 %v2143, %v2678
        %v2807 = vmul.f32 %v2145, %v2679
        %v2808 = vmul.f32 %v2147, %v2680
        %v2809 = vmul.f32 %v2149, %v2681
        %v2810 = vmul.f32 %v2151, %v2682
        %v2811 = vmul.f32 %v2153, %v2683
        %v2812 = vmul.f32 %v2155, %v2684
        %v2813 = vmul.f32 %v2157, %v2685
        %v2814 = vmul.f32 %v2159, %v2686
        %v2815 = vmul.f32 %v2161, %v2687
        %v2816 = vmul.f32 %v2163, %v2688
        %v2817 = vmul.f32 %v2165, %v2689
        %v2818 = vmul.f32 %v2167, %v2690
        %v2819 = vmul.f32 %v2169, %v2691
        %v2820 = vmul.f32 %v2171, %v2692
        %v2821 = vmul.f32 %v2173, %v2693
        %v2822 = vmul.f32 %v2175, %v2694
        %v2823 = vmul.f32 %v2177, %v2695
        %v2824 = vmul.f32 %v2179, %v2696
        %v2825 = vmul.f32 %v2181, %v2697
        %v2826 = vmul.f32 %v2183, %v2698
        %v2827 = vmul.f32 %v2185, %v2699
        %v2828 = vmul.f32 %v2187, %v2700
        %v2829 = vmul.f32 %v2189, %v2701
        %2830 = vst.msk [vmem:[%s172] sm:$0xff] %vm1421, %v2702
        %2831 = vst.msk [vmem:[%s172 + $0x8] sm:$0xff] %vm1421, %v2703
        %2832 = vst.msk [vmem:[%s172 + $0x10] sm:$0xff] %vm1421, %v2704
        %2833 = vst.msk [vmem:[%s172 + $0x18] sm:$0xff] %vm1421, %v2705
        %2834 = vst.msk [vmem:[%s172 + $0x20] sm:$0xff] %vm1421, %v2706
        %2835 = vst.msk [vmem:[%s172 + $0x28] sm:$0xff] %vm1421, %v2707
        %2836 = vst.msk [vmem:[%s172 + $0x30] sm:$0xff] %vm1421, %v2708
        %2837 = vst.msk [vmem:[%s172 + $0x38] sm:$0xff] %vm1421, %v2709
        %2838 = vst.msk [vmem:[%s172 + $0x40] sm:$0xff] %vm1421, %v2710
        %2839 = vst.msk [vmem:[%s172 + $0x48] sm:$0xff] %vm1421, %v2711
        %2840 = vst.msk [vmem:[%s172 + $0x50] sm:$0xff] %vm1421, %v2712
        %2841 = vst.msk [vmem:[%s172 + $0x58] sm:$0xff] %vm1421, %v2713
        %2842 = vst.msk [vmem:[%s172 + $0x60] sm:$0xff] %vm1421, %v2714
        %2843 = vst.msk [vmem:[%s172 + $0x68] sm:$0xff] %vm1421, %v2715
        %2844 = vst.msk [vmem:[%s172 + $0x70] sm:$0xff] %vm1421, %v2716
        %2845 = vst.msk [vmem:[%s172 + $0x78] sm:$0xff] %vm1421, %v2717
        %2846 = vst.msk [vmem:[%s172 + $0x80] sm:$0xff] %vm1421, %v2718
        %2847 = vst.msk [vmem:[%s172 + $0x88] sm:$0xff] %vm1421, %v2719
        %2848 = vst.msk [vmem:[%s172 + $0x90] sm:$0xff] %vm1421, %v2720
        %2849 = vst.msk [vmem:[%s172 + $0x98] sm:$0xff] %vm1421, %v2721
        %2850 = vst.msk [vmem:[%s172 + $0xa0] sm:$0xff] %vm1421, %v2722
        %2851 = vst.msk [vmem:[%s172 + $0xa8] sm:$0xff] %vm1421, %v2723
        %2852 = vst.msk [vmem:[%s172 + $0xb0] sm:$0xff] %vm1421, %v2724
        %2853 = vst.msk [vmem:[%s172 + $0xb8] sm:$0xff] %vm1421, %v2725
        %2854 = vst.msk [vmem:[%s172 + $0xc0] sm:$0xff] %vm1421, %v2726
        %2855 = vst.msk [vmem:[%s172 + $0xc8] sm:$0xff] %vm1421, %v2727
        %2856 = vst.msk [vmem:[%s172 + $0xd0] sm:$0xff] %vm1421, %v2728
        %2857 = vst.msk [vmem:[%s172 + $0xd8] sm:$0xff] %vm1421, %v2729
        %2858 = vst.msk [vmem:[%s172 + $0xe0] sm:$0xff] %vm1421, %v2730
        %2859 = vst.msk [vmem:[%s172 + $0xe8] sm:$0xff] %vm1421, %v2731
        %2860 = vst.msk [vmem:[%s172 + $0xf0] sm:$0xff] %vm1421, %v2732
        %2861 = vst.msk [vmem:[%s172 + $0xf8] sm:$0xff] %vm1421, %v2733
        %2862 = vst.msk [vmem:[%s172 + $0x100] sm:$0xff] %vm1421, %v2734
        %2863 = vst.msk [vmem:[%s172 + $0x108] sm:$0xff] %vm1421, %v2735
        %2864 = vst.msk [vmem:[%s172 + $0x110] sm:$0xff] %vm1421, %v2736
        %2865 = vst.msk [vmem:[%s172 + $0x118] sm:$0xff] %vm1421, %v2737
        %2866 = vst.msk [vmem:[%s172 + $0x120] sm:$0xff] %vm1421, %v2738
        %2867 = vst.msk [vmem:[%s172 + $0x128] sm:$0xff] %vm1421, %v2739
        %2868 = vst.msk [vmem:[%s172 + $0x130] sm:$0xff] %vm1421, %v2740
        %2869 = vst.msk [vmem:[%s172 + $0x138] sm:$0xff] %vm1421, %v2741
        %2870 = vst.msk [vmem:[%s172 + $0x140] sm:$0xff] %vm1421, %v2742
        %2871 = vst.msk [vmem:[%s172 + $0x148] sm:$0xff] %vm1421, %v2743
        %2872 = vst.msk [vmem:[%s172 + $0x150] sm:$0xff] %vm1421, %v2744
        %2873 = vst.msk [vmem:[%s172 + $0x158] sm:$0xff] %vm1421, %v2745
        %2874 = vst.msk [vmem:[%s172 + $0x160] sm:$0xff] %vm1421, %v2746
        %2875 = vst.msk [vmem:[%s172 + $0x168] sm:$0xff] %vm1421, %v2747
        %2876 = vst.msk [vmem:[%s172 + $0x170] sm:$0xff] %vm1421, %v2748
        %2877 = vst.msk [vmem:[%s172 + $0x178] sm:$0xff] %vm1421, %v2749
        %2878 = vst.msk [vmem:[%s172 + $0x180] sm:$0xff] %vm1421, %v2750
        %2879 = vst.msk [vmem:[%s172 + $0x188] sm:$0xff] %vm1421, %v2751
        %2880 = vst.msk [vmem:[%s172 + $0x190] sm:$0xff] %vm1421, %v2752
        %2881 = vst.msk [vmem:[%s172 + $0x198] sm:$0xff] %vm1421, %v2753
        %2882 = vst.msk [vmem:[%s172 + $0x1a0] sm:$0xff] %vm1421, %v2754
        %2883 = vst.msk [vmem:[%s172 + $0x1a8] sm:$0xff] %vm1421, %v2755
        %2884 = vst.msk [vmem:[%s172 + $0x1b0] sm:$0xff] %vm1421, %v2756
        %2885 = vst.msk [vmem:[%s172 + $0x1b8] sm:$0xff] %vm1421, %v2757
        %2886 = vst.msk [vmem:[%s172 + $0x1c0] sm:$0xff] %vm1421, %v2758
        %2887 = vst.msk [vmem:[%s172 + $0x1c8] sm:$0xff] %vm1421, %v2759
        %2888 = vst.msk [vmem:[%s172 + $0x1d0] sm:$0xff] %vm1421, %v2760
        %2889 = vst.msk [vmem:[%s172 + $0x1d8] sm:$0xff] %vm1421, %v2761
        %2890 = vst.msk [vmem:[%s172 + $0x1e0] sm:$0xff] %vm1421, %v2762
        %2891 = vst.msk [vmem:[%s172 + $0x1e8] sm:$0xff] %vm1421, %v2763
        %2892 = vst.msk [vmem:[%s172 + $0x1f0] sm:$0xff] %vm1421, %v2764
        %2893 = vst.msk [vmem:[%s172 + $0x1f8] sm:$0xff] %vm1421, %v2765
        %2894 = vst.msk [vmem:[%s172 + $0x200] sm:$0xff] %vm1421, %v2766
        %2895 = vst.msk [vmem:[%s172 + $0x208] sm:$0xff] %vm1421, %v2767
        %2896 = vst.msk [vmem:[%s172 + $0x210] sm:$0xff] %vm1421, %v2768
        %2897 = vst.msk [vmem:[%s172 + $0x218] sm:$0xff] %vm1421, %v2769
        %2898 = vst.msk [vmem:[%s172 + $0x220] sm:$0xff] %vm1421, %v2770
        %2899 = vst.msk [vmem:[%s172 + $0x228] sm:$0xff] %vm1421, %v2771
        %2900 = vst.msk [vmem:[%s172 + $0x230] sm:$0xff] %vm1421, %v2772
        %2901 = vst.msk [vmem:[%s172 + $0x238] sm:$0xff] %vm1421, %v2773
        %2902 = vst.msk [vmem:[%s172 + $0x240] sm:$0xff] %vm1421, %v2774
        %2903 = vst.msk [vmem:[%s172 + $0x248] sm:$0xff] %vm1421, %v2775
        %2904 = vst.msk [vmem:[%s172 + $0x250] sm:$0xff] %vm1421, %v2776
        %2905 = vst.msk [vmem:[%s172 + $0x258] sm:$0xff] %vm1421, %v2777
        %2906 = vst.msk [vmem:[%s172 + $0x260] sm:$0xff] %vm1421, %v2778
        %2907 = vst.msk [vmem:[%s172 + $0x268] sm:$0xff] %vm1421, %v2779
        %2908 = vst.msk [vmem:[%s172 + $0x270] sm:$0xff] %vm1421, %v2780
        %2909 = vst.msk [vmem:[%s172 + $0x278] sm:$0xff] %vm1421, %v2781
        %2910 = vst.msk [vmem:[%s172 + $0x280] sm:$0xff] %vm1421, %v2782
        %2911 = vst.msk [vmem:[%s172 + $0x288] sm:$0xff] %vm1421, %v2783
        %2912 = vst.msk [vmem:[%s172 + $0x290] sm:$0xff] %vm1421, %v2784
        %2913 = vst.msk [vmem:[%s172 + $0x298] sm:$0xff] %vm1421, %v2785
        %2914 = vst.msk [vmem:[%s172 + $0x2a0] sm:$0xff] %vm1421, %v2786
        %2915 = vst.msk [vmem:[%s172 + $0x2a8] sm:$0xff] %vm1421, %v2787
        %2916 = vst.msk [vmem:[%s172 + $0x2b0] sm:$0xff] %vm1421, %v2788
        %2917 = vst.msk [vmem:[%s172 + $0x2b8] sm:$0xff] %vm1421, %v2789
        %2918 = vst.msk [vmem:[%s172 + $0x2c0] sm:$0xff] %vm1421, %v2790
        %2919 = vst.msk [vmem:[%s172 + $0x2c8] sm:$0xff] %vm1421, %v2791
        %2920 = vst.msk [vmem:[%s172 + $0x2d0] sm:$0xff] %vm1421, %v2792
        %2921 = vst.msk [vmem:[%s172 + $0x2d8] sm:$0xff] %vm1421, %v2793
        %2922 = vst.msk [vmem:[%s172 + $0x2e0] sm:$0xff] %vm1421, %v2794
        %2923 = vst.msk [vmem:[%s172 + $0x2e8] sm:$0xff] %vm1421, %v2795
        %2924 = vst.msk [vmem:[%s172 + $0x2f0] sm:$0xff] %vm1421, %v2796
        %2925 = vst.msk [vmem:[%s172 + $0x2f8] sm:$0xff] %vm1421, %v2797
        %2926 = vst.msk [vmem:[%s172 + $0x300] sm:$0xff] %vm1421, %v2798
        %2927 = vst.msk [vmem:[%s172 + $0x308] sm:$0xff] %vm1421, %v2799
        %2928 = vst.msk [vmem:[%s172 + $0x310] sm:$0xff] %vm1421, %v2800
        %2929 = vst.msk [vmem:[%s172 + $0x318] sm:$0xff] %vm1421, %v2801
        %2930 = vst.msk [vmem:[%s172 + $0x320] sm:$0xff] %vm1421, %v2802
        %2931 = vst.msk [vmem:[%s172 + $0x328] sm:$0xff] %vm1421, %v2803
        %2932 = vst.msk [vmem:[%s172 + $0x330] sm:$0xff] %vm1421, %v2804
        %2933 = vst.msk [vmem:[%s172 + $0x338] sm:$0xff] %vm1421, %v2805
        %2934 = vst.msk [vmem:[%s172 + $0x340] sm:$0xff] %vm1421, %v2806
        %2935 = vst.msk [vmem:[%s172 + $0x348] sm:$0xff] %vm1421, %v2807
        %2936 = vst.msk [vmem:[%s172 + $0x350] sm:$0xff] %vm1421, %v2808
        %2937 = vst.msk [vmem:[%s172 + $0x358] sm:$0xff] %vm1421, %v2809
        %2938 = vst.msk [vmem:[%s172 + $0x360] sm:$0xff] %vm1421, %v2810
        %2939 = vst.msk [vmem:[%s172 + $0x368] sm:$0xff] %vm1421, %v2811
        %2940 = vst.msk [vmem:[%s172 + $0x370] sm:$0xff] %vm1421, %v2812
        %2941 = vst.msk [vmem:[%s172 + $0x378] sm:$0xff] %vm1421, %v2813
        %2942 = vst.msk [vmem:[%s172 + $0x380] sm:$0xff] %vm1421, %v2814
        %2943 = vst.msk [vmem:[%s172 + $0x388] sm:$0xff] %vm1421, %v2815
        %2944 = vst.msk [vmem:[%s172 + $0x390] sm:$0xff] %vm1421, %v2816
        %2945 = vst.msk [vmem:[%s172 + $0x398] sm:$0xff] %vm1421, %v2817
        %2946 = vst.msk [vmem:[%s172 + $0x3a0] sm:$0xff] %vm1421, %v2818
        %2947 = vst.msk [vmem:[%s172 + $0x3a8] sm:$0xff] %vm1421, %v2819
        %2948 = vst.msk [vmem:[%s172 + $0x3b0] sm:$0xff] %vm1421, %v2820
        %2949 = vst.msk [vmem:[%s172 + $0x3b8] sm:$0xff] %vm1421, %v2821
        %2950 = vst.msk [vmem:[%s172 + $0x3c0] sm:$0xff] %vm1421, %v2822
        %2951 = vst.msk [vmem:[%s172 + $0x3c8] sm:$0xff] %vm1421, %v2823
        %2952 = vst.msk [vmem:[%s172 + $0x3d0] sm:$0xff] %vm1421, %v2824
        %2953 = vst.msk [vmem:[%s172 + $0x3d8] sm:$0xff] %vm1421, %v2825
        %2954 = vst.msk [vmem:[%s172 + $0x3e0] sm:$0xff] %vm1421, %v2826
        %2955 = vst.msk [vmem:[%s172 + $0x3e8] sm:$0xff] %vm1421, %v2827
        %2956 = vst.msk [vmem:[%s172 + $0x3f0] sm:$0xff] %vm1421, %v2828
        %2957 = vst.msk [vmem:[%s172 + $0x3f8] sm:$0xff] %vm1421, %v2829
        %s2958 = sand.u32 %s90, 1
        %s2959 = sand.u32 %s90, 1
        %s2960 = smul.addr %s2959, 1024
        %s2961 = scalar_lea.vmem [#allocation2], %s2960
        // Predicated region
        $region33: #{tpu_custom_call.1} parent=31 // pred_check
          %p2962 = pneg %p100
        $region34: #{tpu_custom_call.1} parent=31 // pred_check_branch
          %2964 = sbr.rel (%p2962) target = $region36
        $region35: #{tpu_custom_call.1} parent=31 // pred_region
          %s2965 = smul.u32 128, %s14
          %s2966 = ssub.s32 500, %s2965
          %p2967 = scmp.lt.s32.totalorder %s2966, 128
          %s2968 = scalar_select %p2967, %s2966, 128
          %s2969 = smul.u32 128, %s2968
          %p2970 = scmp.ne.s32.totalorder 0, %s2969
          %s2971 = smul.addr %s2965, 8
          %s2972 = scalar_lea.vmem %s3, %s2971
          // Predicated region
          $region37: #{tpu_custom_call.1} parent=35 // pred_check
            %p2973 = pneg %p2970
          $region38: #{tpu_custom_call.1} parent=35 // pred_check_branch
            %2975 = sbr.rel (%p2973) target = $region40
          $region39: #{tpu_custom_call.1} parent=35 // pred_region
            // Predicated region
            $region41: #{tpu_custom_call.1} parent=39 // pred_check
              _
            $region42: #{tpu_custom_call.1} parent=39 // pred_check_branch
              %2977 = sbr.rel (0) target = $region44
            $region43: #{tpu_custom_call.1} parent=39 // pred_region
              // Predicated region
              $region63: #{tpu_custom_call.1} parent=43 // pred_check
                _
              $region64: #{tpu_custom_call.1} parent=43 // pred_check_branch
                %3153 = sbr.rel (0) target = $region66
              $region65: #{tpu_custom_call.1} parent=43 // pred_region
                %s3154 = sshrl.u32 %s2968, 6
                // While loop
                $region67: #{tpu_custom_call.1} parent=65 // loop_pre_header
                  _
                $region68: #{tpu_custom_call.1} parent=65 // loop_header
                  %s3156 = sphi 0, %s3158
                  %p3157 = scmp.ge.s32.totalorder %s3156, %s3154
                  %s3161 = sphi 0, %s3294
                  %s3162 = sphi %s2961, %s3297
                  %s3163 = sphi %s2972, %s3298
                $region69: #{tpu_custom_call.1} parent=65 // loop_header_branch
                  %3160 = sbr.rel (%p3157) target = $region73
                $region70: #{tpu_custom_call.1} parent=65 // loop_body
                  %v3164 = vld [vmem:[%s3162] sm:$0xff]
                  %3165 = vst [vmem:[%s3163] sm:$0xff] %v3164
                  %v3166 = vld [vmem:[%s3162 + $0x8] sm:$0xff]
                  %3167 = vst [vmem:[%s3163 + $0x8] sm:$0xff] %v3166
                  %v3168 = vld [vmem:[%s3162 + $0x10] sm:$0xff]
                  %3169 = vst [vmem:[%s3163 + $0x10] sm:$0xff] %v3168
                  %v3170 = vld [vmem:[%s3162 + $0x18] sm:$0xff]
                  %3171 = vst [vmem:[%s3163 + $0x18] sm:$0xff] %v3170
                  %v3172 = vld [vmem:[%s3162 + $0x20] sm:$0xff]
                  %3173 = vst [vmem:[%s3163 + $0x20] sm:$0xff] %v3172
                  %v3174 = vld [vmem:[%s3162 + $0x28] sm:$0xff]
                  %3175 = vst [vmem:[%s3163 + $0x28] sm:$0xff] %v3174
                  %v3176 = vld [vmem:[%s3162 + $0x30] sm:$0xff]
                  %3177 = vst [vmem:[%s3163 + $0x30] sm:$0xff] %v3176
                  %v3178 = vld [vmem:[%s3162 + $0x38] sm:$0xff]
                  %3179 = vst [vmem:[%s3163 + $0x38] sm:$0xff] %v3178
                  %v3180 = vld [vmem:[%s3162 + $0x40] sm:$0xff]
                  %3181 = vst [vmem:[%s3163 + $0x40] sm:$0xff] %v3180
                  %v3182 = vld [vmem:[%s3162 + $0x48] sm:$0xff]
                  %3183 = vst [vmem:[%s3163 + $0x48] sm:$0xff] %v3182
                  %v3184 = vld [vmem:[%s3162 + $0x50] sm:$0xff]
                  %3185 = vst [vmem:[%s3163 + $0x50] sm:$0xff] %v3184
                  %v3186 = vld [vmem:[%s3162 + $0x58] sm:$0xff]
                  %3187 = vst [vmem:[%s3163 + $0x58] sm:$0xff] %v3186
                  %v3188 = vld [vmem:[%s3162 + $0x60] sm:$0xff]
                  %3189 = vst [vmem:[%s3163 + $0x60] sm:$0xff] %v3188
                  %v3190 = vld [vmem:[%s3162 + $0x68] sm:$0xff]
                  %3191 = vst [vmem:[%s3163 + $0x68] sm:$0xff] %v3190
                  %v3192 = vld [vmem:[%s3162 + $0x70] sm:$0xff]
                  %3193 = vst [vmem:[%s3163 + $0x70] sm:$0xff] %v3192
                  %v3194 = vld [vmem:[%s3162 + $0x78] sm:$0xff]
                  %3195 = vst [vmem:[%s3163 + $0x78] sm:$0xff] %v3194
                  %v3196 = vld [vmem:[%s3162 + $0x80] sm:$0xff]
                  %3197 = vst [vmem:[%s3163 + $0x80] sm:$0xff] %v3196
                  %v3198 = vld [vmem:[%s3162 + $0x88] sm:$0xff]
                  %3199 = vst [vmem:[%s3163 + $0x88] sm:$0xff] %v3198
                  %v3200 = vld [vmem:[%s3162 + $0x90] sm:$0xff]
                  %3201 = vst [vmem:[%s3163 + $0x90] sm:$0xff] %v3200
                  %v3202 = vld [vmem:[%s3162 + $0x98] sm:$0xff]
                  %3203 = vst [vmem:[%s3163 + $0x98] sm:$0xff] %v3202
                  %v3204 = vld [vmem:[%s3162 + $0xa0] sm:$0xff]
                  %3205 = vst [vmem:[%s3163 + $0xa0] sm:$0xff] %v3204
                  %v3206 = vld [vmem:[%s3162 + $0xa8] sm:$0xff]
                  %3207 = vst [vmem:[%s3163 + $0xa8] sm:$0xff] %v3206
                  %v3208 = vld [vmem:[%s3162 + $0xb0] sm:$0xff]
                  %3209 = vst [vmem:[%s3163 + $0xb0] sm:$0xff] %v3208
                  %v3210 = vld [vmem:[%s3162 + $0xb8] sm:$0xff]
                  %3211 = vst [vmem:[%s3163 + $0xb8] sm:$0xff] %v3210
                  %v3212 = vld [vmem:[%s3162 + $0xc0] sm:$0xff]
                  %3213 = vst [vmem:[%s3163 + $0xc0] sm:$0xff] %v3212
                  %v3214 = vld [vmem:[%s3162 + $0xc8] sm:$0xff]
                  %3215 = vst [vmem:[%s3163 + $0xc8] sm:$0xff] %v3214
                  %v3216 = vld [vmem:[%s3162 + $0xd0] sm:$0xff]
                  %3217 = vst [vmem:[%s3163 + $0xd0] sm:$0xff] %v3216
                  %v3218 = vld [vmem:[%s3162 + $0xd8] sm:$0xff]
                  %3219 = vst [vmem:[%s3163 + $0xd8] sm:$0xff] %v3218
                  %v3220 = vld [vmem:[%s3162 + $0xe0] sm:$0xff]
                  %3221 = vst [vmem:[%s3163 + $0xe0] sm:$0xff] %v3220
                  %v3222 = vld [vmem:[%s3162 + $0xe8] sm:$0xff]
                  %3223 = vst [vmem:[%s3163 + $0xe8] sm:$0xff] %v3222
                  %v3224 = vld [vmem:[%s3162 + $0xf0] sm:$0xff]
                  %3225 = vst [vmem:[%s3163 + $0xf0] sm:$0xff] %v3224
                  %v3226 = vld [vmem:[%s3162 + $0xf8] sm:$0xff]
                  %3227 = vst [vmem:[%s3163 + $0xf8] sm:$0xff] %v3226
                  %v3228 = vld [vmem:[%s3162 + $0x100] sm:$0xff]
                  %3229 = vst [vmem:[%s3163 + $0x100] sm:$0xff] %v3228
                  %v3230 = vld [vmem:[%s3162 + $0x108] sm:$0xff]
                  %3231 = vst [vmem:[%s3163 + $0x108] sm:$0xff] %v3230
                  %v3232 = vld [vmem:[%s3162 + $0x110] sm:$0xff]
                  %3233 = vst [vmem:[%s3163 + $0x110] sm:$0xff] %v3232
                  %v3234 = vld [vmem:[%s3162 + $0x118] sm:$0xff]
                  %3235 = vst [vmem:[%s3163 + $0x118] sm:$0xff] %v3234
                  %v3236 = vld [vmem:[%s3162 + $0x120] sm:$0xff]
                  %3237 = vst [vmem:[%s3163 + $0x120] sm:$0xff] %v3236
                  %v3238 = vld [vmem:[%s3162 + $0x128] sm:$0xff]
                  %3239 = vst [vmem:[%s3163 + $0x128] sm:$0xff] %v3238
                  %v3240 = vld [vmem:[%s3162 + $0x130] sm:$0xff]
                  %3241 = vst [vmem:[%s3163 + $0x130] sm:$0xff] %v3240
                  %v3242 = vld [vmem:[%s3162 + $0x138] sm:$0xff]
                  %3243 = vst [vmem:[%s3163 + $0x138] sm:$0xff] %v3242
                  %v3244 = vld [vmem:[%s3162 + $0x140] sm:$0xff]
                  %3245 = vst [vmem:[%s3163 + $0x140] sm:$0xff] %v3244
                  %v3246 = vld [vmem:[%s3162 + $0x148] sm:$0xff]
                  %3247 = vst [vmem:[%s3163 + $0x148] sm:$0xff] %v3246
                  %v3248 = vld [vmem:[%s3162 + $0x150] sm:$0xff]
                  %3249 = vst [vmem:[%s3163 + $0x150] sm:$0xff] %v3248
                  %v3250 = vld [vmem:[%s3162 + $0x158] sm:$0xff]
                  %3251 = vst [vmem:[%s3163 + $0x158] sm:$0xff] %v3250
                  %v3252 = vld [vmem:[%s3162 + $0x160] sm:$0xff]
                  %3253 = vst [vmem:[%s3163 + $0x160] sm:$0xff] %v3252
                  %v3254 = vld [vmem:[%s3162 + $0x168] sm:$0xff]
                  %3255 = vst [vmem:[%s3163 + $0x168] sm:$0xff] %v3254
                  %v3256 = vld [vmem:[%s3162 + $0x170] sm:$0xff]
                  %3257 = vst [vmem:[%s3163 + $0x170] sm:$0xff] %v3256
                  %v3258 = vld [vmem:[%s3162 + $0x178] sm:$0xff]
                  %3259 = vst [vmem:[%s3163 + $0x178] sm:$0xff] %v3258
                  %v3260 = vld [vmem:[%s3162 + $0x180] sm:$0xff]
                  %3261 = vst [vmem:[%s3163 + $0x180] sm:$0xff] %v3260
                  %v3262 = vld [vmem:[%s3162 + $0x188] sm:$0xff]
                  %3263 = vst [vmem:[%s3163 + $0x188] sm:$0xff] %v3262
                  %v3264 = vld [vmem:[%s3162 + $0x190] sm:$0xff]
                  %3265 = vst [vmem:[%s3163 + $0x190] sm:$0xff] %v3264
                  %v3266 = vld [vmem:[%s3162 + $0x198] sm:$0xff]
                  %3267 = vst [vmem:[%s3163 + $0x198] sm:$0xff] %v3266
                  %v3268 = vld [vmem:[%s3162 + $0x1a0] sm:$0xff]
                  %3269 = vst [vmem:[%s3163 + $0x1a0] sm:$0xff] %v3268
                  %v3270 = vld [vmem:[%s3162 + $0x1a8] sm:$0xff]
                  %3271 = vst [vmem:[%s3163 + $0x1a8] sm:$0xff] %v3270
                  %v3272 = vld [vmem:[%s3162 + $0x1b0] sm:$0xff]
                  %3273 = vst [vmem:[%s3163 + $0x1b0] sm:$0xff] %v3272
                  %v3274 = vld [vmem:[%s3162 + $0x1b8] sm:$0xff]
                  %3275 = vst [vmem:[%s3163 + $0x1b8] sm:$0xff] %v3274
                  %v3276 = vld [vmem:[%s3162 + $0x1c0] sm:$0xff]
                  %3277 = vst [vmem:[%s3163 + $0x1c0] sm:$0xff] %v3276
                  %v3278 = vld [vmem:[%s3162 + $0x1c8] sm:$0xff]
                  %3279 = vst [vmem:[%s3163 + $0x1c8] sm:$0xff] %v3278
                  %v3280 = vld [vmem:[%s3162 + $0x1d0] sm:$0xff]
                  %3281 = vst [vmem:[%s3163 + $0x1d0] sm:$0xff] %v3280
                  %v3282 = vld [vmem:[%s3162 + $0x1d8] sm:$0xff]
                  %3283 = vst [vmem:[%s3163 + $0x1d8] sm:$0xff] %v3282
                  %v3284 = vld [vmem:[%s3162 + $0x1e0] sm:$0xff]
                  %3285 = vst [vmem:[%s3163 + $0x1e0] sm:$0xff] %v3284
                  %v3286 = vld [vmem:[%s3162 + $0x1e8] sm:$0xff]
                  %3287 = vst [vmem:[%s3163 + $0x1e8] sm:$0xff] %v3286
                  %v3288 = vld [vmem:[%s3162 + $0x1f0] sm:$0xff]
                  %3289 = vst [vmem:[%s3163 + $0x1f0] sm:$0xff] %v3288
                  %v3290 = vld [vmem:[%s3162 + $0x1f8] sm:$0xff]
                  %3291 = vst [vmem:[%s3163 + $0x1f8] sm:$0xff] %v3290
                  %s3292 = sadd.s32 1, %s3161
                  %p3293 = scmp.ge.s32.totalorder %s3292, %s3154
                  %s3294 = scalar_select %p3293, 0, %s3292
                  %s3295 = smul.u32 %s3294, 512
                  %s3296 = smul.u32 %s3294, 512
                  %s3297 = scalar_lea.vmem %s2961, %s3295 [#allocation2]
                  %s3298 = scalar_lea.vmem %s2972, %s3296
                $region71: #{tpu_custom_call.1} parent=65 // loop_footer
                  %s3158 = sadd.s32 %s3156, 1
                $region72: #{tpu_custom_call.1} parent=65 // loop_footer_branch
                  %3155 = sbr.rel target = $region68
                $region73: #{tpu_custom_call.1} parent=65 // loop_exit
                  _
                %s3299 = sshrl.u32 %s2968, 6
                %s3300 = sand.u32 %s2968, 63
                %s3301 = smul.u32 %s3299, 64
                %s3302 = smul.u32 8, %s3301
                %s3303 = scalar_lea.vmem %s2961, %s3302 [#allocation2]
                %s3304 = smul.u32 8, %s3301
                %s3305 = scalar_lea.vmem %s2972, %s3304
                // While loop
                $region74: #{tpu_custom_call.1} parent=65 // loop_pre_header
                  _
                $region75: #{tpu_custom_call.1} parent=65 // loop_header
                  %s3307 = sphi 0, %s3309
                  %p3308 = scmp.ge.s32.totalorder %s3307, %s3300
                  %s3312 = sphi 0, %s3319
                  %s3313 = sphi %s3303, %s3322
                  %s3314 = sphi %s3305, %s3323
                $region76: #{tpu_custom_call.1} parent=65 // loop_header_branch
                  %3311 = sbr.rel (%p3308) target = $region80
                $region77: #{tpu_custom_call.1} parent=65 // loop_body
                  %v3315 = vld [vmem:[%s3313] sm:$0xff]
                  %3316 = vst [vmem:[%s3314] sm:$0xff] %v3315
                  %s3317 = sadd.s32 1, %s3312
                  %p3318 = scmp.ge.s32.totalorder %s3317, %s3300
                  %s3319 = scalar_select %p3318, 0, %s3317
                  %s3320 = smul.u32 %s3319, 8
                  %s3321 = smul.u32 %s3319, 8
                  %s3322 = scalar_lea.vmem %s3303, %s3320 [#allocation2]
                  %s3323 = scalar_lea.vmem %s3305, %s3321
                $region78: #{tpu_custom_call.1} parent=65 // loop_footer
                  %s3309 = sadd.s32 %s3307, 1
                $region79: #{tpu_custom_call.1} parent=65 // loop_footer_branch
                  %3306 = sbr.rel target = $region75
                $region80: #{tpu_custom_call.1} parent=65 // loop_exit
                  _
              $region66: #{tpu_custom_call.1} parent=43 // pred_fallthru
                _
              // Predicated region
              $region81: #{tpu_custom_call.1} parent=43 // pred_check
                _
              $region82: #{tpu_custom_call.1} parent=43 // pred_check_branch
                %3325 = sbr.rel target = $region84
              $region83: #{tpu_custom_call.1} parent=43 // pred_region
                _
              $region84: #{tpu_custom_call.1} parent=43 // pred_fallthru
                _
            $region44: #{tpu_custom_call.1} parent=39 // pred_fallthru
              _
            // Predicated region
            $region45: #{tpu_custom_call.1} parent=39 // pred_check
              _
            $region46: #{tpu_custom_call.1} parent=39 // pred_check_branch
              %2979 = sbr.rel target = $region48
            $region47: #{tpu_custom_call.1} parent=39 // pred_region
              %s2981 = ssub.s32 256, 1
              %s2982 = sshrl.u32 %s2968, 6
              // While loop
              $region49: #{tpu_custom_call.1} parent=47 // loop_pre_header
                _
              $region50: #{tpu_custom_call.1} parent=47 // loop_header
                %s2984 = sphi 0, %s2986
                %p2985 = scmp.ge.s32.totalorder %s2984, %s2982
                %s2989 = sphi 0, %s3122
                %s2990 = sphi %s2961, %s3125
                %s2991 = sphi %s2972, %s3126
              $region51: #{tpu_custom_call.1} parent=47 // loop_header_branch
                %2988 = sbr.rel (%p2985) target = $region55
              $region52: #{tpu_custom_call.1} parent=47 // loop_body
                %v2992 = vld [vmem:[%s2990] sm:%s2981]
                %2993 = vst [vmem:[%s2991] sm:%s2981] %v2992
                %v2994 = vld [vmem:[%s2990 + $0x8] sm:%s2981]
                %2995 = vst [vmem:[%s2991 + $0x8] sm:%s2981] %v2994
                %v2996 = vld [vmem:[%s2990 + $0x10] sm:%s2981]
                %2997 = vst [vmem:[%s2991 + $0x10] sm:%s2981] %v2996
                %v2998 = vld [vmem:[%s2990 + $0x18] sm:%s2981]
                %2999 = vst [vmem:[%s2991 + $0x18] sm:%s2981] %v2998
                %v3000 = vld [vmem:[%s2990 + $0x20] sm:%s2981]
                %3001 = vst [vmem:[%s2991 + $0x20] sm:%s2981] %v3000
                %v3002 = vld [vmem:[%s2990 + $0x28] sm:%s2981]
                %3003 = vst [vmem:[%s2991 + $0x28] sm:%s2981] %v3002
                %v3004 = vld [vmem:[%s2990 + $0x30] sm:%s2981]
                %3005 = vst [vmem:[%s2991 + $0x30] sm:%s2981] %v3004
                %v3006 = vld [vmem:[%s2990 + $0x38] sm:%s2981]
                %3007 = vst [vmem:[%s2991 + $0x38] sm:%s2981] %v3006
                %v3008 = vld [vmem:[%s2990 + $0x40] sm:%s2981]
                %3009 = vst [vmem:[%s2991 + $0x40] sm:%s2981] %v3008
                %v3010 = vld [vmem:[%s2990 + $0x48] sm:%s2981]
                %3011 = vst [vmem:[%s2991 + $0x48] sm:%s2981] %v3010
                %v3012 = vld [vmem:[%s2990 + $0x50] sm:%s2981]
                %3013 = vst [vmem:[%s2991 + $0x50] sm:%s2981] %v3012
                %v3014 = vld [vmem:[%s2990 + $0x58] sm:%s2981]
                %3015 = vst [vmem:[%s2991 + $0x58] sm:%s2981] %v3014
                %v3016 = vld [vmem:[%s2990 + $0x60] sm:%s2981]
                %3017 = vst [vmem:[%s2991 + $0x60] sm:%s2981] %v3016
                %v3018 = vld [vmem:[%s2990 + $0x68] sm:%s2981]
                %3019 = vst [vmem:[%s2991 + $0x68] sm:%s2981] %v3018
                %v3020 = vld [vmem:[%s2990 + $0x70] sm:%s2981]
                %3021 = vst [vmem:[%s2991 + $0x70] sm:%s2981] %v3020
                %v3022 = vld [vmem:[%s2990 + $0x78] sm:%s2981]
                %3023 = vst [vmem:[%s2991 + $0x78] sm:%s2981] %v3022
                %v3024 = vld [vmem:[%s2990 + $0x80] sm:%s2981]
                %3025 = vst [vmem:[%s2991 + $0x80] sm:%s2981] %v3024
                %v3026 = vld [vmem:[%s2990 + $0x88] sm:%s2981]
                %3027 = vst [vmem:[%s2991 + $0x88] sm:%s2981] %v3026
                %v3028 = vld [vmem:[%s2990 + $0x90] sm:%s2981]
                %3029 = vst [vmem:[%s2991 + $0x90] sm:%s2981] %v3028
                %v3030 = vld [vmem:[%s2990 + $0x98] sm:%s2981]
                %3031 = vst [vmem:[%s2991 + $0x98] sm:%s2981] %v3030
                %v3032 = vld [vmem:[%s2990 + $0xa0] sm:%s2981]
                %3033 = vst [vmem:[%s2991 + $0xa0] sm:%s2981] %v3032
                %v3034 = vld [vmem:[%s2990 + $0xa8] sm:%s2981]
                %3035 = vst [vmem:[%s2991 + $0xa8] sm:%s2981] %v3034
                %v3036 = vld [vmem:[%s2990 + $0xb0] sm:%s2981]
                %3037 = vst [vmem:[%s2991 + $0xb0] sm:%s2981] %v3036
                %v3038 = vld [vmem:[%s2990 + $0xb8] sm:%s2981]
                %3039 = vst [vmem:[%s2991 + $0xb8] sm:%s2981] %v3038
                %v3040 = vld [vmem:[%s2990 + $0xc0] sm:%s2981]
                %3041 = vst [vmem:[%s2991 + $0xc0] sm:%s2981] %v3040
                %v3042 = vld [vmem:[%s2990 + $0xc8] sm:%s2981]
                %3043 = vst [vmem:[%s2991 + $0xc8] sm:%s2981] %v3042
                %v3044 = vld [vmem:[%s2990 + $0xd0] sm:%s2981]
                %3045 = vst [vmem:[%s2991 + $0xd0] sm:%s2981] %v3044
                %v3046 = vld [vmem:[%s2990 + $0xd8] sm:%s2981]
                %3047 = vst [vmem:[%s2991 + $0xd8] sm:%s2981] %v3046
                %v3048 = vld [vmem:[%s2990 + $0xe0] sm:%s2981]
                %3049 = vst [vmem:[%s2991 + $0xe0] sm:%s2981] %v3048
                %v3050 = vld [vmem:[%s2990 + $0xe8] sm:%s2981]
                %3051 = vst [vmem:[%s2991 + $0xe8] sm:%s2981] %v3050
                %v3052 = vld [vmem:[%s2990 + $0xf0] sm:%s2981]
                %3053 = vst [vmem:[%s2991 + $0xf0] sm:%s2981] %v3052
                %v3054 = vld [vmem:[%s2990 + $0xf8] sm:%s2981]
                %3055 = vst [vmem:[%s2991 + $0xf8] sm:%s2981] %v3054
                %v3056 = vld [vmem:[%s2990 + $0x100] sm:%s2981]
                %3057 = vst [vmem:[%s2991 + $0x100] sm:%s2981] %v3056
                %v3058 = vld [vmem:[%s2990 + $0x108] sm:%s2981]
                %3059 = vst [vmem:[%s2991 + $0x108] sm:%s2981] %v3058
                %v3060 = vld [vmem:[%s2990 + $0x110] sm:%s2981]
                %3061 = vst [vmem:[%s2991 + $0x110] sm:%s2981] %v3060
                %v3062 = vld [vmem:[%s2990 + $0x118] sm:%s2981]
                %3063 = vst [vmem:[%s2991 + $0x118] sm:%s2981] %v3062
                %v3064 = vld [vmem:[%s2990 + $0x120] sm:%s2981]
                %3065 = vst [vmem:[%s2991 + $0x120] sm:%s2981] %v3064
                %v3066 = vld [vmem:[%s2990 + $0x128] sm:%s2981]
                %3067 = vst [vmem:[%s2991 + $0x128] sm:%s2981] %v3066
                %v3068 = vld [vmem:[%s2990 + $0x130] sm:%s2981]
                %3069 = vst [vmem:[%s2991 + $0x130] sm:%s2981] %v3068
                %v3070 = vld [vmem:[%s2990 + $0x138] sm:%s2981]
                %3071 = vst [vmem:[%s2991 + $0x138] sm:%s2981] %v3070
                %v3072 = vld [vmem:[%s2990 + $0x140] sm:%s2981]
                %3073 = vst [vmem:[%s2991 + $0x140] sm:%s2981] %v3072
                %v3074 = vld [vmem:[%s2990 + $0x148] sm:%s2981]
                %3075 = vst [vmem:[%s2991 + $0x148] sm:%s2981] %v3074
                %v3076 = vld [vmem:[%s2990 + $0x150] sm:%s2981]
                %3077 = vst [vmem:[%s2991 + $0x150] sm:%s2981] %v3076
                %v3078 = vld [vmem:[%s2990 + $0x158] sm:%s2981]
                %3079 = vst [vmem:[%s2991 + $0x158] sm:%s2981] %v3078
                %v3080 = vld [vmem:[%s2990 + $0x160] sm:%s2981]
                %3081 = vst [vmem:[%s2991 + $0x160] sm:%s2981] %v3080
                %v3082 = vld [vmem:[%s2990 + $0x168] sm:%s2981]
                %3083 = vst [vmem:[%s2991 + $0x168] sm:%s2981] %v3082
                %v3084 = vld [vmem:[%s2990 + $0x170] sm:%s2981]
                %3085 = vst [vmem:[%s2991 + $0x170] sm:%s2981] %v3084
                %v3086 = vld [vmem:[%s2990 + $0x178] sm:%s2981]
                %3087 = vst [vmem:[%s2991 + $0x178] sm:%s2981] %v3086
                %v3088 = vld [vmem:[%s2990 + $0x180] sm:%s2981]
                %3089 = vst [vmem:[%s2991 + $0x180] sm:%s2981] %v3088
                %v3090 = vld [vmem:[%s2990 + $0x188] sm:%s2981]
                %3091 = vst [vmem:[%s2991 + $0x188] sm:%s2981] %v3090
                %v3092 = vld [vmem:[%s2990 + $0x190] sm:%s2981]
                %3093 = vst [vmem:[%s2991 + $0x190] sm:%s2981] %v3092
                %v3094 = vld [vmem:[%s2990 + $0x198] sm:%s2981]
                %3095 = vst [vmem:[%s2991 + $0x198] sm:%s2981] %v3094
                %v3096 = vld [vmem:[%s2990 + $0x1a0] sm:%s2981]
                %3097 = vst [vmem:[%s2991 + $0x1a0] sm:%s2981] %v3096
                %v3098 = vld [vmem:[%s2990 + $0x1a8] sm:%s2981]
                %3099 = vst [vmem:[%s2991 + $0x1a8] sm:%s2981] %v3098
                %v3100 = vld [vmem:[%s2990 + $0x1b0] sm:%s2981]
                %3101 = vst [vmem:[%s2991 + $0x1b0] sm:%s2981] %v3100
                %v3102 = vld [vmem:[%s2990 + $0x1b8] sm:%s2981]
                %3103 = vst [vmem:[%s2991 + $0x1b8] sm:%s2981] %v3102
                %v3104 = vld [vmem:[%s2990 + $0x1c0] sm:%s2981]
                %3105 = vst [vmem:[%s2991 + $0x1c0] sm:%s2981] %v3104
                %v3106 = vld [vmem:[%s2990 + $0x1c8] sm:%s2981]
                %3107 = vst [vmem:[%s2991 + $0x1c8] sm:%s2981] %v3106
                %v3108 = vld [vmem:[%s2990 + $0x1d0] sm:%s2981]
                %3109 = vst [vmem:[%s2991 + $0x1d0] sm:%s2981] %v3108
                %v3110 = vld [vmem:[%s2990 + $0x1d8] sm:%s2981]
                %3111 = vst [vmem:[%s2991 + $0x1d8] sm:%s2981] %v3110
                %v3112 = vld [vmem:[%s2990 + $0x1e0] sm:%s2981]
                %3113 = vst [vmem:[%s2991 + $0x1e0] sm:%s2981] %v3112
                %v3114 = vld [vmem:[%s2990 + $0x1e8] sm:%s2981]
                %3115 = vst [vmem:[%s2991 + $0x1e8] sm:%s2981] %v3114
                %v3116 = vld [vmem:[%s2990 + $0x1f0] sm:%s2981]
                %3117 = vst [vmem:[%s2991 + $0x1f0] sm:%s2981] %v3116
                %v3118 = vld [vmem:[%s2990 + $0x1f8] sm:%s2981]
                %3119 = vst [vmem:[%s2991 + $0x1f8] sm:%s2981] %v3118
                %s3120 = sadd.s32 1, %s2989
                %p3121 = scmp.ge.s32.totalorder %s3120, %s2982
                %s3122 = scalar_select %p3121, 0, %s3120
                %s3123 = smul.u32 %s3122, 512
                %s3124 = smul.u32 %s3122, 512
                %s3125 = scalar_lea.vmem %s2961, %s3123 [#allocation2]
                %s3126 = scalar_lea.vmem %s2972, %s3124
              $region53: #{tpu_custom_call.1} parent=47 // loop_footer
                %s2986 = sadd.s32 %s2984, 1
              $region54: #{tpu_custom_call.1} parent=47 // loop_footer_branch
                %2983 = sbr.rel target = $region50
              $region55: #{tpu_custom_call.1} parent=47 // loop_exit
                _
              %s3127 = sshrl.u32 %s2968, 6
              %s3128 = sand.u32 %s2968, 63
              %s3129 = smul.u32 %s3127, 64
              %s3130 = smul.u32 8, %s3129
              %s3131 = scalar_lea.vmem %s2961, %s3130 [#allocation2]
              %s3132 = smul.u32 8, %s3129
              %s3133 = scalar_lea.vmem %s2972, %s3132
              // While loop
              $region56: #{tpu_custom_call.1} parent=47 // loop_pre_header
                _
              $region57: #{tpu_custom_call.1} parent=47 // loop_header
                %s3135 = sphi 0, %s3137
                %p3136 = scmp.ge.s32.totalorder %s3135, %s3128
                %s3140 = sphi 0, %s3147
                %s3141 = sphi %s3131, %s3150
                %s3142 = sphi %s3133, %s3151
              $region58: #{tpu_custom_call.1} parent=47 // loop_header_branch
                %3139 = sbr.rel (%p3136) target = $region62
              $region59: #{tpu_custom_call.1} parent=47 // loop_body
                %v3143 = vld [vmem:[%s3141] sm:%s2981]
                %3144 = vst [vmem:[%s3142] sm:%s2981] %v3143
                %s3145 = sadd.s32 1, %s3140
                %p3146 = scmp.ge.s32.totalorder %s3145, %s3128
                %s3147 = scalar_select %p3146, 0, %s3145
                %s3148 = smul.u32 %s3147, 8
                %s3149 = smul.u32 %s3147, 8
                %s3150 = scalar_lea.vmem %s3131, %s3148 [#allocation2]
                %s3151 = scalar_lea.vmem %s3133, %s3149
              $region60: #{tpu_custom_call.1} parent=47 // loop_footer
                %s3137 = sadd.s32 %s3135, 1
              $region61: #{tpu_custom_call.1} parent=47 // loop_footer_branch
                %3134 = sbr.rel target = $region57
              $region62: #{tpu_custom_call.1} parent=47 // loop_exit
                _
            $region48: #{tpu_custom_call.1} parent=39 // pred_fallthru
              _
          $region40: #{tpu_custom_call.1} parent=35 // pred_fallthru
            _
          %3326 = vnop
        $region36: #{tpu_custom_call.1} parent=31 // pred_fallthru
          _
      $region32: #{tpu_custom_call.1} parent=5 // pred_fallthru
        _
      %p3327 = scmp.le.s32.totalorder 2, %s9
      // Predicated region
      $region85: #{tpu_custom_call.1} parent=5 // pred_check
        %p3328 = pneg %p3327
      $region86: #{tpu_custom_call.1} parent=5 // pred_check_branch
        %3330 = sbr.rel (%p3328) target = $region88
      $region87: #{tpu_custom_call.1} parent=5 // pred_region
        %s3331 = ssub.s32 %s9, 2
        // Predicated region
        $region89: #{tpu_custom_call.1} parent=87 // pred_check
          %p3332 = pneg %p106
        $region90: #{tpu_custom_call.1} parent=87 // pred_check_branch
          %3334 = sbr.rel (%p3332) target = $region92
        $region91: #{tpu_custom_call.1} parent=87 // pred_region
          %s3335 = sand.u32 %s91, 1
          %s3336 = sand.u32 %s91, 1
          %s3337 = smul.addr %s3336, 1024
          %s3338 = scalar_lea.vmem [#allocation2], %s3337
        $region92: #{tpu_custom_call.1} parent=87 // pred_fallthru
          _
      $region88: #{tpu_custom_call.1} parent=5 // pred_fallthru
        _
    $region6: #{tpu_custom_call.1} parent=1 // loop_footer
      %s13 = sadd.s32 1, %s9
    $region7: #{tpu_custom_call.1} parent=1 // loop_footer_branch
      %8 = sbr.rel target = $region3
    $region8: #{tpu_custom_call.1} parent=1 // loop_exit
      _

</llo_original>
